<compile_context>
chip_gen: v5e
topology: v5e:2x2
jax: 0.10.0
libtpu: 0.0.40
codegen_flags: <defaults>
</compile_context>

<pallas_src>
import jax
import jax.numpy as jnp
from jax import lax
from jax.experimental import pallas as pl
from jax.experimental.pallas import tpu as pltpu

# ---------------- configuration (small, deterministic) ----------------
BATCH = 2
NZ = 16
MODEL_DIM = 64
SEQ_LEN = 8
ONEHOT = 4
KSIZE = 5
NUM_BLOCKS = 5
PAD = KSIZE // 2
ROWS = BATCH * SEQ_LEN                    # batch-stacked activation rows
OFF = 8                                   # sublane-aligned scratch offset (>= PAD)
SCRATCH_ROWS = ROWS + 2 * OFF
LOG2_SEQ = 3
assert (1 << LOG2_SEQ) == SEQ_LEN


# ---------------- fused forward kernel ----------------
def generator_kernel(z_ref, lin_w_ref, lin_b_ref,
                     rb_w1_ref, rb_b1_ref, rb_w2_ref, rb_b2_ref,
                     head_w_ref, head_b_ref, o_ref, im_ref):
    # z_ref      : VMEM [B, nz]
    # lin_w_ref  : VMEM [nz*L, D]            linear weight, kron/channels-last layout
    # lin_b_ref  : VMEM [B*L, D]             linear bias, batch-stacked
    # rb_w*_ref  : VMEM [NUM_BLOCKS, K*D, D] im2col-stacked conv taps (0.3 folded in w2)
    # rb_b*_ref  : VMEM [NUM_BLOCKS, 1, D]
    # head_w_ref : VMEM [A, D]               1x1-conv weight (transposed)
    # head_b_ref : VMEM [A, 1]
    # o_ref      : VMEM [B, A, L]            output already in PyTorch NCL layout
    # im_ref     : VMEM [ROWS+2*OFF, K*D]    im2col scratch (pad rows stay zero)
    L, D, K, A = SEQ_LEN, MODEL_DIM, KSIZE, ONEHOT
    R = ROWS
    ctr_lo, ctr_hi = PAD * D, (PAD + 1) * D

    # Zero the scratch ONCE: rows [OFF, OFF+R) are rewritten by every conv, the
    # surrounding pad rows stay zero for the whole fused forward.
    im_ref[...] = jnp.zeros_like(im_ref)

    # Static per-row masks: realise 'same' zero padding AND kill cross-batch leakage
    # of the shifted taps inside the stacked [B*L, D] slab.
    lpos = lax.broadcasted_iota(jnp.int32, (R, 1), 0) & (L - 1)        # l = row % L
    keep = {s: ((lpos + s >= 0) & (lpos + s < L)).astype(jnp.float32)
            for s in range(-PAD, PAD + 1) if s != 0}

    def conv_same(h, w_ref, b_ref, blk):
        # Batch-stacked im2col: assemble [R, K*D] once, then ONE MXU matmul per conv.
        im_ref[OFF:OFF + R, ctr_lo:ctr_hi] = h                         # centre tap (s=0)
        for k in range(K):
            s = k - PAD
            if s == 0:
                continue
            tap = im_ref[OFF + s:OFF + s + R, ctr_lo:ctr_hi] * keep[s]
            im_ref[OFF:OFF + R, k * D:(k + 1) * D] = tap
        return jnp.dot(im_ref[OFF:OFF + R, :], w_ref[blk],
                       preferred_element_type=jnp.float32) + b_ref[blk]

    # ---- linear (nz -> L*D) as one kron-structured MXU matmul, result lands
    #      directly in the batch-stacked channels-last [B*L, D] layout ----
    zv = z_ref[...]                                                    # [B, nz]
    zsub = jnp.concatenate(
        [jnp.broadcast_to(zv[b:b + 1, :], (L, NZ)) for b in range(BATCH)], axis=0)
    coln = lax.broadcasted_iota(jnp.int32, (NZ, NZ * L), 1)
    rown = lax.broadcasted_iota(jnp.int32, (NZ, NZ * L), 0)
    expand = (jnp.right_shift(coln, LOG2_SEQ) == rown).astype(jnp.float32)   # [nz, nz*L]
    colr = lax.broadcasted_iota(jnp.int32, (R, NZ * L), 1)
    rowr = lax.broadcasted_iota(jnp.int32, (R, NZ * L), 0)
    diag = ((colr & (L - 1)) == (rowr & (L - 1))).astype(jnp.float32)        # [R, nz*L]
    zrep = jnp.dot(zsub, expand, preferred_element_type=jnp.float32)         # [R, nz*L]
    x = jnp.dot(zrep * diag, lin_w_ref[...],
                preferred_element_type=jnp.float32) + lin_b_ref[...]         # [R, D]

    # ---- 5 residual blocks: x + conv(relu(conv(relu(x))))  (0.3 pre-folded) ----
    for blk in range(NUM_BLOCKS):
        h = jnp.maximum(x, 0.0)
        h = conv_same(h, rb_w1_ref, rb_b1_ref, blk)
        h = jnp.maximum(h, 0.0)
        h = conv_same(h, rb_w2_ref, rb_b2_ref, blk)
        x = x + h

    # ---- 1x1 conv head + softmax over channels, computed as [A, B*L] ----
    logits = lax.dot_general(head_w_ref[...], x, (((1,), (1,)), ((), ())),
                             preferred_element_type=jnp.float32) + head_b_ref[...]
    m = jnp.max(logits, axis=0, keepdims=True)
    e = jnp.exp(logits - m)
    ssum = jnp.sum(e, axis=0, keepdims=True)
    sm = e * pl.reciprocal(ssum, approx=False)
    for b in range(BATCH):
        o_ref[b] = sm[:, b * L:(b + 1) * L]


def generator_pallas(z, kp):
    B = z.shape[0]
    A, L = ONEHOT, SEQ_LEN
    vmem = pl.BlockSpec(memory_space=pltpu.MemorySpace.VMEM)
    return pl.pallas_call(
        generator_kernel,
        out_shape=jax.ShapeDtypeStruct((B, A, L), jnp.float32),
        in_specs=[vmem] * 9,
        out_specs=vmem,
        scratch_shapes=[pltpu.VMEM((SCRATCH_ROWS, KSIZE * MODEL_DIM), jnp.float32)],
    )(z, kp["lin_w"], kp["lin_b"],
      kp["rb_w1"], kp["rb_b1"], kp["rb_w2"], kp["rb_b2"],
      kp["head_w"], kp["head_b"])


@jax.jit
def generator_forward(z, kernel_params):
    return generator_pallas(z, kernel_params)


# -------- one-time parameter repacking (PyTorch layout -> kernel layout) --------
def pack_params(p):
    D, L, K, A, B = MODEL_DIM, SEQ_LEN, KSIZE, ONEHOT, BATCH
    kp = {}
    # linear: column (d*L + l) -> kron layout [nz*L, D]  (channels-last, batch-stackable)
    w_nld = p["lin_w"].reshape(NZ, D, L).transpose(0, 2, 1)          # [nz, L, D]
    kp["lin_w"] = w_nld.reshape(NZ * L, D)
    kp["lin_b"] = jnp.tile(p["lin_b"].reshape(D, L).T, (B, 1))       # [B*L, D]
    # resblock convs: [K, Cin, Cout] -> im2col-stacked [K*D, D]; 0.3 folded into conv2
    kp["rb_w1"] = jnp.stack([p[f"rb{i}_w1"].reshape(K * D, D) for i in range(1, 6)])
    kp["rb_b1"] = jnp.stack([p[f"rb{i}_b1"].reshape(1, D) for i in range(1, 6)])
    kp["rb_w2"] = jnp.stack([0.3 * p[f"rb{i}_w2"].reshape(K * D, D) for i in range(1, 6)])
    kp["rb_b2"] = jnp.stack([0.3 * p[f"rb{i}_b2"].reshape(1, D) for i in range(1, 6)])
    kp["head_w"] = p["head_w"].T                                     # [A, D]
    kp["head_b"] = p["head_b"].reshape(A, 1)                         # [A, 1]
    return kp


# ---------------- pure-JAX reference (for correctness check) ----------------
def ref_forward(z, p):
    def conv1d(x, w, b):  # x: [B, Cin, L], w: [K, Cin, Cout], b: [Cout]
        K = w.shape[0]
        pad = K // 2
        L = x.shape[2]
        xp = jnp.pad(x, ((0, 0), (0, 0), (pad, pad)))
        out = jnp.zeros((x.shape[0], w.shape[2], L), jnp.float32)
        for k in range(K):
            out = out + jnp.einsum("bcl,cd->bdl", xp[:, :, k:k + L], w[k])
        return out + b[None, :, None]

    def resblock(x, w1, b1, w2, b2):
        h = jax.nn.relu(x)
        h = conv1d(h, w1, b1)
        h = jax.nn.relu(h)
        h = conv1d(h, w2, b2)
        return x + 0.3 * h

    out = z @ p["lin_w"] + p["lin_b"]
    x = out.reshape(-1, MODEL_DIM, SEQ_LEN)
    for i in range(1, 6):
        x = resblock(x, p[f"rb{i}_w1"], p[f"rb{i}_b1"], p[f"rb{i}_w2"], p[f"rb{i}_b2"])
    logits = jnp.einsum("bcl,cd->bdl", x, p["head_w"]) + p["head_b"][None, :, None]
    return jax.nn.softmax(logits, axis=1)


# ---------------- deterministic parameter init (PyTorch-equivalent layout) ----------------
def init_params(key):
    D, L, A, K, nz = MODEL_DIM, SEQ_LEN, ONEHOT, KSIZE, NZ
    keys = jax.random.split(key, 32)
    ki = iter(keys)
    p = {}
    p["lin_w"] = 0.05 * jax.random.normal(next(ki), (nz, D * L), jnp.float32)
    p["lin_b"] = 0.05 * jax.random.normal(next(ki), (D * L,), jnp.float32)
    for i in range(1, 6):
        # conv weights stored as [K, Cin, Cout] (PyTorch [Cout, Cin, K] transposed)
        p[f"rb{i}_w1"] = 0.05 * jax.random.normal(next(ki), (K, D, D), jnp.float32)
        p[f"rb{i}_b1"] = 0.05 * jax.random.normal(next(ki), (D,), jnp.float32)
        p[f"rb{i}_w2"] = 0.05 * jax.random.normal(next(ki), (K, D, D), jnp.float32)
        p[f"rb{i}_b2"] = 0.05 * jax.random.normal(next(ki), (D,), jnp.float32)
    p["head_w"] = 0.05 * jax.random.normal(next(ki), (D, A), jnp.float32)
    p["head_b"] = 0.05 * jax.random.normal(next(ki), (A,), jnp.float32)
    return p


if __name__ == "__main__":
    key = jax.random.PRNGKey(0)
    pkey, zkey = jax.random.split(key)
    params = init_params(pkey)        # PyTorch-layout params (used by the reference)
    kparams = pack_params(params)     # one-time repack into kernel-friendly layout
    z = jax.random.normal(zkey, (BATCH, NZ), jnp.float32)

    out = generator_forward(z, kparams)
    out = jax.block_until_ready(out)

    ref = ref_forward(z, params)
    assert out.shape == (BATCH, ONEHOT, SEQ_LEN), out.shape
    assert jnp.allclose(out, ref, atol=1e-4, rtol=1e-4), float(jnp.max(jnp.abs(out - ref)))
    # softmax over the channel axis sums to 1
    assert jnp.allclose(jnp.sum(out, axis=1), 1.0, atol=1e-5)

    print("KERNEL_OK")
</pallas_src>

<mosaic_0001>
module attributes {stable_mosaic.version = 11 : i64} {
  func.func @generator_kernel(%arg0: memref<2x16xf32, #tpu.memory_space<vmem>>, %arg1: memref<128x64xf32, #tpu.memory_space<vmem>>, %arg2: memref<16x64xf32, #tpu.memory_space<vmem>>, %arg3: memref<5x320x64xf32, #tpu.memory_space<vmem>>, %arg4: memref<5x1x64xf32, #tpu.memory_space<vmem>>, %arg5: memref<5x320x64xf32, #tpu.memory_space<vmem>>, %arg6: memref<5x1x64xf32, #tpu.memory_space<vmem>>, %arg7: memref<4x64xf32, #tpu.memory_space<vmem>>, %arg8: memref<4x1xf32, #tpu.memory_space<vmem>>, %arg9: memref<2x4x8xf32, #tpu.memory_space<vmem>>, %arg10: memref<32x320xf32, #tpu.memory_space<vmem>>) attributes {dimension_semantics = [], scalar_prefetch = 0 : i64, scratch_operands = 1 : i64, tpu.core_type = #tpu.core_type<tc>} {
    %cst = arith.constant 0.000000e+00 : f32
    %0 = vector.broadcast %cst : f32 to vector<32x320xf32>
    %c0 = arith.constant 0 : index
    %c0_0 = arith.constant 0 : index
    %1 = vector.load %arg10[%c0, %c0_0] : memref<32x320xf32, #tpu.memory_space<vmem>>, vector<32x320xf32>
    tpu.vector_store %arg10[%c0, %c0_0], %0 {strides = array<i32>} : memref<32x320xf32, #tpu.memory_space<vmem>>, vector<32x320xf32>,
    %2 = tpu.iota {dimensions = array<i32: 0>} : vector<16x1xi32>
    %c7_i32 = arith.constant 7 : i32
    %3 = vector.broadcast %c7_i32 : i32 to vector<16x1xi32>
    %4 = arith.andi %2, %3 : vector<16x1xi32>
    %c-2_i32 = arith.constant -2 : i32
    %5 = vector.broadcast %c-2_i32 : i32 to vector<16x1xi32>
    %6 = arith.addi %4, %5 : vector<16x1xi32>
    %c0_i32 = arith.constant 0 : i32
    %7 = vector.broadcast %c0_i32 : i32 to vector<16x1xi32>
    %8 = arith.cmpi sge, %6, %7 : vector<16x1xi32>
    %c-2_i32_1 = arith.constant -2 : i32
    %9 = vector.broadcast %c-2_i32_1 : i32 to vector<16x1xi32>
    %10 = arith.addi %4, %9 : vector<16x1xi32>
    %c8_i32 = arith.constant 8 : i32
    %11 = vector.broadcast %c8_i32 : i32 to vector<16x1xi32>
    %12 = arith.cmpi slt, %10, %11 : vector<16x1xi32>
    %13 = arith.andi %8, %12 : vector<16x1xi1>
    %14 = arith.extui %13 : vector<16x1xi1> to vector<16x1xi32>
    %15 = arith.sitofp %14 : vector<16x1xi32> to vector<16x1xf32>
    %c-1_i32 = arith.constant -1 : i32
    %16 = vector.broadcast %c-1_i32 : i32 to vector<16x1xi32>
    %17 = arith.addi %4, %16 : vector<16x1xi32>
    %c0_i32_2 = arith.constant 0 : i32
    %18 = vector.broadcast %c0_i32_2 : i32 to vector<16x1xi32>
    %19 = arith.cmpi sge, %17, %18 : vector<16x1xi32>
    %c-1_i32_3 = arith.constant -1 : i32
    %20 = vector.broadcast %c-1_i32_3 : i32 to vector<16x1xi32>
    %21 = arith.addi %4, %20 : vector<16x1xi32>
    %c8_i32_4 = arith.constant 8 : i32
    %22 = vector.broadcast %c8_i32_4 : i32 to vector<16x1xi32>
    %23 = arith.cmpi slt, %21, %22 : vector<16x1xi32>
    %24 = arith.andi %19, %23 : vector<16x1xi1>
    %25 = arith.extui %24 : vector<16x1xi1> to vector<16x1xi32>
    %26 = arith.sitofp %25 : vector<16x1xi32> to vector<16x1xf32>
    %c1_i32 = arith.constant 1 : i32
    %27 = vector.broadcast %c1_i32 : i32 to vector<16x1xi32>
    %28 = arith.addi %4, %27 : vector<16x1xi32>
    %c0_i32_5 = arith.constant 0 : i32
    %29 = vector.broadcast %c0_i32_5 : i32 to vector<16x1xi32>
    %30 = arith.cmpi sge, %28, %29 : vector<16x1xi32>
    %c1_i32_6 = arith.constant 1 : i32
    %31 = vector.broadcast %c1_i32_6 : i32 to vector<16x1xi32>
    %32 = arith.addi %4, %31 : vector<16x1xi32>
    %c8_i32_7 = arith.constant 8 : i32
    %33 = vector.broadcast %c8_i32_7 : i32 to vector<16x1xi32>
    %34 = arith.cmpi slt, %32, %33 : vector<16x1xi32>
    %35 = arith.andi %30, %34 : vector<16x1xi1>
    %36 = arith.extui %35 : vector<16x1xi1> to vector<16x1xi32>
    %37 = arith.sitofp %36 : vector<16x1xi32> to vector<16x1xf32>
    %c2_i32 = arith.constant 2 : i32
    %38 = vector.broadcast %c2_i32 : i32 to vector<16x1xi32>
    %39 = arith.addi %4, %38 : vector<16x1xi32>
    %c0_i32_8 = arith.constant 0 : i32
    %40 = vector.broadcast %c0_i32_8 : i32 to vector<16x1xi32>
    %41 = arith.cmpi sge, %39, %40 : vector<16x1xi32>
    %c2_i32_9 = arith.constant 2 : i32
    %42 = vector.broadcast %c2_i32_9 : i32 to vector<16x1xi32>
    %43 = arith.addi %4, %42 : vector<16x1xi32>
    %c8_i32_10 = arith.constant 8 : i32
    %44 = vector.broadcast %c8_i32_10 : i32 to vector<16x1xi32>
    %45 = arith.cmpi slt, %43, %44 : vector<16x1xi32>
    %46 = arith.andi %41, %45 : vector<16x1xi1>
    %47 = arith.extui %46 : vector<16x1xi1> to vector<16x1xi32>
    %48 = arith.sitofp %47 : vector<16x1xi32> to vector<16x1xf32>
    %c0_11 = arith.constant 0 : index
    %c0_12 = arith.constant 0 : index
    %49 = vector.load %arg0[%c0_11, %c0_12] : memref<2x16xf32, #tpu.memory_space<vmem>>, vector<2x16xf32>
    %50 = vector.extract_strided_slice %49 {offsets = [0, 0], sizes = [1, 16], strides = [1, 1]} : vector<2x16xf32> to vector<1x16xf32>
    %51 = vector.shape_cast %50 : vector<1x16xf32> to vector<1x16xf32>
    %52 = vector.broadcast %51 : vector<1x16xf32> to vector<8x16xf32>
    %53 = vector.extract_strided_slice %49 {offsets = [1, 0], sizes = [1, 16], strides = [1, 1]} : vector<2x16xf32> to vector<1x16xf32>
    %54 = vector.shape_cast %53 : vector<1x16xf32> to vector<1x16xf32>
    %55 = vector.broadcast %54 : vector<1x16xf32> to vector<8x16xf32>
    %56 = tpu.concatenate %52, %55 in 0 : vector<8x16xf32>, vector<8x16xf32> -> vector<16x16xf32>
    %57 = tpu.iota {dimensions = array<i32: 1>} : vector<16x128xi32>
    %58 = tpu.iota {dimensions = array<i32: 0>} : vector<16x128xi32>
    %c3_i32 = arith.constant 3 : i32
    %59 = vector.broadcast %c3_i32 : i32 to vector<16x128xi32>
    %60 = arith.shrsi %57, %59 : vector<16x128xi32>
    %61 = arith.cmpi eq, %60, %58 : vector<16x128xi32>
    %62 = arith.extui %61 : vector<16x128xi1> to vector<16x128xi32>
    %63 = arith.sitofp %62 : vector<16x128xi32> to vector<16x128xf32>
    %64 = tpu.iota {dimensions = array<i32: 1>} : vector<16x128xi32>
    %65 = tpu.iota {dimensions = array<i32: 0>} : vector<16x128xi32>
    %c7_i32_13 = arith.constant 7 : i32
    %66 = vector.broadcast %c7_i32_13 : i32 to vector<16x128xi32>
    %67 = arith.andi %64, %66 : vector<16x128xi32>
    %c7_i32_14 = arith.constant 7 : i32
    %68 = vector.broadcast %c7_i32_14 : i32 to vector<16x128xi32>
    %69 = arith.andi %65, %68 : vector<16x128xi32>
    %70 = arith.cmpi eq, %67, %69 : vector<16x128xi32>
    %71 = arith.extui %70 : vector<16x128xi1> to vector<16x128xi32>
    %72 = arith.sitofp %71 : vector<16x128xi32> to vector<16x128xf32>
    %cst_15 = arith.constant dense<0.000000e+00> : vector<16x128xf32>
    %73 = tpu.matmul %56, %63, %cst_15 {dimension_numbers = #tpu.dot_dimension_numbers<[1], [0], [0], [1], [0, 0, 1, 1], [], []>} : vector<16x16xf32>, vector<16x128xf32>, vector<16x128xf32> -> vector<16x128xf32>
    %74 = arith.mulf %73, %72 : vector<16x128xf32>
    %c0_16 = arith.constant 0 : index
    %c0_17 = arith.constant 0 : index
    %75 = vector.load %arg1[%c0_16, %c0_17] : memref<128x64xf32, #tpu.memory_space<vmem>>, vector<128x64xf32>
    %cst_18 = arith.constant dense<0.000000e+00> : vector<16x64xf32>
    %76 = tpu.matmul %74, %75, %cst_18 {dimension_numbers = #tpu.dot_dimension_numbers<[1], [0], [0], [1], [0, 0, 1, 1], [], []>} : vector<16x128xf32>, vector<128x64xf32>, vector<16x64xf32> -> vector<16x64xf32>
    %c0_19 = arith.constant 0 : index
    %c0_20 = arith.constant 0 : index
    %77 = vector.load %arg2[%c0_19, %c0_20] : memref<16x64xf32, #tpu.memory_space<vmem>>, vector<16x64xf32>
    %78 = arith.addf %76, %77 : vector<16x64xf32>
    %cst_21 = arith.constant 0.000000e+00 : f32
    %79 = vector.broadcast %cst_21 : f32 to vector<16x64xf32>
    %80 = arith.maximumf %78, %79 : vector<16x64xf32>
    %c8 = arith.constant 8 : index
    %c128 = arith.constant 128 : index
    %81 = vector.load %arg10[%c8, %c128] : memref<32x320xf32, #tpu.memory_space<vmem>>, vector<16x64xf32>
    tpu.vector_store %arg10[%c8, %c128], %80 {strides = array<i32>} : memref<32x320xf32, #tpu.memory_space<vmem>>, vector<16x64xf32>,
    %c6 = arith.constant 6 : index
    %c128_22 = arith.constant 128 : index
    %82 = vector.load %arg10[%c6, %c128_22] : memref<32x320xf32, #tpu.memory_space<vmem>>, vector<16x64xf32>
    %83 = vector.broadcast %15 : vector<16x1xf32> to vector<16x64xf32>
    %84 = arith.mulf %82, %83 : vector<16x64xf32>
    %c8_23 = arith.constant 8 : index
    %c0_24 = arith.constant 0 : index
    %85 = vector.load %arg10[%c8_23, %c0_24] : memref<32x320xf32, #tpu.memory_space<vmem>>, vector<16x64xf32>
    tpu.vector_store %arg10[%c8_23, %c0_24], %84 {strides = array<i32>} : memref<32x320xf32, #tpu.memory_space<vmem>>, vector<16x64xf32>,
    %c7 = arith.constant 7 : index
    %c128_25 = arith.constant 128 : index
    %86 = vector.load %arg10[%c7, %c128_25] : memref<32x320xf32, #tpu.memory_space<vmem>>, vector<16x64xf32>
    %87 = vector.broadcast %26 : vector<16x1xf32> to vector<16x64xf32>
    %88 = arith.mulf %86, %87 : vector<16x64xf32>
    %c8_26 = arith.constant 8 : index
    %c64 = arith.constant 64 : index
    %89 = vector.load %arg10[%c8_26, %c64] : memref<32x320xf32, #tpu.memory_space<vmem>>, vector<16x64xf32>
    tpu.vector_store %arg10[%c8_26, %c64], %88 {strides = array<i32>} : memref<32x320xf32, #tpu.memory_space<vmem>>, vector<16x64xf32>,
    %c9 = arith.constant 9 : index
    %c128_27 = arith.constant 128 : index
    %90 = vector.load %arg10[%c9, %c128_27] : memref<32x320xf32, #tpu.memory_space<vmem>>, vector<16x64xf32>
    %91 = vector.broadcast %37 : vector<16x1xf32> to vector<16x64xf32>
    %92 = arith.mulf %90, %91 : vector<16x64xf32>
    %c8_28 = arith.constant 8 : index
    %c192 = arith.constant 192 : index
    %93 = vector.load %arg10[%c8_28, %c192] : memref<32x320xf32, #tpu.memory_space<vmem>>, vector<16x64xf32>
    tpu.vector_store %arg10[%c8_28, %c192], %92 {strides = array<i32>} : memref<32x320xf32, #tpu.memory_space<vmem>>, vector<16x64xf32>,
    %c10 = arith.constant 10 : index
    %c128_29 = arith.constant 128 : index
    %94 = vector.load %arg10[%c10, %c128_29] : memref<32x320xf32, #tpu.memory_space<vmem>>, vector<16x64xf32>
    %95 = vector.broadcast %48 : vector<16x1xf32> to vector<16x64xf32>
    %96 = arith.mulf %94, %95 : vector<16x64xf32>
    %c8_30 = arith.constant 8 : index
    %c256 = arith.constant 256 : index
    %97 = vector.load %arg10[%c8_30, %c256] : memref<32x320xf32, #tpu.memory_space<vmem>>, vector<16x64xf32>
    tpu.vector_store %arg10[%c8_30, %c256], %96 {strides = array<i32>} : memref<32x320xf32, #tpu.memory_space<vmem>>, vector<16x64xf32>,
    %c8_31 = arith.constant 8 : index
    %c0_32 = arith.constant 0 : index
    %98 = vector.load %arg10[%c8_31, %c0_32] : memref<32x320xf32, #tpu.memory_space<vmem>>, vector<16x320xf32>
    %c0_33 = arith.constant 0 : index
    %c0_34 = arith.constant 0 : index
    %c0_35 = arith.constant 0 : index
    %99 = vector.load %arg3[%c0_33, %c0_34, %c0_35] : memref<5x320x64xf32, #tpu.memory_space<vmem>>, vector<1x320x64xf32>
    %100 = vector.shape_cast %99 : vector<1x320x64xf32> to vector<320x64xf32>
    %cst_36 = arith.constant dense<0.000000e+00> : vector<16x64xf32>
    %101 = tpu.matmul %98, %100, %cst_36 {dimension_numbers = #tpu.dot_dimension_numbers<[1], [0], [0], [1], [0, 0, 1, 1], [], []>} : vector<16x320xf32>, vector<320x64xf32>, vector<16x64xf32> -> vector<16x64xf32>
    %c0_37 = arith.constant 0 : index
    %c0_38 = arith.constant 0 : index
    %c0_39 = arith.constant 0 : index
    %102 = vector.load %arg4[%c0_37, %c0_38, %c0_39] : memref<5x1x64xf32, #tpu.memory_space<vmem>>, vector<1x1x64xf32>
    %103 = vector.shape_cast %102 : vector<1x1x64xf32> to vector<1x64xf32>
    %104 = vector.broadcast %103 : vector<1x64xf32> to vector<16x64xf32>
    %105 = arith.addf %101, %104 : vector<16x64xf32>
    %cst_40 = arith.constant 0.000000e+00 : f32
    %106 = vector.broadcast %cst_40 : f32 to vector<16x64xf32>
    %107 = arith.maximumf %105, %106 : vector<16x64xf32>
    %c8_41 = arith.constant 8 : index
    %c128_42 = arith.constant 128 : index
    %108 = vector.load %arg10[%c8_41, %c128_42] : memref<32x320xf32, #tpu.memory_space<vmem>>, vector<16x64xf32>
    tpu.vector_store %arg10[%c8_41, %c128_42], %107 {strides = array<i32>} : memref<32x320xf32, #tpu.memory_space<vmem>>, vector<16x64xf32>,
    %c6_43 = arith.constant 6 : index
    %c128_44 = arith.constant 128 : index
    %109 = vector.load %arg10[%c6_43, %c128_44] : memref<32x320xf32, #tpu.memory_space<vmem>>, vector<16x64xf32>
    %110 = vector.broadcast %15 : vector<16x1xf32> to vector<16x64xf32>
    %111 = arith.mulf %109, %110 : vector<16x64xf32>
    %c8_45 = arith.constant 8 : index
    %c0_46 = arith.constant 0 : index
    %112 = vector.load %arg10[%c8_45, %c0_46] : memref<32x320xf32, #tpu.memory_space<vmem>>, vector<16x64xf32>
    tpu.vector_store %arg10[%c8_45, %c0_46], %111 {strides = array<i32>} : memref<32x320xf32, #tpu.memory_space<vmem>>, vector<16x64xf32>,
    %c7_47 = arith.constant 7 : index
    %c128_48 = arith.constant 128 : index
    %113 = vector.load %arg10[%c7_47, %c128_48] : memref<32x320xf32, #tpu.memory_space<vmem>>, vector<16x64xf32>
    %114 = vector.broadcast %26 : vector<16x1xf32> to vector<16x64xf32>
    %115 = arith.mulf %113, %114 : vector<16x64xf32>
    %c8_49 = arith.constant 8 : index
    %c64_50 = arith.constant 64 : index
    %116 = vector.load %arg10[%c8_49, %c64_50] : memref<32x320xf32, #tpu.memory_space<vmem>>, vector<16x64xf32>
    tpu.vector_store %arg10[%c8_49, %c64_50], %115 {strides = array<i32>} : memref<32x320xf32, #tpu.memory_space<vmem>>, vector<16x64xf32>,
    %c9_51 = arith.constant 9 : index
    %c128_52 = arith.constant 128 : index
    %117 = vector.load %arg10[%c9_51, %c128_52] : memref<32x320xf32, #tpu.memory_space<vmem>>, vector<16x64xf32>
    %118 = vector.broadcast %37 : vector<16x1xf32> to vector<16x64xf32>
    %119 = arith.mulf %117, %118 : vector<16x64xf32>
    %c8_53 = arith.constant 8 : index
    %c192_54 = arith.constant 192 : index
    %120 = vector.load %arg10[%c8_53, %c192_54] : memref<32x320xf32, #tpu.memory_space<vmem>>, vector<16x64xf32>
    tpu.vector_store %arg10[%c8_53, %c192_54], %119 {strides = array<i32>} : memref<32x320xf32, #tpu.memory_space<vmem>>, vector<16x64xf32>,
    %c10_55 = arith.constant 10 : index
    %c128_56 = arith.constant 128 : index
    %121 = vector.load %arg10[%c10_55, %c128_56] : memref<32x320xf32, #tpu.memory_space<vmem>>, vector<16x64xf32>
    %122 = vector.broadcast %48 : vector<16x1xf32> to vector<16x64xf32>
    %123 = arith.mulf %121, %122 : vector<16x64xf32>
    %c8_57 = arith.constant 8 : index
    %c256_58 = arith.constant 256 : index
    %124 = vector.load %arg10[%c8_57, %c256_58] : memref<32x320xf32, #tpu.memory_space<vmem>>, vector<16x64xf32>
    tpu.vector_store %arg10[%c8_57, %c256_58], %123 {strides = array<i32>} : memref<32x320xf32, #tpu.memory_space<vmem>>, vector<16x64xf32>,
    %c8_59 = arith.constant 8 : index
    %c0_60 = arith.constant 0 : index
    %125 = vector.load %arg10[%c8_59, %c0_60] : memref<32x320xf32, #tpu.memory_space<vmem>>, vector<16x320xf32>
    %c0_61 = arith.constant 0 : index
    %c0_62 = arith.constant 0 : index
    %c0_63 = arith.constant 0 : index
    %126 = vector.load %arg5[%c0_61, %c0_62, %c0_63] : memref<5x320x64xf32, #tpu.memory_space<vmem>>, vector<1x320x64xf32>
    %127 = vector.shape_cast %126 : vector<1x320x64xf32> to vector<320x64xf32>
    %cst_64 = arith.constant dense<0.000000e+00> : vector<16x64xf32>
    %128 = tpu.matmul %125, %127, %cst_64 {dimension_numbers = #tpu.dot_dimension_numbers<[1], [0], [0], [1], [0, 0, 1, 1], [], []>} : vector<16x320xf32>, vector<320x64xf32>, vector<16x64xf32> -> vector<16x64xf32>
    %c0_65 = arith.constant 0 : index
    %c0_66 = arith.constant 0 : index
    %c0_67 = arith.constant 0 : index
    %129 = vector.load %arg6[%c0_65, %c0_66, %c0_67] : memref<5x1x64xf32, #tpu.memory_space<vmem>>, vector<1x1x64xf32>
    %130 = vector.shape_cast %129 : vector<1x1x64xf32> to vector<1x64xf32>
    %131 = vector.broadcast %130 : vector<1x64xf32> to vector<16x64xf32>
    %132 = arith.addf %128, %131 : vector<16x64xf32>
    %133 = arith.addf %78, %132 : vector<16x64xf32>
    %cst_68 = arith.constant 0.000000e+00 : f32
    %134 = vector.broadcast %cst_68 : f32 to vector<16x64xf32>
    %135 = arith.maximumf %133, %134 : vector<16x64xf32>
    %c8_69 = arith.constant 8 : index
    %c128_70 = arith.constant 128 : index
    %136 = vector.load %arg10[%c8_69, %c128_70] : memref<32x320xf32, #tpu.memory_space<vmem>>, vector<16x64xf32>
    tpu.vector_store %arg10[%c8_69, %c128_70], %135 {strides = array<i32>} : memref<32x320xf32, #tpu.memory_space<vmem>>, vector<16x64xf32>,
    %c6_71 = arith.constant 6 : index
    %c128_72 = arith.constant 128 : index
    %137 = vector.load %arg10[%c6_71, %c128_72] : memref<32x320xf32, #tpu.memory_space<vmem>>, vector<16x64xf32>
    %138 = vector.broadcast %15 : vector<16x1xf32> to vector<16x64xf32>
    %139 = arith.mulf %137, %138 : vector<16x64xf32>
    %c8_73 = arith.constant 8 : index
    %c0_74 = arith.constant 0 : index
    %140 = vector.load %arg10[%c8_73, %c0_74] : memref<32x320xf32, #tpu.memory_space<vmem>>, vector<16x64xf32>
    tpu.vector_store %arg10[%c8_73, %c0_74], %139 {strides = array<i32>} : memref<32x320xf32, #tpu.memory_space<vmem>>, vector<16x64xf32>,
    %c7_75 = arith.constant 7 : index
    %c128_76 = arith.constant 128 : index
    %141 = vector.load %arg10[%c7_75, %c128_76] : memref<32x320xf32, #tpu.memory_space<vmem>>, vector<16x64xf32>
    %142 = vector.broadcast %26 : vector<16x1xf32> to vector<16x64xf32>
    %143 = arith.mulf %141, %142 : vector<16x64xf32>
    %c8_77 = arith.constant 8 : index
    %c64_78 = arith.constant 64 : index
    %144 = vector.load %arg10[%c8_77, %c64_78] : memref<32x320xf32, #tpu.memory_space<vmem>>, vector<16x64xf32>
    tpu.vector_store %arg10[%c8_77, %c64_78], %143 {strides = array<i32>} : memref<32x320xf32, #tpu.memory_space<vmem>>, vector<16x64xf32>,
    %c9_79 = arith.constant 9 : index
    %c128_80 = arith.constant 128 : index
    %145 = vector.load %arg10[%c9_79, %c128_80] : memref<32x320xf32, #tpu.memory_space<vmem>>, vector<16x64xf32>
    %146 = vector.broadcast %37 : vector<16x1xf32> to vector<16x64xf32>
    %147 = arith.mulf %145, %146 : vector<16x64xf32>
    %c8_81 = arith.constant 8 : index
    %c192_82 = arith.constant 192 : index
    %148 = vector.load %arg10[%c8_81, %c192_82] : memref<32x320xf32, #tpu.memory_space<vmem>>, vector<16x64xf32>
    tpu.vector_store %arg10[%c8_81, %c192_82], %147 {strides = array<i32>} : memref<32x320xf32, #tpu.memory_space<vmem>>, vector<16x64xf32>,
    %c10_83 = arith.constant 10 : index
    %c128_84 = arith.constant 128 : index
    %149 = vector.load %arg10[%c10_83, %c128_84] : memref<32x320xf32, #tpu.memory_space<vmem>>, vector<16x64xf32>
    %150 = vector.broadcast %48 : vector<16x1xf32> to vector<16x64xf32>
    %151 = arith.mulf %149, %150 : vector<16x64xf32>
    %c8_85 = arith.constant 8 : index
    %c256_86 = arith.constant 256 : index
    %152 = vector.load %arg10[%c8_85, %c256_86] : memref<32x320xf32, #tpu.memory_space<vmem>>, vector<16x64xf32>
    tpu.vector_store %arg10[%c8_85, %c256_86], %151 {strides = array<i32>} : memref<32x320xf32, #tpu.memory_space<vmem>>, vector<16x64xf32>,
    %c8_87 = arith.constant 8 : index
    %c0_88 = arith.constant 0 : index
    %153 = vector.load %arg10[%c8_87, %c0_88] : memref<32x320xf32, #tpu.memory_space<vmem>>, vector<16x320xf32>
    %c1 = arith.constant 1 : index
    %c0_89 = arith.constant 0 : index
    %c0_90 = arith.constant 0 : index
    %154 = vector.load %arg3[%c1, %c0_89, %c0_90] : memref<5x320x64xf32, #tpu.memory_space<vmem>>, vector<1x320x64xf32>
    %155 = vector.shape_cast %154 : vector<1x320x64xf32> to vector<320x64xf32>
    %cst_91 = arith.constant dense<0.000000e+00> : vector<16x64xf32>
    %156 = tpu.matmul %153, %155, %cst_91 {dimension_numbers = #tpu.dot_dimension_numbers<[1], [0], [0], [1], [0, 0, 1, 1], [], []>} : vector<16x320xf32>, vector<320x64xf32>, vector<16x64xf32> -> vector<16x64xf32>
    %c1_92 = arith.constant 1 : index
    %c0_93 = arith.constant 0 : index
    %c0_94 = arith.constant 0 : index
    %157 = vector.load %arg4[%c1_92, %c0_93, %c0_94] : memref<5x1x64xf32, #tpu.memory_space<vmem>>, vector<1x1x64xf32>
    %158 = vector.shape_cast %157 : vector<1x1x64xf32> to vector<1x64xf32>
    %159 = vector.broadcast %158 : vector<1x64xf32> to vector<16x64xf32>
    %160 = arith.addf %156, %159 : vector<16x64xf32>
    %cst_95 = arith.constant 0.000000e+00 : f32
    %161 = vector.broadcast %cst_95 : f32 to vector<16x64xf32>
    %162 = arith.maximumf %160, %161 : vector<16x64xf32>
    %c8_96 = arith.constant 8 : index
    %c128_97 = arith.constant 128 : index
    %163 = vector.load %arg10[%c8_96, %c128_97] : memref<32x320xf32, #tpu.memory_space<vmem>>, vector<16x64xf32>
    tpu.vector_store %arg10[%c8_96, %c128_97], %162 {strides = array<i32>} : memref<32x320xf32, #tpu.memory_space<vmem>>, vector<16x64xf32>,
    %c6_98 = arith.constant 6 : index
    %c128_99 = arith.constant 128 : index
    %164 = vector.load %arg10[%c6_98, %c128_99] : memref<32x320xf32, #tpu.memory_space<vmem>>, vector<16x64xf32>
    %165 = vector.broadcast %15 : vector<16x1xf32> to vector<16x64xf32>
    %166 = arith.mulf %164, %165 : vector<16x64xf32>
    %c8_100 = arith.constant 8 : index
    %c0_101 = arith.constant 0 : index
    %167 = vector.load %arg10[%c8_100, %c0_101] : memref<32x320xf32, #tpu.memory_space<vmem>>, vector<16x64xf32>
    tpu.vector_store %arg10[%c8_100, %c0_101], %166 {strides = array<i32>} : memref<32x320xf32, #tpu.memory_space<vmem>>, vector<16x64xf32>,
    %c7_102 = arith.constant 7 : index
    %c128_103 = arith.constant 128 : index
    %168 = vector.load %arg10[%c7_102, %c128_103] : memref<32x320xf32, #tpu.memory_space<vmem>>, vector<16x64xf32>
    %169 = vector.broadcast %26 : vector<16x1xf32> to vector<16x64xf32>
    %170 = arith.mulf %168, %169 : vector<16x64xf32>
    %c8_104 = arith.constant 8 : index
    %c64_105 = arith.constant 64 : index
    %171 = vector.load %arg10[%c8_104, %c64_105] : memref<32x320xf32, #tpu.memory_space<vmem>>, vector<16x64xf32>
    tpu.vector_store %arg10[%c8_104, %c64_105], %170 {strides = array<i32>} : memref<32x320xf32, #tpu.memory_space<vmem>>, vector<16x64xf32>,
    %c9_106 = arith.constant 9 : index
    %c128_107 = arith.constant 128 : index
    %172 = vector.load %arg10[%c9_106, %c128_107] : memref<32x320xf32, #tpu.memory_space<vmem>>, vector<16x64xf32>
    %173 = vector.broadcast %37 : vector<16x1xf32> to vector<16x64xf32>
    %174 = arith.mulf %172, %173 : vector<16x64xf32>
    %c8_108 = arith.constant 8 : index
    %c192_109 = arith.constant 192 : index
    %175 = vector.load %arg10[%c8_108, %c192_109] : memref<32x320xf32, #tpu.memory_space<vmem>>, vector<16x64xf32>
    tpu.vector_store %arg10[%c8_108, %c192_109], %174 {strides = array<i32>} : memref<32x320xf32, #tpu.memory_space<vmem>>, vector<16x64xf32>,
    %c10_110 = arith.constant 10 : index
    %c128_111 = arith.constant 128 : index
    %176 = vector.load %arg10[%c10_110, %c128_111] : memref<32x320xf32, #tpu.memory_space<vmem>>, vector<16x64xf32>
    %177 = vector.broadcast %48 : vector<16x1xf32> to vector<16x64xf32>
    %178 = arith.mulf %176, %177 : vector<16x64xf32>
    %c8_112 = arith.constant 8 : index
    %c256_113 = arith.constant 256 : index
    %179 = vector.load %arg10[%c8_112, %c256_113] : memref<32x320xf32, #tpu.memory_space<vmem>>, vector<16x64xf32>
    tpu.vector_store %arg10[%c8_112, %c256_113], %178 {strides = array<i32>} : memref<32x320xf32, #tpu.memory_space<vmem>>, vector<16x64xf32>,
    %c8_114 = arith.constant 8 : index
    %c0_115 = arith.constant 0 : index
    %180 = vector.load %arg10[%c8_114, %c0_115] : memref<32x320xf32, #tpu.memory_space<vmem>>, vector<16x320xf32>
    %c1_116 = arith.constant 1 : index
    %c0_117 = arith.constant 0 : index
    %c0_118 = arith.constant 0 : index
    %181 = vector.load %arg5[%c1_116, %c0_117, %c0_118] : memref<5x320x64xf32, #tpu.memory_space<vmem>>, vector<1x320x64xf32>
    %182 = vector.shape_cast %181 : vector<1x320x64xf32> to vector<320x64xf32>
    %cst_119 = arith.constant dense<0.000000e+00> : vector<16x64xf32>
    %183 = tpu.matmul %180, %182, %cst_119 {dimension_numbers = #tpu.dot_dimension_numbers<[1], [0], [0], [1], [0, 0, 1, 1], [], []>} : vector<16x320xf32>, vector<320x64xf32>, vector<16x64xf32> -> vector<16x64xf32>
    %c1_120 = arith.constant 1 : index
    %c0_121 = arith.constant 0 : index
    %c0_122 = arith.constant 0 : index
    %184 = vector.load %arg6[%c1_120, %c0_121, %c0_122] : memref<5x1x64xf32, #tpu.memory_space<vmem>>, vector<1x1x64xf32>
    %185 = vector.shape_cast %184 : vector<1x1x64xf32> to vector<1x64xf32>
    %186 = vector.broadcast %185 : vector<1x64xf32> to vector<16x64xf32>
    %187 = arith.addf %183, %186 : vector<16x64xf32>
    %188 = arith.addf %133, %187 : vector<16x64xf32>
    %cst_123 = arith.constant 0.000000e+00 : f32
    %189 = vector.broadcast %cst_123 : f32 to vector<16x64xf32>
    %190 = arith.maximumf %188, %189 : vector<16x64xf32>
    %c8_124 = arith.constant 8 : index
    %c128_125 = arith.constant 128 : index
    %191 = vector.load %arg10[%c8_124, %c128_125] : memref<32x320xf32, #tpu.memory_space<vmem>>, vector<16x64xf32>
    tpu.vector_store %arg10[%c8_124, %c128_125], %190 {strides = array<i32>} : memref<32x320xf32, #tpu.memory_space<vmem>>, vector<16x64xf32>,
    %c6_126 = arith.constant 6 : index
    %c128_127 = arith.constant 128 : index
    %192 = vector.load %arg10[%c6_126, %c128_127] : memref<32x320xf32, #tpu.memory_space<vmem>>, vector<16x64xf32>
    %193 = vector.broadcast %15 : vector<16x1xf32> to vector<16x64xf32>
    %194 = arith.mulf %192, %193 : vector<16x64xf32>
    %c8_128 = arith.constant 8 : index
    %c0_129 = arith.constant 0 : index
    %195 = vector.load %arg10[%c8_128, %c0_129] : memref<32x320xf32, #tpu.memory_space<vmem>>, vector<16x64xf32>
    tpu.vector_store %arg10[%c8_128, %c0_129], %194 {strides = array<i32>} : memref<32x320xf32, #tpu.memory_space<vmem>>, vector<16x64xf32>,
    %c7_130 = arith.constant 7 : index
    %c128_131 = arith.constant 128 : index
    %196 = vector.load %arg10[%c7_130, %c128_131] : memref<32x320xf32, #tpu.memory_space<vmem>>, vector<16x64xf32>
    %197 = vector.broadcast %26 : vector<16x1xf32> to vector<16x64xf32>
    %198 = arith.mulf %196, %197 : vector<16x64xf32>
    %c8_132 = arith.constant 8 : index
    %c64_133 = arith.constant 64 : index
    %199 = vector.load %arg10[%c8_132, %c64_133] : memref<32x320xf32, #tpu.memory_space<vmem>>, vector<16x64xf32>
    tpu.vector_store %arg10[%c8_132, %c64_133], %198 {strides = array<i32>} : memref<32x320xf32, #tpu.memory_space<vmem>>, vector<16x64xf32>,
    %c9_134 = arith.constant 9 : index
    %c128_135 = arith.constant 128 : index
    %200 = vector.load %arg10[%c9_134, %c128_135] : memref<32x320xf32, #tpu.memory_space<vmem>>, vector<16x64xf32>
    %201 = vector.broadcast %37 : vector<16x1xf32> to vector<16x64xf32>
    %202 = arith.mulf %200, %201 : vector<16x64xf32>
    %c8_136 = arith.constant 8 : index
    %c192_137 = arith.constant 192 : index
    %203 = vector.load %arg10[%c8_136, %c192_137] : memref<32x320xf32, #tpu.memory_space<vmem>>, vector<16x64xf32>
    tpu.vector_store %arg10[%c8_136, %c192_137], %202 {strides = array<i32>} : memref<32x320xf32, #tpu.memory_space<vmem>>, vector<16x64xf32>,
    %c10_138 = arith.constant 10 : index
    %c128_139 = arith.constant 128 : index
    %204 = vector.load %arg10[%c10_138, %c128_139] : memref<32x320xf32, #tpu.memory_space<vmem>>, vector<16x64xf32>
    %205 = vector.broadcast %48 : vector<16x1xf32> to vector<16x64xf32>
    %206 = arith.mulf %204, %205 : vector<16x64xf32>
    %c8_140 = arith.constant 8 : index
    %c256_141 = arith.constant 256 : index
    %207 = vector.load %arg10[%c8_140, %c256_141] : memref<32x320xf32, #tpu.memory_space<vmem>>, vector<16x64xf32>
    tpu.vector_store %arg10[%c8_140, %c256_141], %206 {strides = array<i32>} : memref<32x320xf32, #tpu.memory_space<vmem>>, vector<16x64xf32>,
    %c8_142 = arith.constant 8 : index
    %c0_143 = arith.constant 0 : index
    %208 = vector.load %arg10[%c8_142, %c0_143] : memref<32x320xf32, #tpu.memory_space<vmem>>, vector<16x320xf32>
    %c2 = arith.constant 2 : index
    %c0_144 = arith.constant 0 : index
    %c0_145 = arith.constant 0 : index
    %209 = vector.load %arg3[%c2, %c0_144, %c0_145] : memref<5x320x64xf32, #tpu.memory_space<vmem>>, vector<1x320x64xf32>
    %210 = vector.shape_cast %209 : vector<1x320x64xf32> to vector<320x64xf32>
    %cst_146 = arith.constant dense<0.000000e+00> : vector<16x64xf32>
    %211 = tpu.matmul %208, %210, %cst_146 {dimension_numbers = #tpu.dot_dimension_numbers<[1], [0], [0], [1], [0, 0, 1, 1], [], []>} : vector<16x320xf32>, vector<320x64xf32>, vector<16x64xf32> -> vector<16x64xf32>
    %c2_147 = arith.constant 2 : index
    %c0_148 = arith.constant 0 : index
    %c0_149 = arith.constant 0 : index
    %212 = vector.load %arg4[%c2_147, %c0_148, %c0_149] : memref<5x1x64xf32, #tpu.memory_space<vmem>>, vector<1x1x64xf32>
    %213 = vector.shape_cast %212 : vector<1x1x64xf32> to vector<1x64xf32>
    %214 = vector.broadcast %213 : vector<1x64xf32> to vector<16x64xf32>
    %215 = arith.addf %211, %214 : vector<16x64xf32>
    %cst_150 = arith.constant 0.000000e+00 : f32
    %216 = vector.broadcast %cst_150 : f32 to vector<16x64xf32>
    %217 = arith.maximumf %215, %216 : vector<16x64xf32>
    %c8_151 = arith.constant 8 : index
    %c128_152 = arith.constant 128 : index
    %218 = vector.load %arg10[%c8_151, %c128_152] : memref<32x320xf32, #tpu.memory_space<vmem>>, vector<16x64xf32>
    tpu.vector_store %arg10[%c8_151, %c128_152], %217 {strides = array<i32>} : memref<32x320xf32, #tpu.memory_space<vmem>>, vector<16x64xf32>,
    %c6_153 = arith.constant 6 : index
    %c128_154 = arith.constant 128 : index
    %219 = vector.load %arg10[%c6_153, %c128_154] : memref<32x320xf32, #tpu.memory_space<vmem>>, vector<16x64xf32>
    %220 = vector.broadcast %15 : vector<16x1xf32> to vector<16x64xf32>
    %221 = arith.mulf %219, %220 : vector<16x64xf32>
    %c8_155 = arith.constant 8 : index
    %c0_156 = arith.constant 0 : index
    %222 = vector.load %arg10[%c8_155, %c0_156] : memref<32x320xf32, #tpu.memory_space<vmem>>, vector<16x64xf32>
    tpu.vector_store %arg10[%c8_155, %c0_156], %221 {strides = array<i32>} : memref<32x320xf32, #tpu.memory_space<vmem>>, vector<16x64xf32>,
    %c7_157 = arith.constant 7 : index
    %c128_158 = arith.constant 128 : index
    %223 = vector.load %arg10[%c7_157, %c128_158] : memref<32x320xf32, #tpu.memory_space<vmem>>, vector<16x64xf32>
    %224 = vector.broadcast %26 : vector<16x1xf32> to vector<16x64xf32>
    %225 = arith.mulf %223, %224 : vector<16x64xf32>
    %c8_159 = arith.constant 8 : index
    %c64_160 = arith.constant 64 : index
    %226 = vector.load %arg10[%c8_159, %c64_160] : memref<32x320xf32, #tpu.memory_space<vmem>>, vector<16x64xf32>
    tpu.vector_store %arg10[%c8_159, %c64_160], %225 {strides = array<i32>} : memref<32x320xf32, #tpu.memory_space<vmem>>, vector<16x64xf32>,
    %c9_161 = arith.constant 9 : index
    %c128_162 = arith.constant 128 : index
    %227 = vector.load %arg10[%c9_161, %c128_162] : memref<32x320xf32, #tpu.memory_space<vmem>>, vector<16x64xf32>
    %228 = vector.broadcast %37 : vector<16x1xf32> to vector<16x64xf32>
    %229 = arith.mulf %227, %228 : vector<16x64xf32>
    %c8_163 = arith.constant 8 : index
    %c192_164 = arith.constant 192 : index
    %230 = vector.load %arg10[%c8_163, %c192_164] : memref<32x320xf32, #tpu.memory_space<vmem>>, vector<16x64xf32>
    tpu.vector_store %arg10[%c8_163, %c192_164], %229 {strides = array<i32>} : memref<32x320xf32, #tpu.memory_space<vmem>>, vector<16x64xf32>,
    %c10_165 = arith.constant 10 : index
    %c128_166 = arith.constant 128 : index
    %231 = vector.load %arg10[%c10_165, %c128_166] : memref<32x320xf32, #tpu.memory_space<vmem>>, vector<16x64xf32>
    %232 = vector.broadcast %48 : vector<16x1xf32> to vector<16x64xf32>
    %233 = arith.mulf %231, %232 : vector<16x64xf32>
    %c8_167 = arith.constant 8 : index
    %c256_168 = arith.constant 256 : index
    %234 = vector.load %arg10[%c8_167, %c256_168] : memref<32x320xf32, #tpu.memory_space<vmem>>, vector<16x64xf32>
    tpu.vector_store %arg10[%c8_167, %c256_168], %233 {strides = array<i32>} : memref<32x320xf32, #tpu.memory_space<vmem>>, vector<16x64xf32>,
    %c8_169 = arith.constant 8 : index
    %c0_170 = arith.constant 0 : index
    %235 = vector.load %arg10[%c8_169, %c0_170] : memref<32x320xf32, #tpu.memory_space<vmem>>, vector<16x320xf32>
    %c2_171 = arith.constant 2 : index
    %c0_172 = arith.constant 0 : index
    %c0_173 = arith.constant 0 : index
    %236 = vector.load %arg5[%c2_171, %c0_172, %c0_173] : memref<5x320x64xf32, #tpu.memory_space<vmem>>, vector<1x320x64xf32>
    %237 = vector.shape_cast %236 : vector<1x320x64xf32> to vector<320x64xf32>
    %cst_174 = arith.constant dense<0.000000e+00> : vector<16x64xf32>
    %238 = tpu.matmul %235, %237, %cst_174 {dimension_numbers = #tpu.dot_dimension_numbers<[1], [0], [0], [1], [0, 0, 1, 1], [], []>} : vector<16x320xf32>, vector<320x64xf32>, vector<16x64xf32> -> vector<16x64xf32>
    %c2_175 = arith.constant 2 : index
    %c0_176 = arith.constant 0 : index
    %c0_177 = arith.constant 0 : index
    %239 = vector.load %arg6[%c2_175, %c0_176, %c0_177] : memref<5x1x64xf32, #tpu.memory_space<vmem>>, vector<1x1x64xf32>
    %240 = vector.shape_cast %239 : vector<1x1x64xf32> to vector<1x64xf32>
    %241 = vector.broadcast %240 : vector<1x64xf32> to vector<16x64xf32>
    %242 = arith.addf %238, %241 : vector<16x64xf32>
    %243 = arith.addf %188, %242 : vector<16x64xf32>
    %cst_178 = arith.constant 0.000000e+00 : f32
    %244 = vector.broadcast %cst_178 : f32 to vector<16x64xf32>
    %245 = arith.maximumf %243, %244 : vector<16x64xf32>
    %c8_179 = arith.constant 8 : index
    %c128_180 = arith.constant 128 : index
    %246 = vector.load %arg10[%c8_179, %c128_180] : memref<32x320xf32, #tpu.memory_space<vmem>>, vector<16x64xf32>
    tpu.vector_store %arg10[%c8_179, %c128_180], %245 {strides = array<i32>} : memref<32x320xf32, #tpu.memory_space<vmem>>, vector<16x64xf32>,
    %c6_181 = arith.constant 6 : index
    %c128_182 = arith.constant 128 : index
    %247 = vector.load %arg10[%c6_181, %c128_182] : memref<32x320xf32, #tpu.memory_space<vmem>>, vector<16x64xf32>
    %248 = vector.broadcast %15 : vector<16x1xf32> to vector<16x64xf32>
    %249 = arith.mulf %247, %248 : vector<16x64xf32>
    %c8_183 = arith.constant 8 : index
    %c0_184 = arith.constant 0 : index
    %250 = vector.load %arg10[%c8_183, %c0_184] : memref<32x320xf32, #tpu.memory_space<vmem>>, vector<16x64xf32>
    tpu.vector_store %arg10[%c8_183, %c0_184], %249 {strides = array<i32>} : memref<32x320xf32, #tpu.memory_space<vmem>>, vector<16x64xf32>,
    %c7_185 = arith.constant 7 : index
    %c128_186 = arith.constant 128 : index
    %251 = vector.load %arg10[%c7_185, %c128_186] : memref<32x320xf32, #tpu.memory_space<vmem>>, vector<16x64xf32>
    %252 = vector.broadcast %26 : vector<16x1xf32> to vector<16x64xf32>
    %253 = arith.mulf %251, %252 : vector<16x64xf32>
    %c8_187 = arith.constant 8 : index
    %c64_188 = arith.constant 64 : index
    %254 = vector.load %arg10[%c8_187, %c64_188] : memref<32x320xf32, #tpu.memory_space<vmem>>, vector<16x64xf32>
    tpu.vector_store %arg10[%c8_187, %c64_188], %253 {strides = array<i32>} : memref<32x320xf32, #tpu.memory_space<vmem>>, vector<16x64xf32>,
    %c9_189 = arith.constant 9 : index
    %c128_190 = arith.constant 128 : index
    %255 = vector.load %arg10[%c9_189, %c128_190] : memref<32x320xf32, #tpu.memory_space<vmem>>, vector<16x64xf32>
    %256 = vector.broadcast %37 : vector<16x1xf32> to vector<16x64xf32>
    %257 = arith.mulf %255, %256 : vector<16x64xf32>
    %c8_191 = arith.constant 8 : index
    %c192_192 = arith.constant 192 : index
    %258 = vector.load %arg10[%c8_191, %c192_192] : memref<32x320xf32, #tpu.memory_space<vmem>>, vector<16x64xf32>
    tpu.vector_store %arg10[%c8_191, %c192_192], %257 {strides = array<i32>} : memref<32x320xf32, #tpu.memory_space<vmem>>, vector<16x64xf32>,
    %c10_193 = arith.constant 10 : index
    %c128_194 = arith.constant 128 : index
    %259 = vector.load %arg10[%c10_193, %c128_194] : memref<32x320xf32, #tpu.memory_space<vmem>>, vector<16x64xf32>
    %260 = vector.broadcast %48 : vector<16x1xf32> to vector<16x64xf32>
    %261 = arith.mulf %259, %260 : vector<16x64xf32>
    %c8_195 = arith.constant 8 : index
    %c256_196 = arith.constant 256 : index
    %262 = vector.load %arg10[%c8_195, %c256_196] : memref<32x320xf32, #tpu.memory_space<vmem>>, vector<16x64xf32>
    tpu.vector_store %arg10[%c8_195, %c256_196], %261 {strides = array<i32>} : memref<32x320xf32, #tpu.memory_space<vmem>>, vector<16x64xf32>,
    %c8_197 = arith.constant 8 : index
    %c0_198 = arith.constant 0 : index
    %263 = vector.load %arg10[%c8_197, %c0_198] : memref<32x320xf32, #tpu.memory_space<vmem>>, vector<16x320xf32>
    %c3 = arith.constant 3 : index
    %c0_199 = arith.constant 0 : index
    %c0_200 = arith.constant 0 : index
    %264 = vector.load %arg3[%c3, %c0_199, %c0_200] : memref<5x320x64xf32, #tpu.memory_space<vmem>>, vector<1x320x64xf32>
    %265 = vector.shape_cast %264 : vector<1x320x64xf32> to vector<320x64xf32>
    %cst_201 = arith.constant dense<0.000000e+00> : vector<16x64xf32>
    %266 = tpu.matmul %263, %265, %cst_201 {dimension_numbers = #tpu.dot_dimension_numbers<[1], [0], [0], [1], [0, 0, 1, 1], [], []>} : vector<16x320xf32>, vector<320x64xf32>, vector<16x64xf32> -> vector<16x64xf32>
    %c3_202 = arith.constant 3 : index
    %c0_203 = arith.constant 0 : index
    %c0_204 = arith.constant 0 : index
    %267 = vector.load %arg4[%c3_202, %c0_203, %c0_204] : memref<5x1x64xf32, #tpu.memory_space<vmem>>, vector<1x1x64xf32>
    %268 = vector.shape_cast %267 : vector<1x1x64xf32> to vector<1x64xf32>
    %269 = vector.broadcast %268 : vector<1x64xf32> to vector<16x64xf32>
    %270 = arith.addf %266, %269 : vector<16x64xf32>
    %cst_205 = arith.constant 0.000000e+00 : f32
    %271 = vector.broadcast %cst_205 : f32 to vector<16x64xf32>
    %272 = arith.maximumf %270, %271 : vector<16x64xf32>
    %c8_206 = arith.constant 8 : index
    %c128_207 = arith.constant 128 : index
    %273 = vector.load %arg10[%c8_206, %c128_207] : memref<32x320xf32, #tpu.memory_space<vmem>>, vector<16x64xf32>
    tpu.vector_store %arg10[%c8_206, %c128_207], %272 {strides = array<i32>} : memref<32x320xf32, #tpu.memory_space<vmem>>, vector<16x64xf32>,
    %c6_208 = arith.constant 6 : index
    %c128_209 = arith.constant 128 : index
    %274 = vector.load %arg10[%c6_208, %c128_209] : memref<32x320xf32, #tpu.memory_space<vmem>>, vector<16x64xf32>
    %275 = vector.broadcast %15 : vector<16x1xf32> to vector<16x64xf32>
    %276 = arith.mulf %274, %275 : vector<16x64xf32>
    %c8_210 = arith.constant 8 : index
    %c0_211 = arith.constant 0 : index
    %277 = vector.load %arg10[%c8_210, %c0_211] : memref<32x320xf32, #tpu.memory_space<vmem>>, vector<16x64xf32>
    tpu.vector_store %arg10[%c8_210, %c0_211], %276 {strides = array<i32>} : memref<32x320xf32, #tpu.memory_space<vmem>>, vector<16x64xf32>,
    %c7_212 = arith.constant 7 : index
    %c128_213 = arith.constant 128 : index
    %278 = vector.load %arg10[%c7_212, %c128_213] : memref<32x320xf32, #tpu.memory_space<vmem>>, vector<16x64xf32>
    %279 = vector.broadcast %26 : vector<16x1xf32> to vector<16x64xf32>
    %280 = arith.mulf %278, %279 : vector<16x64xf32>
    %c8_214 = arith.constant 8 : index
    %c64_215 = arith.constant 64 : index
    %281 = vector.load %arg10[%c8_214, %c64_215] : memref<32x320xf32, #tpu.memory_space<vmem>>, vector<16x64xf32>
    tpu.vector_store %arg10[%c8_214, %c64_215], %280 {strides = array<i32>} : memref<32x320xf32, #tpu.memory_space<vmem>>, vector<16x64xf32>,
    %c9_216 = arith.constant 9 : index
    %c128_217 = arith.constant 128 : index
    %282 = vector.load %arg10[%c9_216, %c128_217] : memref<32x320xf32, #tpu.memory_space<vmem>>, vector<16x64xf32>
    %283 = vector.broadcast %37 : vector<16x1xf32> to vector<16x64xf32>
    %284 = arith.mulf %282, %283 : vector<16x64xf32>
    %c8_218 = arith.constant 8 : index
    %c192_219 = arith.constant 192 : index
    %285 = vector.load %arg10[%c8_218, %c192_219] : memref<32x320xf32, #tpu.memory_space<vmem>>, vector<16x64xf32>
    tpu.vector_store %arg10[%c8_218, %c192_219], %284 {strides = array<i32>} : memref<32x320xf32, #tpu.memory_space<vmem>>, vector<16x64xf32>,
    %c10_220 = arith.constant 10 : index
    %c128_221 = arith.constant 128 : index
    %286 = vector.load %arg10[%c10_220, %c128_221] : memref<32x320xf32, #tpu.memory_space<vmem>>, vector<16x64xf32>
    %287 = vector.broadcast %48 : vector<16x1xf32> to vector<16x64xf32>
    %288 = arith.mulf %286, %287 : vector<16x64xf32>
    %c8_222 = arith.constant 8 : index
    %c256_223 = arith.constant 256 : index
    %289 = vector.load %arg10[%c8_222, %c256_223] : memref<32x320xf32, #tpu.memory_space<vmem>>, vector<16x64xf32>
    tpu.vector_store %arg10[%c8_222, %c256_223], %288 {strides = array<i32>} : memref<32x320xf32, #tpu.memory_space<vmem>>, vector<16x64xf32>,
    %c8_224 = arith.constant 8 : index
    %c0_225 = arith.constant 0 : index
    %290 = vector.load %arg10[%c8_224, %c0_225] : memref<32x320xf32, #tpu.memory_space<vmem>>, vector<16x320xf32>
    %c3_226 = arith.constant 3 : index
    %c0_227 = arith.constant 0 : index
    %c0_228 = arith.constant 0 : index
    %291 = vector.load %arg5[%c3_226, %c0_227, %c0_228] : memref<5x320x64xf32, #tpu.memory_space<vmem>>, vector<1x320x64xf32>
    %292 = vector.shape_cast %291 : vector<1x320x64xf32> to vector<320x64xf32>
    %cst_229 = arith.constant dense<0.000000e+00> : vector<16x64xf32>
    %293 = tpu.matmul %290, %292, %cst_229 {dimension_numbers = #tpu.dot_dimension_numbers<[1], [0], [0], [1], [0, 0, 1, 1], [], []>} : vector<16x320xf32>, vector<320x64xf32>, vector<16x64xf32> -> vector<16x64xf32>
    %c3_230 = arith.constant 3 : index
    %c0_231 = arith.constant 0 : index
    %c0_232 = arith.constant 0 : index
    %294 = vector.load %arg6[%c3_230, %c0_231, %c0_232] : memref<5x1x64xf32, #tpu.memory_space<vmem>>, vector<1x1x64xf32>
    %295 = vector.shape_cast %294 : vector<1x1x64xf32> to vector<1x64xf32>
    %296 = vector.broadcast %295 : vector<1x64xf32> to vector<16x64xf32>
    %297 = arith.addf %293, %296 : vector<16x64xf32>
    %298 = arith.addf %243, %297 : vector<16x64xf32>
    %cst_233 = arith.constant 0.000000e+00 : f32
    %299 = vector.broadcast %cst_233 : f32 to vector<16x64xf32>
    %300 = arith.maximumf %298, %299 : vector<16x64xf32>
    %c8_234 = arith.constant 8 : index
    %c128_235 = arith.constant 128 : index
    %301 = vector.load %arg10[%c8_234, %c128_235] : memref<32x320xf32, #tpu.memory_space<vmem>>, vector<16x64xf32>
    tpu.vector_store %arg10[%c8_234, %c128_235], %300 {strides = array<i32>} : memref<32x320xf32, #tpu.memory_space<vmem>>, vector<16x64xf32>,
    %c6_236 = arith.constant 6 : index
    %c128_237 = arith.constant 128 : index
    %302 = vector.load %arg10[%c6_236, %c128_237] : memref<32x320xf32, #tpu.memory_space<vmem>>, vector<16x64xf32>
    %303 = vector.broadcast %15 : vector<16x1xf32> to vector<16x64xf32>
    %304 = arith.mulf %302, %303 : vector<16x64xf32>
    %c8_238 = arith.constant 8 : index
    %c0_239 = arith.constant 0 : index
    %305 = vector.load %arg10[%c8_238, %c0_239] : memref<32x320xf32, #tpu.memory_space<vmem>>, vector<16x64xf32>
    tpu.vector_store %arg10[%c8_238, %c0_239], %304 {strides = array<i32>} : memref<32x320xf32, #tpu.memory_space<vmem>>, vector<16x64xf32>,
    %c7_240 = arith.constant 7 : index
    %c128_241 = arith.constant 128 : index
    %306 = vector.load %arg10[%c7_240, %c128_241] : memref<32x320xf32, #tpu.memory_space<vmem>>, vector<16x64xf32>
    %307 = vector.broadcast %26 : vector<16x1xf32> to vector<16x64xf32>
    %308 = arith.mulf %306, %307 : vector<16x64xf32>
    %c8_242 = arith.constant 8 : index
    %c64_243 = arith.constant 64 : index
    %309 = vector.load %arg10[%c8_242, %c64_243] : memref<32x320xf32, #tpu.memory_space<vmem>>, vector<16x64xf32>
    tpu.vector_store %arg10[%c8_242, %c64_243], %308 {strides = array<i32>} : memref<32x320xf32, #tpu.memory_space<vmem>>, vector<16x64xf32>,
    %c9_244 = arith.constant 9 : index
    %c128_245 = arith.constant 128 : index
    %310 = vector.load %arg10[%c9_244, %c128_245] : memref<32x320xf32, #tpu.memory_space<vmem>>, vector<16x64xf32>
    %311 = vector.broadcast %37 : vector<16x1xf32> to vector<16x64xf32>
    %312 = arith.mulf %310, %311 : vector<16x64xf32>
    %c8_246 = arith.constant 8 : index
    %c192_247 = arith.constant 192 : index
    %313 = vector.load %arg10[%c8_246, %c192_247] : memref<32x320xf32, #tpu.memory_space<vmem>>, vector<16x64xf32>
    tpu.vector_store %arg10[%c8_246, %c192_247], %312 {strides = array<i32>} : memref<32x320xf32, #tpu.memory_space<vmem>>, vector<16x64xf32>,
    %c10_248 = arith.constant 10 : index
    %c128_249 = arith.constant 128 : index
    %314 = vector.load %arg10[%c10_248, %c128_249] : memref<32x320xf32, #tpu.memory_space<vmem>>, vector<16x64xf32>
    %315 = vector.broadcast %48 : vector<16x1xf32> to vector<16x64xf32>
    %316 = arith.mulf %314, %315 : vector<16x64xf32>
    %c8_250 = arith.constant 8 : index
    %c256_251 = arith.constant 256 : index
    %317 = vector.load %arg10[%c8_250, %c256_251] : memref<32x320xf32, #tpu.memory_space<vmem>>, vector<16x64xf32>
    tpu.vector_store %arg10[%c8_250, %c256_251], %316 {strides = array<i32>} : memref<32x320xf32, #tpu.memory_space<vmem>>, vector<16x64xf32>,
    %c8_252 = arith.constant 8 : index
    %c0_253 = arith.constant 0 : index
    %318 = vector.load %arg10[%c8_252, %c0_253] : memref<32x320xf32, #tpu.memory_space<vmem>>, vector<16x320xf32>
    %c4 = arith.constant 4 : index
    %c0_254 = arith.constant 0 : index
    %c0_255 = arith.constant 0 : index
    %319 = vector.load %arg3[%c4, %c0_254, %c0_255] : memref<5x320x64xf32, #tpu.memory_space<vmem>>, vector<1x320x64xf32>
    %320 = vector.shape_cast %319 : vector<1x320x64xf32> to vector<320x64xf32>
    %cst_256 = arith.constant dense<0.000000e+00> : vector<16x64xf32>
    %321 = tpu.matmul %318, %320, %cst_256 {dimension_numbers = #tpu.dot_dimension_numbers<[1], [0], [0], [1], [0, 0, 1, 1], [], []>} : vector<16x320xf32>, vector<320x64xf32>, vector<16x64xf32> -> vector<16x64xf32>
    %c4_257 = arith.constant 4 : index
    %c0_258 = arith.constant 0 : index
    %c0_259 = arith.constant 0 : index
    %322 = vector.load %arg4[%c4_257, %c0_258, %c0_259] : memref<5x1x64xf32, #tpu.memory_space<vmem>>, vector<1x1x64xf32>
    %323 = vector.shape_cast %322 : vector<1x1x64xf32> to vector<1x64xf32>
    %324 = vector.broadcast %323 : vector<1x64xf32> to vector<16x64xf32>
    %325 = arith.addf %321, %324 : vector<16x64xf32>
    %cst_260 = arith.constant 0.000000e+00 : f32
    %326 = vector.broadcast %cst_260 : f32 to vector<16x64xf32>
    %327 = arith.maximumf %325, %326 : vector<16x64xf32>
    %c8_261 = arith.constant 8 : index
    %c128_262 = arith.constant 128 : index
    %328 = vector.load %arg10[%c8_261, %c128_262] : memref<32x320xf32, #tpu.memory_space<vmem>>, vector<16x64xf32>
    tpu.vector_store %arg10[%c8_261, %c128_262], %327 {strides = array<i32>} : memref<32x320xf32, #tpu.memory_space<vmem>>, vector<16x64xf32>,
    %c6_263 = arith.constant 6 : index
    %c128_264 = arith.constant 128 : index
    %329 = vector.load %arg10[%c6_263, %c128_264] : memref<32x320xf32, #tpu.memory_space<vmem>>, vector<16x64xf32>
    %330 = vector.broadcast %15 : vector<16x1xf32> to vector<16x64xf32>
    %331 = arith.mulf %329, %330 : vector<16x64xf32>
    %c8_265 = arith.constant 8 : index
    %c0_266 = arith.constant 0 : index
    %332 = vector.load %arg10[%c8_265, %c0_266] : memref<32x320xf32, #tpu.memory_space<vmem>>, vector<16x64xf32>
    tpu.vector_store %arg10[%c8_265, %c0_266], %331 {strides = array<i32>} : memref<32x320xf32, #tpu.memory_space<vmem>>, vector<16x64xf32>,
    %c7_267 = arith.constant 7 : index
    %c128_268 = arith.constant 128 : index
    %333 = vector.load %arg10[%c7_267, %c128_268] : memref<32x320xf32, #tpu.memory_space<vmem>>, vector<16x64xf32>
    %334 = vector.broadcast %26 : vector<16x1xf32> to vector<16x64xf32>
    %335 = arith.mulf %333, %334 : vector<16x64xf32>
    %c8_269 = arith.constant 8 : index
    %c64_270 = arith.constant 64 : index
    %336 = vector.load %arg10[%c8_269, %c64_270] : memref<32x320xf32, #tpu.memory_space<vmem>>, vector<16x64xf32>
    tpu.vector_store %arg10[%c8_269, %c64_270], %335 {strides = array<i32>} : memref<32x320xf32, #tpu.memory_space<vmem>>, vector<16x64xf32>,
    %c9_271 = arith.constant 9 : index
    %c128_272 = arith.constant 128 : index
    %337 = vector.load %arg10[%c9_271, %c128_272] : memref<32x320xf32, #tpu.memory_space<vmem>>, vector<16x64xf32>
    %338 = vector.broadcast %37 : vector<16x1xf32> to vector<16x64xf32>
    %339 = arith.mulf %337, %338 : vector<16x64xf32>
    %c8_273 = arith.constant 8 : index
    %c192_274 = arith.constant 192 : index
    %340 = vector.load %arg10[%c8_273, %c192_274] : memref<32x320xf32, #tpu.memory_space<vmem>>, vector<16x64xf32>
    tpu.vector_store %arg10[%c8_273, %c192_274], %339 {strides = array<i32>} : memref<32x320xf32, #tpu.memory_space<vmem>>, vector<16x64xf32>,
    %c10_275 = arith.constant 10 : index
    %c128_276 = arith.constant 128 : index
    %341 = vector.load %arg10[%c10_275, %c128_276] : memref<32x320xf32, #tpu.memory_space<vmem>>, vector<16x64xf32>
    %342 = vector.broadcast %48 : vector<16x1xf32> to vector<16x64xf32>
    %343 = arith.mulf %341, %342 : vector<16x64xf32>
    %c8_277 = arith.constant 8 : index
    %c256_278 = arith.constant 256 : index
    %344 = vector.load %arg10[%c8_277, %c256_278] : memref<32x320xf32, #tpu.memory_space<vmem>>, vector<16x64xf32>
    tpu.vector_store %arg10[%c8_277, %c256_278], %343 {strides = array<i32>} : memref<32x320xf32, #tpu.memory_space<vmem>>, vector<16x64xf32>,
    %c8_279 = arith.constant 8 : index
    %c0_280 = arith.constant 0 : index
    %345 = vector.load %arg10[%c8_279, %c0_280] : memref<32x320xf32, #tpu.memory_space<vmem>>, vector<16x320xf32>
    %c4_281 = arith.constant 4 : index
    %c0_282 = arith.constant 0 : index
    %c0_283 = arith.constant 0 : index
    %346 = vector.load %arg5[%c4_281, %c0_282, %c0_283] : memref<5x320x64xf32, #tpu.memory_space<vmem>>, vector<1x320x64xf32>
    %347 = vector.shape_cast %346 : vector<1x320x64xf32> to vector<320x64xf32>
    %cst_284 = arith.constant dense<0.000000e+00> : vector<16x64xf32>
    %348 = tpu.matmul %345, %347, %cst_284 {dimension_numbers = #tpu.dot_dimension_numbers<[1], [0], [0], [1], [0, 0, 1, 1], [], []>} : vector<16x320xf32>, vector<320x64xf32>, vector<16x64xf32> -> vector<16x64xf32>
    %c4_285 = arith.constant 4 : index
    %c0_286 = arith.constant 0 : index
    %c0_287 = arith.constant 0 : index
    %349 = vector.load %arg6[%c4_285, %c0_286, %c0_287] : memref<5x1x64xf32, #tpu.memory_space<vmem>>, vector<1x1x64xf32>
    %350 = vector.shape_cast %349 : vector<1x1x64xf32> to vector<1x64xf32>
    %351 = vector.broadcast %350 : vector<1x64xf32> to vector<16x64xf32>
    %352 = arith.addf %348, %351 : vector<16x64xf32>
    %353 = arith.addf %298, %352 : vector<16x64xf32>
    %c0_288 = arith.constant 0 : index
    %c0_289 = arith.constant 0 : index
    %354 = vector.load %arg7[%c0_288, %c0_289] : memref<4x64xf32, #tpu.memory_space<vmem>>, vector<4x64xf32>
    %cst_290 = arith.constant dense<0.000000e+00> : vector<4x16xf32>
    %355 = tpu.matmul %354, %353, %cst_290 {dimension_numbers = #tpu.dot_dimension_numbers<[1], [1], [0], [0], [0, 0, 1, 0], [], []>} : vector<4x64xf32>, vector<16x64xf32>, vector<4x16xf32> -> vector<4x16xf32>
    %c0_291 = arith.constant 0 : index
    %c0_292 = arith.constant 0 : index
    %356 = vector.load %arg8[%c0_291, %c0_292] : memref<4x1xf32, #tpu.memory_space<vmem>>, vector<4x1xf32>
    %357 = vector.broadcast %356 : vector<4x1xf32> to vector<4x16xf32>
    %358 = arith.addf %355, %357 : vector<4x16xf32>
    %cst_293 = arith.constant dense<0xFF800000> : vector<16xf32>
    %359 = vector.multi_reduction <maximumf>, %358, %cst_293 [0] : vector<4x16xf32> to vector<16xf32>
    %360 = vector.shape_cast %359 : vector<16xf32> to vector<1x16xf32>
    %361 = vector.broadcast %360 : vector<1x16xf32> to vector<4x16xf32>
    %362 = arith.subf %358, %361 : vector<4x16xf32>
    %363 = math.exp %362 : vector<4x16xf32>
    %cst_294 = arith.constant dense<0.000000e+00> : vector<16xf32>
    %364 = vector.multi_reduction <add>, %363, %cst_294 [0] : vector<4x16xf32> to vector<16xf32>
    %365 = vector.shape_cast %364 : vector<16xf32> to vector<1x16xf32>
    %366 = tpu.reciprocal %365 : vector<1x16xf32> -> vector<1x16xf32>
    %367 = vector.broadcast %366 : vector<1x16xf32> to vector<4x16xf32>
    %368 = arith.mulf %363, %367 : vector<4x16xf32>
    %369 = vector.extract_strided_slice %368 {offsets = [0, 0], sizes = [4, 8], strides = [1, 1]} : vector<4x16xf32> to vector<4x8xf32>
    %c0_295 = arith.constant 0 : index
    %c0_296 = arith.constant 0 : index
    %c0_297 = arith.constant 0 : index
    %370 = vector.load %arg9[%c0_295, %c0_296, %c0_297] : memref<2x4x8xf32, #tpu.memory_space<vmem>>, vector<1x4x8xf32>
    %371 = vector.shape_cast %370 : vector<1x4x8xf32> to vector<4x8xf32>
    %372 = vector.shape_cast %369 : vector<4x8xf32> to vector<1x4x8xf32>
    tpu.vector_store %arg9[%c0_295, %c0_296, %c0_297], %372 {strides = array<i32>} : memref<2x4x8xf32, #tpu.memory_space<vmem>>, vector<1x4x8xf32>,
    %373 = vector.extract_strided_slice %368 {offsets = [0, 8], sizes = [4, 8], strides = [1, 1]} : vector<4x16xf32> to vector<4x8xf32>
    %c1_298 = arith.constant 1 : index
    %c0_299 = arith.constant 0 : index
    %c0_300 = arith.constant 0 : index
    %374 = vector.load %arg9[%c1_298, %c0_299, %c0_300] : memref<2x4x8xf32, #tpu.memory_space<vmem>>, vector<1x4x8xf32>
    %375 = vector.shape_cast %374 : vector<1x4x8xf32> to vector<4x8xf32>
    %376 = vector.shape_cast %373 : vector<4x8xf32> to vector<1x4x8xf32>
    tpu.vector_store %arg9[%c1_298, %c0_299, %c0_300], %376 {strides = array<i32>} : memref<2x4x8xf32, #tpu.memory_space<vmem>>, vector<1x4x8xf32>,
    return
  }
}

</mosaic_0001>

<llo_original>
// kernel: generator_forward.1
$region0: #{generator_forward.1}
  #allocation0 [shape = 'u32[]', space=smem, size = 0x4, offset = 0x4, fixed_abs, tag = 'smem constant byte address 0x4 - core index']
  #allocation1 [shape = 'u32[72,128]{1,0:T(1,128)}', space=vmem, size = 0x9000, scoped, tag = 'internal scratch']
  #allocation2 [shape = 'f32[32,320]{1,0:T(8,128)}', space=vmem, size = 0xc000, scoped, tag = 'scratch operand']
  %s0 = inlined_call_operand.vmem [shape: f32[2,16], index: 0, kind: input, shape index: {}]
  %s1 = inlined_call_operand.vmem [shape: f32[128,64], index: 1, kind: input, shape index: {}]
  %s2 = inlined_call_operand.vmem [shape: f32[16,64], index: 2, kind: input, shape index: {}]
  %s3 = inlined_call_operand.vmem [shape: f32[5,320,64], index: 3, kind: input, shape index: {}]
  %s4 = inlined_call_operand.vmem [shape: f32[5,1,64], index: 4, kind: input, shape index: {}]
  %s5 = inlined_call_operand.vmem [shape: f32[5,320,64], index: 5, kind: input, shape index: {}]
  %s6 = inlined_call_operand.vmem [shape: f32[5,1,64], index: 6, kind: input, shape index: {}]
  %s7 = inlined_call_operand.vmem [shape: f32[4,64], index: 7, kind: input, shape index: {}]
  %s8 = inlined_call_operand.vmem [shape: f32[4,1], index: 8, kind: input, shape index: {}]
  %s9 = inlined_call_operand.hbm [shape: f32[2,4,8], index: 9, kind: output, shape index: {}]
  %s10 = sld [smem:[#allocation0]]
  $region46: #{generator_forward.1} parent=0
    _
  %s12 = ssub.s32 1, %s10
  %s13 = scalar_select 0, %s12, %s10
  $region1: #{generator_forward.1} parent=0
    #allocation3 [shape = 'u8[4096]{0}', space=vmem, size = 0x1000, scoped, tag = 'output window, operand 0, single buffered']
    #allocation4 [shape = 's32[1]{0}', space=sflag, size = 0x4, scoped, tag = 'scoped memory for generator_forward.1']
    %14 = vsyncpa [#allocation4], 0
    // Predicated region
    $region2: #{generator_forward.1} parent=1 // pred_check
      _
    $region3: #{generator_forward.1} parent=1 // pred_check_branch
      %16 = sbr.rel (0) target = $region5
    $region4: #{generator_forward.1} parent=1 // pred_region
      _
    $region5: #{generator_forward.1} parent=1 // pred_fallthru
      _
    // Predicated region
    $region6: #{generator_forward.1} parent=1 // pred_check
      _
    $region7: #{generator_forward.1} parent=1 // pred_check_branch
      %18 = sbr.rel (0) target = $region9
    $region8: #{generator_forward.1} parent=1 // pred_region
      _
    $region9: #{generator_forward.1} parent=1 // pred_fallthru
      _
    // Predicated region
    $region10: #{generator_forward.1} parent=1 // pred_check
      _
    $region11: #{generator_forward.1} parent=1 // pred_check_branch
      %20 = sbr.rel (0) target = $region13
    $region12: #{generator_forward.1} parent=1 // pred_region
      _
    $region13: #{generator_forward.1} parent=1 // pred_fallthru
      _
    // Predicated region
    $region14: #{generator_forward.1} parent=1 // pred_check
      _
    $region15: #{generator_forward.1} parent=1 // pred_check_branch
      %22 = sbr.rel (0) target = $region17
    $region16: #{generator_forward.1} parent=1 // pred_region
      _
    $region17: #{generator_forward.1} parent=1 // pred_fallthru
      _
    // Predicated region
    $region18: #{generator_forward.1} parent=1 // pred_check
      _
    $region19: #{generator_forward.1} parent=1 // pred_check_branch
      %24 = sbr.rel (0) target = $region21
    $region20: #{generator_forward.1} parent=1 // pred_region
      _
    $region21: #{generator_forward.1} parent=1 // pred_fallthru
      _
    // Predicated region
    $region22: #{generator_forward.1} parent=1 // pred_check
      _
    $region23: #{generator_forward.1} parent=1 // pred_check_branch
      %26 = sbr.rel (0) target = $region25
    $region24: #{generator_forward.1} parent=1 // pred_region
      _
    $region25: #{generator_forward.1} parent=1 // pred_fallthru
      _
    // Predicated region
    $region26: #{generator_forward.1} parent=1 // pred_check
      _
    $region27: #{generator_forward.1} parent=1 // pred_check_branch
      %28 = sbr.rel (0) target = $region29
    $region28: #{generator_forward.1} parent=1 // pred_region
      _
    $region29: #{generator_forward.1} parent=1 // pred_fallthru
      _
    // Predicated region
    $region30: #{generator_forward.1} parent=1 // pred_check
      _
    $region31: #{generator_forward.1} parent=1 // pred_check_branch
      %30 = sbr.rel (0) target = $region33
    $region32: #{generator_forward.1} parent=1 // pred_region
      _
    $region33: #{generator_forward.1} parent=1 // pred_fallthru
      _
    // Predicated region
    $region34: #{generator_forward.1} parent=1 // pred_check
      _
    $region35: #{generator_forward.1} parent=1 // pred_check_branch
      %32 = sbr.rel (0) target = $region37
    $region36: #{generator_forward.1} parent=1 // pred_region
      _
    $region37: #{generator_forward.1} parent=1 // pred_fallthru
      _
    %33 = vst [vmem:[#allocation2] sm:$0xff] 0.0
    %34 = vst [vmem:[#allocation2 + $0x8] sm:$0xff] 0.0
    %vm35 = vcmask 523264
    %36 = vst.msk [vmem:[#allocation2 + $0x10] sm:$0xff] %vm35, 0.0
    %37 = vst [vmem:[#allocation2 + $0x18] sm:$0xff] 0.0
    %38 = vst [vmem:[#allocation2 + $0x20] sm:$0xff] 0.0
    %39 = vst.msk [vmem:[#allocation2 + $0x28] sm:$0xff] %vm35, 0.0
    %40 = vst [vmem:[#allocation2 + $0x30] sm:$0xff] 0.0
    %41 = vst [vmem:[#allocation2 + $0x38] sm:$0xff] 0.0
    %42 = vst.msk [vmem:[#allocation2 + $0x40] sm:$0xff] %vm35, 0.0
    %43 = vst [vmem:[#allocation2 + $0x48] sm:$0xff] 0.0
    %44 = vst [vmem:[#allocation2 + $0x50] sm:$0xff] 0.0
    %45 = vst.msk [vmem:[#allocation2 + $0x58] sm:$0xff] %vm35, 0.0
    %v46 = vlaneseq
    %v47 = vshrl.u32 %v46, 7
    %v48 = vadd.s32 %v47, 8
    %v49 = vand.u32 %v47, 7
    %v50 = vand.u32 %v48, 7
    %v51 = vadd.s32 %v49, 4294967294
    %v52 = vadd.s32 %v50, 4294967294
    %vm53 = vcmp.ge.s32.totalorder %v51, 0
    %vm54 = vcmp.ge.s32.totalorder %v52, 0
    %vm55 = vcmp.lt.s32.totalorder %v51, 8
    %vm56 = vcmp.lt.s32.totalorder %v52, 8
    %vm57 = vmand %vm53, %vm55
    %vm58 = vmand %vm54, %vm56
    %v59 = vsel %vm57, 1, 0
    %v60 = vsel %vm58, 1, 0
    %v61 = vcvt.s32.f32 %v59
    %v62 = vcvt.s32.f32 %v60
    %v63 = vadd.s32 %v49, 4294967295
    %v64 = vadd.s32 %v50, 4294967295
    %vm65 = vcmp.ge.s32.totalorder %v63, 0
    %vm66 = vcmp.ge.s32.totalorder %v64, 0
    %vm67 = vcmp.lt.s32.totalorder %v63, 8
    %vm68 = vcmp.lt.s32.totalorder %v64, 8
    %vm69 = vmand %vm65, %vm67
    %vm70 = vmand %vm66, %vm68
    %v71 = vsel %vm69, 1, 0
    %v72 = vsel %vm70, 1, 0
    %v73 = vcvt.s32.f32 %v71
    %v74 = vcvt.s32.f32 %v72
    %v75 = vadd.s32 %v49, 1
    %v76 = vadd.s32 %v50, 1
    %vm77 = vcmp.ge.s32.totalorder %v75, 0
    %vm78 = vcmp.ge.s32.totalorder %v76, 0
    %vm79 = vcmp.lt.s32.totalorder %v75, 8
    %vm80 = vcmp.lt.s32.totalorder %v76, 8
    %vm81 = vmand %vm77, %vm79
    %vm82 = vmand %vm78, %vm80
    %v83 = vsel %vm81, 1, 0
    %v84 = vsel %vm82, 1, 0
    %v85 = vcvt.s32.f32 %v83
    %v86 = vcvt.s32.f32 %v84
    %v87 = vadd.s32 %v49, 2
    %v88 = vadd.s32 %v50, 2
    %vm89 = vcmp.ge.s32.totalorder %v87, 0
    %vm90 = vcmp.ge.s32.totalorder %v88, 0
    %vm91 = vcmp.lt.s32.totalorder %v87, 8
    %vm92 = vcmp.lt.s32.totalorder %v88, 8
    %vm93 = vmand %vm89, %vm91
    %vm94 = vmand %vm90, %vm92
    %v95 = vsel %vm93, 1, 0
    %v96 = vsel %vm94, 1, 0
    %v97 = vcvt.s32.f32 %v95
    %v98 = vcvt.s32.f32 %v96
    %v99 = vld [vmem:[%s0] sm:$0x3]
    %v100 = vperm.slane %v99, 0
    %v101 = vperm.slane %v99, 1
    %v102 = vlaneseq
    %v103 = vand.u32 %v102, 127
    %v104 = vshra.s32 %v103, 3
    %vm105 = vcmp.eq.s32.totalorder %v104, %v47
    %vm106 = vcmp.eq.s32.totalorder %v104, %v48
    %v107 = vsel %vm105, 1, 0
    %v108 = vsel %vm106, 1, 0
    %v109 = vcvt.s32.f32 %v107
    %v110 = vcvt.s32.f32 %v108
    %v111 = vand.u32 %v103, 7
    %vm112 = vcmp.eq.s32.totalorder %v111, %v49
    %vm113 = vcmp.eq.s32.totalorder %v111, %v50
    %v114 = vsel %vm112, 1, 0
    %v115 = vsel %vm113, 1, 0
    %v116 = vcvt.s32.f32 %v114
    %v117 = vcvt.s32.f32 %v115
    %vm118 = vcmask 130048
    %v120 = vsel %vm118, %v100, 0
    %v123 = vsel %vm118, %v101, 0
    %125 = vmatpush.msra.mxu0 0.0
    %126 = vmatpush.msra.mxu0 0.0
    %127 = vmatpush.msra.mxu0 0.0
    %128 = vmatpush.msra.mxu0 0.0
    %129 = vmatpush.msra.mxu0 0.0
    %130 = vmatpush.msra.mxu0 0.0
    %131 = vmatpush.msra.mxu0 0.0
    %132 = vmatpush.msra.mxu0 0.0
    %133 = vmatpush.msra.mxu0 0.0
    %134 = vmatpush.msra.mxu0 0.0
    %135 = vmatpush.msra.mxu0 0.0
    %136 = vmatpush.msra.mxu0 0.0
    %137 = vmatpush.msra.mxu0 0.0
    %138 = vmatpush.msra.mxu0 0.0
    %139 = vmatpush.msra.mxu0 %v110
    %140 = vmatpush.msra.mxu0 %v109
    %141 = vmatmul.f32.gmra.mxu0 %v120
    %v142 = vpop.f32.mrf.mxu0
    %v143 = vadd.f32 0.0, %v142
    %144 = vmatmul.f32.gmra.mxu0 %v123
    %v145 = vpop.f32.mrf.mxu0
    %v146 = vadd.f32 0.0, %v145
    %147 = vdwg.mxu0
    %v148 = vmul.f32 %v143, %v116
    %v149 = vmul.f32 %v146, %v117
    %v150 = vld [vmem:[%s1] sm:$0xff]
    %v151 = vld [vmem:[%s1 + $0x8] sm:$0xff]
    %v152 = vld [vmem:[%s1 + $0x10] sm:$0xff]
    %v153 = vld [vmem:[%s1 + $0x18] sm:$0xff]
    %v154 = vld [vmem:[%s1 + $0x20] sm:$0xff]
    %v155 = vld [vmem:[%s1 + $0x28] sm:$0xff]
    %v156 = vld [vmem:[%s1 + $0x30] sm:$0xff]
    %v157 = vld [vmem:[%s1 + $0x38] sm:$0xff]
    %v158 = vld [vmem:[%s1 + $0x40] sm:$0xff]
    %v159 = vld [vmem:[%s1 + $0x48] sm:$0xff]
    %v160 = vld [vmem:[%s1 + $0x50] sm:$0xff]
    %v161 = vld [vmem:[%s1 + $0x58] sm:$0xff]
    %v162 = vld [vmem:[%s1 + $0x60] sm:$0xff]
    %v163 = vld [vmem:[%s1 + $0x68] sm:$0xff]
    %v164 = vld [vmem:[%s1 + $0x70] sm:$0xff]
    %v165 = vld [vmem:[%s1 + $0x78] sm:$0xff]
    %v166 = vld [vmem:[%s2] sm:$0xff]
    %v167 = vld [vmem:[%s2 + $0x8] sm:$0xff]
    %168 = vmatpush.msra.mxu0 %v165
    %169 = vmatpush.msra.mxu0 %v164
    %170 = vmatpush.msra.mxu0 %v163
    %171 = vmatpush.msra.mxu0 %v162
    %172 = vmatpush.msra.mxu0 %v161
    %173 = vmatpush.msra.mxu0 %v160
    %174 = vmatpush.msra.mxu0 %v159
    %175 = vmatpush.msra.mxu0 %v158
    %176 = vmatpush.msra.mxu0 %v157
    %177 = vmatpush.msra.mxu0 %v156
    %178 = vmatpush.msra.mxu0 %v155
    %179 = vmatpush.msra.mxu0 %v154
    %180 = vmatpush.msra.mxu0 %v153
    %181 = vmatpush.msra.mxu0 %v152
    %182 = vmatpush.msra.mxu0 %v151
    %183 = vmatpush.msra.mxu0 %v150
    %184 = vmatmul.f32.gmra.mxu0 %v148
    %v185 = vpop.f32.mrf.mxu0
    %v186 = vadd.f32 %v166, %v185
    %187 = vmatmul.f32.gmra.mxu0 %v149
    %v188 = vpop.f32.mrf.mxu0
    %v189 = vadd.f32 %v167, %v188
    %190 = vdwg.mxu0
    %v191 = vmax.f32 %v186, 0.0
    %v192 = vmax.f32 %v189, 0.0
    %193 = vst.msk [vmem:[#allocation2 + $0x20] sm:$0xff] %vm35, %v191
    %194 = vst.msk [vmem:[#allocation2 + $0x38] sm:$0xff] %vm35, %v192
    %v195 = vld [vmem:[#allocation2 + $0x8] sm:$0xc0]
    %v196 = vld [vmem:[#allocation2 + $0x20] sm:$0xff]
    %v197 = vld [vmem:[#allocation2 + $0x38] sm:$0x3f]
    %vm200 = vcmask 1045504
    %v201 = vrot.slane %v61, 2
    %v202 = vrot.slane %v62, 2
    %v203 = vsel %vm200, %v201, %v202
    %v207 = vmul.f32 %v195, %v201
    %v208 = vmul.f32 %v196, %v203
    %v209 = vmul.f32 %v197, %v202
    %vm213 = vcmask 1041408
    %v214 = vrot.slane %v207, 6
    %v215 = vrot.slane %v208, 6
    %v216 = vsel %vm213, %v214, %v215
    %v217 = vrot.slane %v209, 6
    %v218 = vsel %vm213, %v215, %v217
    %221 = vst.msk [vmem:[#allocation2 + $0x18] sm:$0xff] %vm35, %v216
    %222 = vst.msk [vmem:[#allocation2 + $0x30] sm:$0xff] %vm35, %v218
    %v223 = vld [vmem:[#allocation2 + $0x8] sm:$0x80]
    %v224 = vld [vmem:[#allocation2 + $0x20] sm:$0xff]
    %v225 = vld [vmem:[#allocation2 + $0x38] sm:$0x7f]
    %vm228 = vcmask 1046528
    %v229 = vrot.slane %v73, 1
    %v230 = vrot.slane %v74, 1
    %v231 = vsel %vm228, %v229, %v230
    %v235 = vmul.f32 %v223, %v229
    %v236 = vmul.f32 %v224, %v231
    %v237 = vmul.f32 %v225, %v230
    %vm241 = vcmask 1040384
    %v242 = vrot.slane %v235, 7
    %v243 = vrot.slane %v236, 7
    %v244 = vsel %vm241, %v242, %v243
    %v245 = vrot.slane %v237, 7
    %v246 = vsel %vm241, %v243, %v245
    %247 = vrot.lane.b32.xlu0 %v244, 64
    %v248 = vpop.permute.xlu0 %247
    %249 = vrot.lane.b32.xlu0 %v246, 64
    %v250 = vpop.permute.xlu0 %249
    %vm253 = vcmask 1048064
    %254 = vst.msk [vmem:[#allocation2 + $0x18] sm:$0xff] %vm253, %v248
    %255 = vst.msk [vmem:[#allocation2 + $0x30] sm:$0xff] %vm253, %v250
    %v256 = vld [vmem:[#allocation2 + $0x20] sm:$0xfe]
    %v257 = vld [vmem:[#allocation2 + $0x38] sm:$0xff]
    %v258 = vld [vmem:[#allocation2 + $0x50] sm:$0x1]
    %v261 = vrot.slane %v85, 7
    %v262 = vrot.slane %v86, 7
    %v263 = vsel %vm241, %v261, %v262
    %v267 = vmul.f32 %v256, %v261
    %v268 = vmul.f32 %v257, %v263
    %v269 = vmul.f32 %v258, %v262
    %v273 = vrot.slane %v267, 1
    %v274 = vrot.slane %v268, 1
    %v275 = vsel %vm228, %v273, %v274
    %v276 = vrot.slane %v269, 1
    %v277 = vsel %vm228, %v274, %v276
    %278 = vrot.lane.b32.xlu0 %v275, 64
    %v279 = vpop.permute.xlu0 %278
    %280 = vrot.lane.b32.xlu0 %v277, 64
    %v281 = vpop.permute.xlu0 %280
    %284 = vst.msk [vmem:[#allocation2 + $0x20] sm:$0xff] %vm253, %v279
    %285 = vst.msk [vmem:[#allocation2 + $0x38] sm:$0xff] %vm253, %v281
    %v286 = vld [vmem:[#allocation2 + $0x20] sm:$0xfc]
    %v287 = vld [vmem:[#allocation2 + $0x38] sm:$0xff]
    %v288 = vld [vmem:[#allocation2 + $0x50] sm:$0x3]
    %v291 = vrot.slane %v97, 6
    %v292 = vrot.slane %v98, 6
    %v293 = vsel %vm213, %v291, %v292
    %v297 = vmul.f32 %v286, %v291
    %v298 = vmul.f32 %v287, %v293
    %v299 = vmul.f32 %v288, %v292
    %v303 = vrot.slane %v297, 2
    %v304 = vrot.slane %v298, 2
    %v305 = vsel %vm200, %v303, %v304
    %v306 = vrot.slane %v299, 2
    %v307 = vsel %vm200, %v304, %v306
    %310 = vst.msk [vmem:[#allocation2 + $0x28] sm:$0xff] %vm35, %v305
    %311 = vst.msk [vmem:[#allocation2 + $0x40] sm:$0xff] %vm35, %v307
    %v312 = vld [vmem:[#allocation2 + $0x18] sm:$0xff]
    %v313 = vld [vmem:[#allocation2 + $0x20] sm:$0xff]
    %v314 = vld [vmem:[#allocation2 + $0x28] sm:$0xff]
    %v315 = vld [vmem:[#allocation2 + $0x30] sm:$0xff]
    %v316 = vld [vmem:[#allocation2 + $0x38] sm:$0xff]
    %v317 = vld [vmem:[#allocation2 + $0x40] sm:$0xff]
    %v318 = vld [vmem:[%s3] sm:$0xff]
    %v319 = vld [vmem:[%s3 + $0x8] sm:$0xff]
    %v320 = vld [vmem:[%s3 + $0x10] sm:$0xff]
    %v321 = vld [vmem:[%s3 + $0x18] sm:$0xff]
    %v322 = vld [vmem:[%s3 + $0x20] sm:$0xff]
    %v323 = vld [vmem:[%s3 + $0x28] sm:$0xff]
    %v324 = vld [vmem:[%s3 + $0x30] sm:$0xff]
    %v325 = vld [vmem:[%s3 + $0x38] sm:$0xff]
    %v326 = vld [vmem:[%s3 + $0x40] sm:$0xff]
    %v327 = vld [vmem:[%s3 + $0x48] sm:$0xff]
    %v328 = vld [vmem:[%s3 + $0x50] sm:$0xff]
    %v329 = vld [vmem:[%s3 + $0x58] sm:$0xff]
    %v330 = vld [vmem:[%s3 + $0x60] sm:$0xff]
    %v331 = vld [vmem:[%s3 + $0x68] sm:$0xff]
    %v332 = vld [vmem:[%s3 + $0x70] sm:$0xff]
    %v333 = vld [vmem:[%s3 + $0x78] sm:$0xff]
    %v334 = vld [vmem:[%s3 + $0x80] sm:$0xff]
    %v335 = vld [vmem:[%s3 + $0x88] sm:$0xff]
    %v336 = vld [vmem:[%s3 + $0x90] sm:$0xff]
    %v337 = vld [vmem:[%s3 + $0x98] sm:$0xff]
    %v338 = vld [vmem:[%s3 + $0xa0] sm:$0xff]
    %v339 = vld [vmem:[%s3 + $0xa8] sm:$0xff]
    %v340 = vld [vmem:[%s3 + $0xb0] sm:$0xff]
    %v341 = vld [vmem:[%s3 + $0xb8] sm:$0xff]
    %v342 = vld [vmem:[%s3 + $0xc0] sm:$0xff]
    %v343 = vld [vmem:[%s3 + $0xc8] sm:$0xff]
    %v344 = vld [vmem:[%s3 + $0xd0] sm:$0xff]
    %v345 = vld [vmem:[%s3 + $0xd8] sm:$0xff]
    %v346 = vld [vmem:[%s3 + $0xe0] sm:$0xff]
    %v347 = vld [vmem:[%s3 + $0xe8] sm:$0xff]
    %v348 = vld [vmem:[%s3 + $0xf0] sm:$0xff]
    %v349 = vld [vmem:[%s3 + $0xf8] sm:$0xff]
    %v350 = vld [vmem:[%s3 + $0x100] sm:$0xff]
    %v351 = vld [vmem:[%s3 + $0x108] sm:$0xff]
    %v352 = vld [vmem:[%s3 + $0x110] sm:$0xff]
    %v353 = vld [vmem:[%s3 + $0x118] sm:$0xff]
    %v354 = vld [vmem:[%s3 + $0x120] sm:$0xff]
    %v355 = vld [vmem:[%s3 + $0x128] sm:$0xff]
    %v356 = vld [vmem:[%s3 + $0x130] sm:$0xff]
    %v357 = vld [vmem:[%s3 + $0x138] sm:$0xff]
    %v358 = vld [vmem:[%s4] sm:$0x1]
    %v360 = vperm.slane %v358, 0
    %v363 = vsel %vm35, %v314, 0
    %v366 = vsel %vm35, %v317, 0
    %368 = vmatpush.msra.mxu0 %v333
    %369 = vmatpush.msra.mxu0 %v332
    %370 = vmatpush.msra.mxu0 %v331
    %371 = vmatpush.msra.mxu0 %v330
    %372 = vmatpush.msra.mxu0 %v329
    %373 = vmatpush.msra.mxu0 %v328
    %374 = vmatpush.msra.mxu0 %v327
    %375 = vmatpush.msra.mxu0 %v326
    %376 = vmatpush.msra.mxu0 %v325
    %377 = vmatpush.msra.mxu0 %v324
    %378 = vmatpush.msra.mxu0 %v323
    %379 = vmatpush.msra.mxu0 %v322
    %380 = vmatpush.msra.mxu0 %v321
    %381 = vmatpush.msra.mxu0 %v320
    %382 = vmatpush.msra.mxu0 %v319
    %383 = vmatpush.msra.mxu0 %v318
    %384 = vmatmul.f32.gmra.mxu0 %v312
    %v385 = vpop.f32.mrf.mxu0
    %v386 = vadd.f32 %v360, %v385
    %387 = vmatmul.f32.gmra.mxu0 %v315
    %v388 = vpop.f32.mrf.mxu0
    %v389 = vadd.f32 %v360, %v388
    %390 = vdwg.mxu0
    %391 = vmatpush.msra.mxu0 %v349
    %392 = vmatpush.msra.mxu0 %v348
    %393 = vmatpush.msra.mxu0 %v347
    %394 = vmatpush.msra.mxu0 %v346
    %395 = vmatpush.msra.mxu0 %v345
    %396 = vmatpush.msra.mxu0 %v344
    %397 = vmatpush.msra.mxu0 %v343
    %398 = vmatpush.msra.mxu0 %v342
    %399 = vmatpush.msra.mxu0 %v341
    %400 = vmatpush.msra.mxu0 %v340
    %401 = vmatpush.msra.mxu0 %v339
    %402 = vmatpush.msra.mxu0 %v338
    %403 = vmatpush.msra.mxu0 %v337
    %404 = vmatpush.msra.mxu0 %v336
    %405 = vmatpush.msra.mxu0 %v335
    %406 = vmatpush.msra.mxu0 %v334
    %407 = vmatmul.f32.gmra.mxu0 %v313
    %v408 = vpop.f32.mrf.mxu0
    %v409 = vadd.f32 %v386, %v408
    %410 = vmatmul.f32.gmra.mxu0 %v316
    %v411 = vpop.f32.mrf.mxu0
    %v412 = vadd.f32 %v389, %v411
    %413 = vdwg.mxu0
    %414 = vmatpush.msra.mxu0 0.0
    %415 = vmatpush.msra.mxu0 0.0
    %416 = vmatpush.msra.mxu0 0.0
    %417 = vmatpush.msra.mxu0 0.0
    %418 = vmatpush.msra.mxu0 0.0
    %419 = vmatpush.msra.mxu0 0.0
    %420 = vmatpush.msra.mxu0 0.0
    %421 = vmatpush.msra.mxu0 0.0
    %422 = vmatpush.msra.mxu0 %v357
    %423 = vmatpush.msra.mxu0 %v356
    %424 = vmatpush.msra.mxu0 %v355
    %425 = vmatpush.msra.mxu0 %v354
    %426 = vmatpush.msra.mxu0 %v353
    %427 = vmatpush.msra.mxu0 %v352
    %428 = vmatpush.msra.mxu0 %v351
    %429 = vmatpush.msra.mxu0 %v350
    %430 = vmatmul.f32.gmra.mxu0 %v363
    %v431 = vpop.f32.mrf.mxu0
    %v432 = vadd.f32 %v409, %v431
    %433 = vmatmul.f32.gmra.mxu0 %v366
    %v434 = vpop.f32.mrf.mxu0
    %v435 = vadd.f32 %v412, %v434
    %436 = vdwg.mxu0
    %v437 = vmax.f32 %v432, 0.0
    %v438 = vmax.f32 %v435, 0.0
    %439 = vst.msk [vmem:[#allocation2 + $0x20] sm:$0xff] %vm35, %v437
    %440 = vst.msk [vmem:[#allocation2 + $0x38] sm:$0xff] %vm35, %v438
    %v441 = vld [vmem:[#allocation2 + $0x8] sm:$0xc0]
    %v442 = vld [vmem:[#allocation2 + $0x20] sm:$0xff]
    %v443 = vld [vmem:[#allocation2 + $0x38] sm:$0x3f]
    %v444 = vmul.f32 %v441, %v201
    %v445 = vmul.f32 %v442, %v203
    %v446 = vmul.f32 %v443, %v202
    %v450 = vrot.slane %v444, 6
    %v451 = vrot.slane %v445, 6
    %v452 = vsel %vm213, %v450, %v451
    %v453 = vrot.slane %v446, 6
    %v454 = vsel %vm213, %v451, %v453
    %457 = vst.msk [vmem:[#allocation2 + $0x18] sm:$0xff] %vm35, %v452
    %458 = vst.msk [vmem:[#allocation2 + $0x30] sm:$0xff] %vm35, %v454
    %v459 = vld [vmem:[#allocation2 + $0x8] sm:$0x80]
    %v460 = vld [vmem:[#allocation2 + $0x20] sm:$0xff]
    %v461 = vld [vmem:[#allocation2 + $0x38] sm:$0x7f]
    %v462 = vmul.f32 %v459, %v229
    %v463 = vmul.f32 %v460, %v231
    %v464 = vmul.f32 %v461, %v230
    %v468 = vrot.slane %v462, 7
    %v469 = vrot.slane %v463, 7
    %v470 = vsel %vm241, %v468, %v469
    %v471 = vrot.slane %v464, 7
    %v472 = vsel %vm241, %v469, %v471
    %473 = vrot.lane.b32.xlu0 %v470, 64
    %v474 = vpop.permute.xlu0 %473
    %475 = vrot.lane.b32.xlu0 %v472, 64
    %v476 = vpop.permute.xlu0 %475
    %479 = vst.msk [vmem:[#allocation2 + $0x18] sm:$0xff] %vm253, %v474
    %480 = vst.msk [vmem:[#allocation2 + $0x30] sm:$0xff] %vm253, %v476
    %v481 = vld [vmem:[#allocation2 + $0x20] sm:$0xfe]
    %v482 = vld [vmem:[#allocation2 + $0x38] sm:$0xff]
    %v483 = vld [vmem:[#allocation2 + $0x50] sm:$0x1]
    %v484 = vmul.f32 %v481, %v261
    %v485 = vmul.f32 %v482, %v263
    %v486 = vmul.f32 %v483, %v262
    %v490 = vrot.slane %v484, 1
    %v491 = vrot.slane %v485, 1
    %v492 = vsel %vm228, %v490, %v491
    %v493 = vrot.slane %v486, 1
    %v494 = vsel %vm228, %v491, %v493
    %495 = vrot.lane.b32.xlu0 %v492, 64
    %v496 = vpop.permute.xlu0 %495
    %497 = vrot.lane.b32.xlu0 %v494, 64
    %v498 = vpop.permute.xlu0 %497
    %501 = vst.msk [vmem:[#allocation2 + $0x20] sm:$0xff] %vm253, %v496
    %502 = vst.msk [vmem:[#allocation2 + $0x38] sm:$0xff] %vm253, %v498
    %v503 = vld [vmem:[#allocation2 + $0x20] sm:$0xfc]
    %v504 = vld [vmem:[#allocation2 + $0x38] sm:$0xff]
    %v505 = vld [vmem:[#allocation2 + $0x50] sm:$0x3]
    %v506 = vmul.f32 %v503, %v291
    %v507 = vmul.f32 %v504, %v293
    %v508 = vmul.f32 %v505, %v292
    %v512 = vrot.slane %v506, 2
    %v513 = vrot.slane %v507, 2
    %v514 = vsel %vm200, %v512, %v513
    %v515 = vrot.slane %v508, 2
    %v516 = vsel %vm200, %v513, %v515
    %519 = vst.msk [vmem:[#allocation2 + $0x28] sm:$0xff] %vm35, %v514
    %520 = vst.msk [vmem:[#allocation2 + $0x40] sm:$0xff] %vm35, %v516
    %v521 = vld [vmem:[#allocation2 + $0x18] sm:$0xff]
    %v522 = vld [vmem:[#allocation2 + $0x20] sm:$0xff]
    %v523 = vld [vmem:[#allocation2 + $0x28] sm:$0xff]
    %v524 = vld [vmem:[#allocation2 + $0x30] sm:$0xff]
    %v525 = vld [vmem:[#allocation2 + $0x38] sm:$0xff]
    %v526 = vld [vmem:[#allocation2 + $0x40] sm:$0xff]
    %v527 = vld [vmem:[%s5] sm:$0xff]
    %v528 = vld [vmem:[%s5 + $0x8] sm:$0xff]
    %v529 = vld [vmem:[%s5 + $0x10] sm:$0xff]
    %v530 = vld [vmem:[%s5 + $0x18] sm:$0xff]
    %v531 = vld [vmem:[%s5 + $0x20] sm:$0xff]
    %v532 = vld [vmem:[%s5 + $0x28] sm:$0xff]
    %v533 = vld [vmem:[%s5 + $0x30] sm:$0xff]
    %v534 = vld [vmem:[%s5 + $0x38] sm:$0xff]
    %v535 = vld [vmem:[%s5 + $0x40] sm:$0xff]
    %v536 = vld [vmem:[%s5 + $0x48] sm:$0xff]
    %v537 = vld [vmem:[%s5 + $0x50] sm:$0xff]
    %v538 = vld [vmem:[%s5 + $0x58] sm:$0xff]
    %v539 = vld [vmem:[%s5 + $0x60] sm:$0xff]
    %v540 = vld [vmem:[%s5 + $0x68] sm:$0xff]
    %v541 = vld [vmem:[%s5 + $0x70] sm:$0xff]
    %v542 = vld [vmem:[%s5 + $0x78] sm:$0xff]
    %v543 = vld [vmem:[%s5 + $0x80] sm:$0xff]
    %v544 = vld [vmem:[%s5 + $0x88] sm:$0xff]
    %v545 = vld [vmem:[%s5 + $0x90] sm:$0xff]
    %v546 = vld [vmem:[%s5 + $0x98] sm:$0xff]
    %v547 = vld [vmem:[%s5 + $0xa0] sm:$0xff]
    %v548 = vld [vmem:[%s5 + $0xa8] sm:$0xff]
    %v549 = vld [vmem:[%s5 + $0xb0] sm:$0xff]
    %v550 = vld [vmem:[%s5 + $0xb8] sm:$0xff]
    %v551 = vld [vmem:[%s5 + $0xc0] sm:$0xff]
    %v552 = vld [vmem:[%s5 + $0xc8] sm:$0xff]
    %v553 = vld [vmem:[%s5 + $0xd0] sm:$0xff]
    %v554 = vld [vmem:[%s5 + $0xd8] sm:$0xff]
    %v555 = vld [vmem:[%s5 + $0xe0] sm:$0xff]
    %v556 = vld [vmem:[%s5 + $0xe8] sm:$0xff]
    %v557 = vld [vmem:[%s5 + $0xf0] sm:$0xff]
    %v558 = vld [vmem:[%s5 + $0xf8] sm:$0xff]
    %v559 = vld [vmem:[%s5 + $0x100] sm:$0xff]
    %v560 = vld [vmem:[%s5 + $0x108] sm:$0xff]
    %v561 = vld [vmem:[%s5 + $0x110] sm:$0xff]
    %v562 = vld [vmem:[%s5 + $0x118] sm:$0xff]
    %v563 = vld [vmem:[%s5 + $0x120] sm:$0xff]
    %v564 = vld [vmem:[%s5 + $0x128] sm:$0xff]
    %v565 = vld [vmem:[%s5 + $0x130] sm:$0xff]
    %v566 = vld [vmem:[%s5 + $0x138] sm:$0xff]
    %v567 = vld [vmem:[%s6] sm:$0x1]
    %v569 = vperm.slane %v567, 0
    %v572 = vsel %vm35, %v523, 0
    %v575 = vsel %vm35, %v526, 0
    %577 = vmatpush.msra.mxu0 %v542
    %578 = vmatpush.msra.mxu0 %v541
    %579 = vmatpush.msra.mxu0 %v540
    %580 = vmatpush.msra.mxu0 %v539
    %581 = vmatpush.msra.mxu0 %v538
    %582 = vmatpush.msra.mxu0 %v537
    %583 = vmatpush.msra.mxu0 %v536
    %584 = vmatpush.msra.mxu0 %v535
    %585 = vmatpush.msra.mxu0 %v534
    %586 = vmatpush.msra.mxu0 %v533
    %587 = vmatpush.msra.mxu0 %v532
    %588 = vmatpush.msra.mxu0 %v531
    %589 = vmatpush.msra.mxu0 %v530
    %590 = vmatpush.msra.mxu0 %v529
    %591 = vmatpush.msra.mxu0 %v528
    %592 = vmatpush.msra.mxu0 %v527
    %593 = vmatmul.f32.gmra.mxu0 %v521
    %v594 = vpop.f32.mrf.mxu0
    %v595 = vadd.f32 %v569, %v594
    %596 = vmatmul.f32.gmra.mxu0 %v524
    %v597 = vpop.f32.mrf.mxu0
    %v598 = vadd.f32 %v569, %v597
    %599 = vdwg.mxu0
    %600 = vmatpush.msra.mxu0 %v558
    %601 = vmatpush.msra.mxu0 %v557
    %602 = vmatpush.msra.mxu0 %v556
    %603 = vmatpush.msra.mxu0 %v555
    %604 = vmatpush.msra.mxu0 %v554
    %605 = vmatpush.msra.mxu0 %v553
    %606 = vmatpush.msra.mxu0 %v552
    %607 = vmatpush.msra.mxu0 %v551
    %608 = vmatpush.msra.mxu0 %v550
    %609 = vmatpush.msra.mxu0 %v549
    %610 = vmatpush.msra.mxu0 %v548
    %611 = vmatpush.msra.mxu0 %v547
    %612 = vmatpush.msra.mxu0 %v546
    %613 = vmatpush.msra.mxu0 %v545
    %614 = vmatpush.msra.mxu0 %v544
    %615 = vmatpush.msra.mxu0 %v543
    %616 = vmatmul.f32.gmra.mxu0 %v522
    %v617 = vpop.f32.mrf.mxu0
    %v618 = vadd.f32 %v595, %v617
    %619 = vmatmul.f32.gmra.mxu0 %v525
    %v620 = vpop.f32.mrf.mxu0
    %v621 = vadd.f32 %v598, %v620
    %622 = vdwg.mxu0
    %623 = vmatpush.msra.mxu0 0.0
    %624 = vmatpush.msra.mxu0 0.0
    %625 = vmatpush.msra.mxu0 0.0
    %626 = vmatpush.msra.mxu0 0.0
    %627 = vmatpush.msra.mxu0 0.0
    %628 = vmatpush.msra.mxu0 0.0
    %629 = vmatpush.msra.mxu0 0.0
    %630 = vmatpush.msra.mxu0 0.0
    %631 = vmatpush.msra.mxu0 %v566
    %632 = vmatpush.msra.mxu0 %v565
    %633 = vmatpush.msra.mxu0 %v564
    %634 = vmatpush.msra.mxu0 %v563
    %635 = vmatpush.msra.mxu0 %v562
    %636 = vmatpush.msra.mxu0 %v561
    %637 = vmatpush.msra.mxu0 %v560
    %638 = vmatpush.msra.mxu0 %v559
    %639 = vmatmul.f32.gmra.mxu0 %v572
    %v640 = vpop.f32.mrf.mxu0
    %v641 = vadd.f32 %v618, %v640
    %642 = vmatmul.f32.gmra.mxu0 %v575
    %v643 = vpop.f32.mrf.mxu0
    %v644 = vadd.f32 %v621, %v643
    %645 = vdwg.mxu0
    %v646 = vadd.f32 %v186, %v641
    %v647 = vadd.f32 %v189, %v644
    %v648 = vmax.f32 %v646, 0.0
    %v649 = vmax.f32 %v647, 0.0
    %650 = vst.msk [vmem:[#allocation2 + $0x20] sm:$0xff] %vm35, %v648
    %651 = vst.msk [vmem:[#allocation2 + $0x38] sm:$0xff] %vm35, %v649
    %v652 = vld [vmem:[#allocation2 + $0x8] sm:$0xc0]
    %v653 = vld [vmem:[#allocation2 + $0x20] sm:$0xff]
    %v654 = vld [vmem:[#allocation2 + $0x38] sm:$0x3f]
    %v655 = vmul.f32 %v652, %v201
    %v656 = vmul.f32 %v653, %v203
    %v657 = vmul.f32 %v654, %v202
    %v661 = vrot.slane %v655, 6
    %v662 = vrot.slane %v656, 6
    %v663 = vsel %vm213, %v661, %v662
    %v664 = vrot.slane %v657, 6
    %v665 = vsel %vm213, %v662, %v664
    %668 = vst.msk [vmem:[#allocation2 + $0x18] sm:$0xff] %vm35, %v663
    %669 = vst.msk [vmem:[#allocation2 + $0x30] sm:$0xff] %vm35, %v665
    %v670 = vld [vmem:[#allocation2 + $0x8] sm:$0x80]
    %v671 = vld [vmem:[#allocation2 + $0x20] sm:$0xff]
    %v672 = vld [vmem:[#allocation2 + $0x38] sm:$0x7f]
    %v673 = vmul.f32 %v670, %v229
    %v674 = vmul.f32 %v671, %v231
    %v675 = vmul.f32 %v672, %v230
    %v679 = vrot.slane %v673, 7
    %v680 = vrot.slane %v674, 7
    %v681 = vsel %vm241, %v679, %v680
    %v682 = vrot.slane %v675, 7
    %v683 = vsel %vm241, %v680, %v682
    %684 = vrot.lane.b32.xlu0 %v681, 64
    %v685 = vpop.permute.xlu0 %684
    %686 = vrot.lane.b32.xlu0 %v683, 64
    %v687 = vpop.permute.xlu0 %686
    %690 = vst.msk [vmem:[#allocation2 + $0x18] sm:$0xff] %vm253, %v685
    %691 = vst.msk [vmem:[#allocation2 + $0x30] sm:$0xff] %vm253, %v687
    %v692 = vld [vmem:[#allocation2 + $0x20] sm:$0xfe]
    %v693 = vld [vmem:[#allocation2 + $0x38] sm:$0xff]
    %v694 = vld [vmem:[#allocation2 + $0x50] sm:$0x1]
    %v695 = vmul.f32 %v692, %v261
    %v696 = vmul.f32 %v693, %v263
    %v697 = vmul.f32 %v694, %v262
    %v701 = vrot.slane %v695, 1
    %v702 = vrot.slane %v696, 1
    %v703 = vsel %vm228, %v701, %v702
    %v704 = vrot.slane %v697, 1
    %v705 = vsel %vm228, %v702, %v704
    %706 = vrot.lane.b32.xlu0 %v703, 64
    %v707 = vpop.permute.xlu0 %706
    %708 = vrot.lane.b32.xlu0 %v705, 64
    %v709 = vpop.permute.xlu0 %708
    %712 = vst.msk [vmem:[#allocation2 + $0x20] sm:$0xff] %vm253, %v707
    %713 = vst.msk [vmem:[#allocation2 + $0x38] sm:$0xff] %vm253, %v709
    %v714 = vld [vmem:[#allocation2 + $0x20] sm:$0xfc]
    %v715 = vld [vmem:[#allocation2 + $0x38] sm:$0xff]
    %v716 = vld [vmem:[#allocation2 + $0x50] sm:$0x3]
    %v717 = vmul.f32 %v714, %v291
    %v718 = vmul.f32 %v715, %v293
    %v719 = vmul.f32 %v716, %v292
    %v723 = vrot.slane %v717, 2
    %v724 = vrot.slane %v718, 2
    %v725 = vsel %vm200, %v723, %v724
    %v726 = vrot.slane %v719, 2
    %v727 = vsel %vm200, %v724, %v726
    %730 = vst.msk [vmem:[#allocation2 + $0x28] sm:$0xff] %vm35, %v725
    %731 = vst.msk [vmem:[#allocation2 + $0x40] sm:$0xff] %vm35, %v727
    %v732 = vld [vmem:[#allocation2 + $0x18] sm:$0xff]
    %v733 = vld [vmem:[#allocation2 + $0x20] sm:$0xff]
    %v734 = vld [vmem:[#allocation2 + $0x28] sm:$0xff]
    %v735 = vld [vmem:[#allocation2 + $0x30] sm:$0xff]
    %v736 = vld [vmem:[#allocation2 + $0x38] sm:$0xff]
    %v737 = vld [vmem:[#allocation2 + $0x40] sm:$0xff]
    %s738 = scalar_lea.vmem %s3, 320
    %v739 = vld [vmem:[%s738] sm:$0xff]
    %v740 = vld [vmem:[%s738 + $0x8] sm:$0xff]
    %v741 = vld [vmem:[%s738 + $0x10] sm:$0xff]
    %v742 = vld [vmem:[%s738 + $0x18] sm:$0xff]
    %v743 = vld [vmem:[%s738 + $0x20] sm:$0xff]
    %v744 = vld [vmem:[%s738 + $0x28] sm:$0xff]
    %v745 = vld [vmem:[%s738 + $0x30] sm:$0xff]
    %v746 = vld [vmem:[%s738 + $0x38] sm:$0xff]
    %v747 = vld [vmem:[%s738 + $0x40] sm:$0xff]
    %v748 = vld [vmem:[%s738 + $0x48] sm:$0xff]
    %v749 = vld [vmem:[%s738 + $0x50] sm:$0xff]
    %v750 = vld [vmem:[%s738 + $0x58] sm:$0xff]
    %v751 = vld [vmem:[%s738 + $0x60] sm:$0xff]
    %v752 = vld [vmem:[%s738 + $0x68] sm:$0xff]
    %v753 = vld [vmem:[%s738 + $0x70] sm:$0xff]
    %v754 = vld [vmem:[%s738 + $0x78] sm:$0xff]
    %v755 = vld [vmem:[%s738 + $0x80] sm:$0xff]
    %v756 = vld [vmem:[%s738 + $0x88] sm:$0xff]
    %v757 = vld [vmem:[%s738 + $0x90] sm:$0xff]
    %v758 = vld [vmem:[%s738 + $0x98] sm:$0xff]
    %v759 = vld [vmem:[%s738 + $0xa0] sm:$0xff]
    %v760 = vld [vmem:[%s738 + $0xa8] sm:$0xff]
    %v761 = vld [vmem:[%s738 + $0xb0] sm:$0xff]
    %v762 = vld [vmem:[%s738 + $0xb8] sm:$0xff]
    %v763 = vld [vmem:[%s738 + $0xc0] sm:$0xff]
    %v764 = vld [vmem:[%s738 + $0xc8] sm:$0xff]
    %v765 = vld [vmem:[%s738 + $0xd0] sm:$0xff]
    %v766 = vld [vmem:[%s738 + $0xd8] sm:$0xff]
    %v767 = vld [vmem:[%s738 + $0xe0] sm:$0xff]
    %v768 = vld [vmem:[%s738 + $0xe8] sm:$0xff]
    %v769 = vld [vmem:[%s738 + $0xf0] sm:$0xff]
    %v770 = vld [vmem:[%s738 + $0xf8] sm:$0xff]
    %v771 = vld [vmem:[%s738 + $0x100] sm:$0xff]
    %v772 = vld [vmem:[%s738 + $0x108] sm:$0xff]
    %v773 = vld [vmem:[%s738 + $0x110] sm:$0xff]
    %v774 = vld [vmem:[%s738 + $0x118] sm:$0xff]
    %v775 = vld [vmem:[%s738 + $0x120] sm:$0xff]
    %v776 = vld [vmem:[%s738 + $0x128] sm:$0xff]
    %v777 = vld [vmem:[%s738 + $0x130] sm:$0xff]
    %v778 = vld [vmem:[%s738 + $0x138] sm:$0xff]
    %s779 = scalar_lea.vmem %s4, 1
    %v780 = vld [vmem:[%s779] sm:$0x1]
    %v782 = vperm.slane %v780, 0
    %v785 = vsel %vm35, %v734, 0
    %v788 = vsel %vm35, %v737, 0
    %790 = vmatpush.msra.mxu0 %v754
    %791 = vmatpush.msra.mxu0 %v753
    %792 = vmatpush.msra.mxu0 %v752
    %793 = vmatpush.msra.mxu0 %v751
    %794 = vmatpush.msra.mxu0 %v750
    %795 = vmatpush.msra.mxu0 %v749
    %796 = vmatpush.msra.mxu0 %v748
    %797 = vmatpush.msra.mxu0 %v747
    %798 = vmatpush.msra.mxu0 %v746
    %799 = vmatpush.msra.mxu0 %v745
    %800 = vmatpush.msra.mxu0 %v744
    %801 = vmatpush.msra.mxu0 %v743
    %802 = vmatpush.msra.mxu0 %v742
    %803 = vmatpush.msra.mxu0 %v741
    %804 = vmatpush.msra.mxu0 %v740
    %805 = vmatpush.msra.mxu0 %v739
    %806 = vmatmul.f32.gmra.mxu0 %v732
    %v807 = vpop.f32.mrf.mxu0
    %v808 = vadd.f32 %v782, %v807
    %809 = vmatmul.f32.gmra.mxu0 %v735
    %v810 = vpop.f32.mrf.mxu0
    %v811 = vadd.f32 %v782, %v810
    %812 = vdwg.mxu0
    %813 = vmatpush.msra.mxu0 %v770
    %814 = vmatpush.msra.mxu0 %v769
    %815 = vmatpush.msra.mxu0 %v768
    %816 = vmatpush.msra.mxu0 %v767
    %817 = vmatpush.msra.mxu0 %v766
    %818 = vmatpush.msra.mxu0 %v765
    %819 = vmatpush.msra.mxu0 %v764
    %820 = vmatpush.msra.mxu0 %v763
    %821 = vmatpush.msra.mxu0 %v762
    %822 = vmatpush.msra.mxu0 %v761
    %823 = vmatpush.msra.mxu0 %v760
    %824 = vmatpush.msra.mxu0 %v759
    %825 = vmatpush.msra.mxu0 %v758
    %826 = vmatpush.msra.mxu0 %v757
    %827 = vmatpush.msra.mxu0 %v756
    %828 = vmatpush.msra.mxu0 %v755
    %829 = vmatmul.f32.gmra.mxu0 %v733
    %v830 = vpop.f32.mrf.mxu0
    %v831 = vadd.f32 %v808, %v830
    %832 = vmatmul.f32.gmra.mxu0 %v736
    %v833 = vpop.f32.mrf.mxu0
    %v834 = vadd.f32 %v811, %v833
    %835 = vdwg.mxu0
    %836 = vmatpush.msra.mxu0 0.0
    %837 = vmatpush.msra.mxu0 0.0
    %838 = vmatpush.msra.mxu0 0.0
    %839 = vmatpush.msra.mxu0 0.0
    %840 = vmatpush.msra.mxu0 0.0
    %841 = vmatpush.msra.mxu0 0.0
    %842 = vmatpush.msra.mxu0 0.0
    %843 = vmatpush.msra.mxu0 0.0
    %844 = vmatpush.msra.mxu0 %v778
    %845 = vmatpush.msra.mxu0 %v777
    %846 = vmatpush.msra.mxu0 %v776
    %847 = vmatpush.msra.mxu0 %v775
    %848 = vmatpush.msra.mxu0 %v774
    %849 = vmatpush.msra.mxu0 %v773
    %850 = vmatpush.msra.mxu0 %v772
    %851 = vmatpush.msra.mxu0 %v771
    %852 = vmatmul.f32.gmra.mxu0 %v785
    %v853 = vpop.f32.mrf.mxu0
    %v854 = vadd.f32 %v831, %v853
    %855 = vmatmul.f32.gmra.mxu0 %v788
    %v856 = vpop.f32.mrf.mxu0
    %v857 = vadd.f32 %v834, %v856
    %858 = vdwg.mxu0
    %v859 = vmax.f32 %v854, 0.0
    %v860 = vmax.f32 %v857, 0.0
    %861 = vst.msk [vmem:[#allocation2 + $0x20] sm:$0xff] %vm35, %v859
    %862 = vst.msk [vmem:[#allocation2 + $0x38] sm:$0xff] %vm35, %v860
    %v863 = vld [vmem:[#allocation2 + $0x8] sm:$0xc0]
    %v864 = vld [vmem:[#allocation2 + $0x20] sm:$0xff]
    %v865 = vld [vmem:[#allocation2 + $0x38] sm:$0x3f]
    %v866 = vmul.f32 %v863, %v201
    %v867 = vmul.f32 %v864, %v203
    %v868 = vmul.f32 %v865, %v202
    %v872 = vrot.slane %v866, 6
    %v873 = vrot.slane %v867, 6
    %v874 = vsel %vm213, %v872, %v873
    %v875 = vrot.slane %v868, 6
    %v876 = vsel %vm213, %v873, %v875
    %879 = vst.msk [vmem:[#allocation2 + $0x18] sm:$0xff] %vm35, %v874
    %880 = vst.msk [vmem:[#allocation2 + $0x30] sm:$0xff] %vm35, %v876
    %v881 = vld [vmem:[#allocation2 + $0x8] sm:$0x80]
    %v882 = vld [vmem:[#allocation2 + $0x20] sm:$0xff]
    %v883 = vld [vmem:[#allocation2 + $0x38] sm:$0x7f]
    %v884 = vmul.f32 %v881, %v229
    %v885 = vmul.f32 %v882, %v231
    %v886 = vmul.f32 %v883, %v230
    %v890 = vrot.slane %v884, 7
    %v891 = vrot.slane %v885, 7
    %v892 = vsel %vm241, %v890, %v891
    %v893 = vrot.slane %v886, 7
    %v894 = vsel %vm241, %v891, %v893
    %895 = vrot.lane.b32.xlu0 %v892, 64
    %v896 = vpop.permute.xlu0 %895
    %897 = vrot.lane.b32.xlu0 %v894, 64
    %v898 = vpop.permute.xlu0 %897
    %901 = vst.msk [vmem:[#allocation2 + $0x18] sm:$0xff] %vm253, %v896
    %902 = vst.msk [vmem:[#allocation2 + $0x30] sm:$0xff] %vm253, %v898
    %v903 = vld [vmem:[#allocation2 + $0x20] sm:$0xfe]
    %v904 = vld [vmem:[#allocation2 + $0x38] sm:$0xff]
    %v905 = vld [vmem:[#allocation2 + $0x50] sm:$0x1]
    %v906 = vmul.f32 %v903, %v261
    %v907 = vmul.f32 %v904, %v263
    %v908 = vmul.f32 %v905, %v262
    %v912 = vrot.slane %v906, 1
    %v913 = vrot.slane %v907, 1
    %v914 = vsel %vm228, %v912, %v913
    %v915 = vrot.slane %v908, 1
    %v916 = vsel %vm228, %v913, %v915
    %917 = vrot.lane.b32.xlu0 %v914, 64
    %v918 = vpop.permute.xlu0 %917
    %919 = vrot.lane.b32.xlu0 %v916, 64
    %v920 = vpop.permute.xlu0 %919
    %923 = vst.msk [vmem:[#allocation2 + $0x20] sm:$0xff] %vm253, %v918
    %924 = vst.msk [vmem:[#allocation2 + $0x38] sm:$0xff] %vm253, %v920
    %v925 = vld [vmem:[#allocation2 + $0x20] sm:$0xfc]
    %v926 = vld [vmem:[#allocation2 + $0x38] sm:$0xff]
    %v927 = vld [vmem:[#allocation2 + $0x50] sm:$0x3]
    %v928 = vmul.f32 %v925, %v291
    %v929 = vmul.f32 %v926, %v293
    %v930 = vmul.f32 %v927, %v292
    %v934 = vrot.slane %v928, 2
    %v935 = vrot.slane %v929, 2
    %v936 = vsel %vm200, %v934, %v935
    %v937 = vrot.slane %v930, 2
    %v938 = vsel %vm200, %v935, %v937
    %941 = vst.msk [vmem:[#allocation2 + $0x28] sm:$0xff] %vm35, %v936
    %942 = vst.msk [vmem:[#allocation2 + $0x40] sm:$0xff] %vm35, %v938
    %v943 = vld [vmem:[#allocation2 + $0x18] sm:$0xff]
    %v944 = vld [vmem:[#allocation2 + $0x20] sm:$0xff]
    %v945 = vld [vmem:[#allocation2 + $0x28] sm:$0xff]
    %v946 = vld [vmem:[#allocation2 + $0x30] sm:$0xff]
    %v947 = vld [vmem:[#allocation2 + $0x38] sm:$0xff]
    %v948 = vld [vmem:[#allocation2 + $0x40] sm:$0xff]
    %s949 = scalar_lea.vmem %s5, 320
    %v950 = vld [vmem:[%s949] sm:$0xff]
    %v951 = vld [vmem:[%s949 + $0x8] sm:$0xff]
    %v952 = vld [vmem:[%s949 + $0x10] sm:$0xff]
    %v953 = vld [vmem:[%s949 + $0x18] sm:$0xff]
    %v954 = vld [vmem:[%s949 + $0x20] sm:$0xff]
    %v955 = vld [vmem:[%s949 + $0x28] sm:$0xff]
    %v956 = vld [vmem:[%s949 + $0x30] sm:$0xff]
    %v957 = vld [vmem:[%s949 + $0x38] sm:$0xff]
    %v958 = vld [vmem:[%s949 + $0x40] sm:$0xff]
    %v959 = vld [vmem:[%s949 + $0x48] sm:$0xff]
    %v960 = vld [vmem:[%s949 + $0x50] sm:$0xff]
    %v961 = vld [vmem:[%s949 + $0x58] sm:$0xff]
    %v962 = vld [vmem:[%s949 + $0x60] sm:$0xff]
    %v963 = vld [vmem:[%s949 + $0x68] sm:$0xff]
    %v964 = vld [vmem:[%s949 + $0x70] sm:$0xff]
    %v965 = vld [vmem:[%s949 + $0x78] sm:$0xff]
    %v966 = vld [vmem:[%s949 + $0x80] sm:$0xff]
    %v967 = vld [vmem:[%s949 + $0x88] sm:$0xff]
    %v968 = vld [vmem:[%s949 + $0x90] sm:$0xff]
    %v969 = vld [vmem:[%s949 + $0x98] sm:$0xff]
    %v970 = vld [vmem:[%s949 + $0xa0] sm:$0xff]
    %v971 = vld [vmem:[%s949 + $0xa8] sm:$0xff]
    %v972 = vld [vmem:[%s949 + $0xb0] sm:$0xff]
    %v973 = vld [vmem:[%s949 + $0xb8] sm:$0xff]
    %v974 = vld [vmem:[%s949 + $0xc0] sm:$0xff]
    %v975 = vld [vmem:[%s949 + $0xc8] sm:$0xff]
    %v976 = vld [vmem:[%s949 + $0xd0] sm:$0xff]
    %v977 = vld [vmem:[%s949 + $0xd8] sm:$0xff]
    %v978 = vld [vmem:[%s949 + $0xe0] sm:$0xff]
    %v979 = vld [vmem:[%s949 + $0xe8] sm:$0xff]
    %v980 = vld [vmem:[%s949 + $0xf0] sm:$0xff]
    %v981 = vld [vmem:[%s949 + $0xf8] sm:$0xff]
    %v982 = vld [vmem:[%s949 + $0x100] sm:$0xff]
    %v983 = vld [vmem:[%s949 + $0x108] sm:$0xff]
    %v984 = vld [vmem:[%s949 + $0x110] sm:$0xff]
    %v985 = vld [vmem:[%s949 + $0x118] sm:$0xff]
    %v986 = vld [vmem:[%s949 + $0x120] sm:$0xff]
    %v987 = vld [vmem:[%s949 + $0x128] sm:$0xff]
    %v988 = vld [vmem:[%s949 + $0x130] sm:$0xff]
    %v989 = vld [vmem:[%s949 + $0x138] sm:$0xff]
    %s990 = scalar_lea.vmem %s6, 1
    %v991 = vld [vmem:[%s990] sm:$0x1]
    %v993 = vperm.slane %v991, 0
    %v996 = vsel %vm35, %v945, 0
    %v999 = vsel %vm35, %v948, 0
    %1001 = vmatpush.msra.mxu0 %v965
    %1002 = vmatpush.msra.mxu0 %v964
    %1003 = vmatpush.msra.mxu0 %v963
    %1004 = vmatpush.msra.mxu0 %v962
    %1005 = vmatpush.msra.mxu0 %v961
    %1006 = vmatpush.msra.mxu0 %v960
    %1007 = vmatpush.msra.mxu0 %v959
    %1008 = vmatpush.msra.mxu0 %v958
    %1009 = vmatpush.msra.mxu0 %v957
    %1010 = vmatpush.msra.mxu0 %v956
    %1011 = vmatpush.msra.mxu0 %v955
    %1012 = vmatpush.msra.mxu0 %v954
    %1013 = vmatpush.msra.mxu0 %v953
    %1014 = vmatpush.msra.mxu0 %v952
    %1015 = vmatpush.msra.mxu0 %v951
    %1016 = vmatpush.msra.mxu0 %v950
    %1017 = vmatmul.f32.gmra.mxu0 %v943
    %v1018 = vpop.f32.mrf.mxu0
    %v1019 = vadd.f32 %v993, %v1018
    %1020 = vmatmul.f32.gmra.mxu0 %v946
    %v1021 = vpop.f32.mrf.mxu0
    %v1022 = vadd.f32 %v993, %v1021
    %1023 = vdwg.mxu0
    %1024 = vmatpush.msra.mxu0 %v981
    %1025 = vmatpush.msra.mxu0 %v980
    %1026 = vmatpush.msra.mxu0 %v979
    %1027 = vmatpush.msra.mxu0 %v978
    %1028 = vmatpush.msra.mxu0 %v977
    %1029 = vmatpush.msra.mxu0 %v976
    %1030 = vmatpush.msra.mxu0 %v975
    %1031 = vmatpush.msra.mxu0 %v974
    %1032 = vmatpush.msra.mxu0 %v973
    %1033 = vmatpush.msra.mxu0 %v972
    %1034 = vmatpush.msra.mxu0 %v971
    %1035 = vmatpush.msra.mxu0 %v970
    %1036 = vmatpush.msra.mxu0 %v969
    %1037 = vmatpush.msra.mxu0 %v968
    %1038 = vmatpush.msra.mxu0 %v967
    %1039 = vmatpush.msra.mxu0 %v966
    %1040 = vmatmul.f32.gmra.mxu0 %v944
    %v1041 = vpop.f32.mrf.mxu0
    %v1042 = vadd.f32 %v1019, %v1041
    %1043 = vmatmul.f32.gmra.mxu0 %v947
    %v1044 = vpop.f32.mrf.mxu0
    %v1045 = vadd.f32 %v1022, %v1044
    %1046 = vdwg.mxu0
    %1047 = vmatpush.msra.mxu0 0.0
    %1048 = vmatpush.msra.mxu0 0.0
    %1049 = vmatpush.msra.mxu0 0.0
    %1050 = vmatpush.msra.mxu0 0.0
    %1051 = vmatpush.msra.mxu0 0.0
    %1052 = vmatpush.msra.mxu0 0.0
    %1053 = vmatpush.msra.mxu0 0.0
    %1054 = vmatpush.msra.mxu0 0.0
    %1055 = vmatpush.msra.mxu0 %v989
    %1056 = vmatpush.msra.mxu0 %v988
    %1057 = vmatpush.msra.mxu0 %v987
    %1058 = vmatpush.msra.mxu0 %v986
    %1059 = vmatpush.msra.mxu0 %v985
    %1060 = vmatpush.msra.mxu0 %v984
    %1061 = vmatpush.msra.mxu0 %v983
    %1062 = vmatpush.msra.mxu0 %v982
    %1063 = vmatmul.f32.gmra.mxu0 %v996
    %v1064 = vpop.f32.mrf.mxu0
    %v1065 = vadd.f32 %v1042, %v1064
    %1066 = vmatmul.f32.gmra.mxu0 %v999
    %v1067 = vpop.f32.mrf.mxu0
    %v1068 = vadd.f32 %v1045, %v1067
    %1069 = vdwg.mxu0
    %v1070 = vadd.f32 %v646, %v1065
    %v1071 = vadd.f32 %v647, %v1068
    %v1072 = vmax.f32 %v1070, 0.0
    %v1073 = vmax.f32 %v1071, 0.0
    %1074 = vst.msk [vmem:[#allocation2 + $0x20] sm:$0xff] %vm35, %v1072
    %1075 = vst.msk [vmem:[#allocation2 + $0x38] sm:$0xff] %vm35, %v1073
    %v1076 = vld [vmem:[#allocation2 + $0x8] sm:$0xc0]
    %v1077 = vld [vmem:[#allocation2 + $0x20] sm:$0xff]
    %v1078 = vld [vmem:[#allocation2 + $0x38] sm:$0x3f]
    %v1079 = vmul.f32 %v1076, %v201
    %v1080 = vmul.f32 %v1077, %v203
    %v1081 = vmul.f32 %v1078, %v202
    %v1085 = vrot.slane %v1079, 6
    %v1086 = vrot.slane %v1080, 6
    %v1087 = vsel %vm213, %v1085, %v1086
    %v1088 = vrot.slane %v1081, 6
    %v1089 = vsel %vm213, %v1086, %v1088
    %1092 = vst.msk [vmem:[#allocation2 + $0x18] sm:$0xff] %vm35, %v1087
    %1093 = vst.msk [vmem:[#allocation2 + $0x30] sm:$0xff] %vm35, %v1089
    %v1094 = vld [vmem:[#allocation2 + $0x8] sm:$0x80]
    %v1095 = vld [vmem:[#allocation2 + $0x20] sm:$0xff]
    %v1096 = vld [vmem:[#allocation2 + $0x38] sm:$0x7f]
    %v1097 = vmul.f32 %v1094, %v229
    %v1098 = vmul.f32 %v1095, %v231
    %v1099 = vmul.f32 %v1096, %v230
    %v1103 = vrot.slane %v1097, 7
    %v1104 = vrot.slane %v1098, 7
    %v1105 = vsel %vm241, %v1103, %v1104
    %v1106 = vrot.slane %v1099, 7
    %v1107 = vsel %vm241, %v1104, %v1106
    %1108 = vrot.lane.b32.xlu0 %v1105, 64
    %v1109 = vpop.permute.xlu0 %1108
    %1110 = vrot.lane.b32.xlu0 %v1107, 64
    %v1111 = vpop.permute.xlu0 %1110
    %1114 = vst.msk [vmem:[#allocation2 + $0x18] sm:$0xff] %vm253, %v1109
    %1115 = vst.msk [vmem:[#allocation2 + $0x30] sm:$0xff] %vm253, %v1111
    %v1116 = vld [vmem:[#allocation2 + $0x20] sm:$0xfe]
    %v1117 = vld [vmem:[#allocation2 + $0x38] sm:$0xff]
    %v1118 = vld [vmem:[#allocation2 + $0x50] sm:$0x1]
    %v1119 = vmul.f32 %v1116, %v261
    %v1120 = vmul.f32 %v1117, %v263
    %v1121 = vmul.f32 %v1118, %v262
    %v1125 = vrot.slane %v1119, 1
    %v1126 = vrot.slane %v1120, 1
    %v1127 = vsel %vm228, %v1125, %v1126
    %v1128 = vrot.slane %v1121, 1
    %v1129 = vsel %vm228, %v1126, %v1128
    %1130 = vrot.lane.b32.xlu0 %v1127, 64
    %v1131 = vpop.permute.xlu0 %1130
    %1132 = vrot.lane.b32.xlu0 %v1129, 64
    %v1133 = vpop.permute.xlu0 %1132
    %1136 = vst.msk [vmem:[#allocation2 + $0x20] sm:$0xff] %vm253, %v1131
    %1137 = vst.msk [vmem:[#allocation2 + $0x38] sm:$0xff] %vm253, %v1133
    %v1138 = vld [vmem:[#allocation2 + $0x20] sm:$0xfc]
    %v1139 = vld [vmem:[#allocation2 + $0x38] sm:$0xff]
    %v1140 = vld [vmem:[#allocation2 + $0x50] sm:$0x3]
    %v1141 = vmul.f32 %v1138, %v291
    %v1142 = vmul.f32 %v1139, %v293
    %v1143 = vmul.f32 %v1140, %v292
    %v1147 = vrot.slane %v1141, 2
    %v1148 = vrot.slane %v1142, 2
    %v1149 = vsel %vm200, %v1147, %v1148
    %v1150 = vrot.slane %v1143, 2
    %v1151 = vsel %vm200, %v1148, %v1150
    %1154 = vst.msk [vmem:[#allocation2 + $0x28] sm:$0xff] %vm35, %v1149
    %1155 = vst.msk [vmem:[#allocation2 + $0x40] sm:$0xff] %vm35, %v1151
    %v1156 = vld [vmem:[#allocation2 + $0x18] sm:$0xff]
    %v1157 = vld [vmem:[#allocation2 + $0x20] sm:$0xff]
    %v1158 = vld [vmem:[#allocation2 + $0x28] sm:$0xff]
    %v1159 = vld [vmem:[#allocation2 + $0x30] sm:$0xff]
    %v1160 = vld [vmem:[#allocation2 + $0x38] sm:$0xff]
    %v1161 = vld [vmem:[#allocation2 + $0x40] sm:$0xff]
    %s1162 = scalar_lea.vmem %s3, 640
    %v1163 = vld [vmem:[%s1162] sm:$0xff]
    %v1164 = vld [vmem:[%s1162 + $0x8] sm:$0xff]
    %v1165 = vld [vmem:[%s1162 + $0x10] sm:$0xff]
    %v1166 = vld [vmem:[%s1162 + $0x18] sm:$0xff]
    %v1167 = vld [vmem:[%s1162 + $0x20] sm:$0xff]
    %v1168 = vld [vmem:[%s1162 + $0x28] sm:$0xff]
    %v1169 = vld [vmem:[%s1162 + $0x30] sm:$0xff]
    %v1170 = vld [vmem:[%s1162 + $0x38] sm:$0xff]
    %v1171 = vld [vmem:[%s1162 + $0x40] sm:$0xff]
    %v1172 = vld [vmem:[%s1162 + $0x48] sm:$0xff]
    %v1173 = vld [vmem:[%s1162 + $0x50] sm:$0xff]
    %v1174 = vld [vmem:[%s1162 + $0x58] sm:$0xff]
    %v1175 = vld [vmem:[%s1162 + $0x60] sm:$0xff]
    %v1176 = vld [vmem:[%s1162 + $0x68] sm:$0xff]
    %v1177 = vld [vmem:[%s1162 + $0x70] sm:$0xff]
    %v1178 = vld [vmem:[%s1162 + $0x78] sm:$0xff]
    %v1179 = vld [vmem:[%s1162 + $0x80] sm:$0xff]
    %v1180 = vld [vmem:[%s1162 + $0x88] sm:$0xff]
    %v1181 = vld [vmem:[%s1162 + $0x90] sm:$0xff]
    %v1182 = vld [vmem:[%s1162 + $0x98] sm:$0xff]
    %v1183 = vld [vmem:[%s1162 + $0xa0] sm:$0xff]
    %v1184 = vld [vmem:[%s1162 + $0xa8] sm:$0xff]
    %v1185 = vld [vmem:[%s1162 + $0xb0] sm:$0xff]
    %v1186 = vld [vmem:[%s1162 + $0xb8] sm:$0xff]
    %v1187 = vld [vmem:[%s1162 + $0xc0] sm:$0xff]
    %v1188 = vld [vmem:[%s1162 + $0xc8] sm:$0xff]
    %v1189 = vld [vmem:[%s1162 + $0xd0] sm:$0xff]
    %v1190 = vld [vmem:[%s1162 + $0xd8] sm:$0xff]
    %v1191 = vld [vmem:[%s1162 + $0xe0] sm:$0xff]
    %v1192 = vld [vmem:[%s1162 + $0xe8] sm:$0xff]
    %v1193 = vld [vmem:[%s1162 + $0xf0] sm:$0xff]
    %v1194 = vld [vmem:[%s1162 + $0xf8] sm:$0xff]
    %v1195 = vld [vmem:[%s1162 + $0x100] sm:$0xff]
    %v1196 = vld [vmem:[%s1162 + $0x108] sm:$0xff]
    %v1197 = vld [vmem:[%s1162 + $0x110] sm:$0xff]
    %v1198 = vld [vmem:[%s1162 + $0x118] sm:$0xff]
    %v1199 = vld [vmem:[%s1162 + $0x120] sm:$0xff]
    %v1200 = vld [vmem:[%s1162 + $0x128] sm:$0xff]
    %v1201 = vld [vmem:[%s1162 + $0x130] sm:$0xff]
    %v1202 = vld [vmem:[%s1162 + $0x138] sm:$0xff]
    %s1203 = scalar_lea.vmem %s4, 2
    %v1204 = vld [vmem:[%s1203] sm:$0x1]
    %v1206 = vperm.slane %v1204, 0
    %v1209 = vsel %vm35, %v1158, 0
    %v1212 = vsel %vm35, %v1161, 0
    %1214 = vmatpush.msra.mxu0 %v1178
    %1215 = vmatpush.msra.mxu0 %v1177
    %1216 = vmatpush.msra.mxu0 %v1176
    %1217 = vmatpush.msra.mxu0 %v1175
    %1218 = vmatpush.msra.mxu0 %v1174
    %1219 = vmatpush.msra.mxu0 %v1173
    %1220 = vmatpush.msra.mxu0 %v1172
    %1221 = vmatpush.msra.mxu0 %v1171
    %1222 = vmatpush.msra.mxu0 %v1170
    %1223 = vmatpush.msra.mxu0 %v1169
    %1224 = vmatpush.msra.mxu0 %v1168
    %1225 = vmatpush.msra.mxu0 %v1167
    %1226 = vmatpush.msra.mxu0 %v1166
    %1227 = vmatpush.msra.mxu0 %v1165
    %1228 = vmatpush.msra.mxu0 %v1164
    %1229 = vmatpush.msra.mxu0 %v1163
    %1230 = vmatmul.f32.gmra.mxu0 %v1156
    %v1231 = vpop.f32.mrf.mxu0
    %v1232 = vadd.f32 %v1206, %v1231
    %1233 = vmatmul.f32.gmra.mxu0 %v1159
    %v1234 = vpop.f32.mrf.mxu0
    %v1235 = vadd.f32 %v1206, %v1234
    %1236 = vdwg.mxu0
    %1237 = vmatpush.msra.mxu0 %v1194
    %1238 = vmatpush.msra.mxu0 %v1193
    %1239 = vmatpush.msra.mxu0 %v1192
    %1240 = vmatpush.msra.mxu0 %v1191
    %1241 = vmatpush.msra.mxu0 %v1190
    %1242 = vmatpush.msra.mxu0 %v1189
    %1243 = vmatpush.msra.mxu0 %v1188
    %1244 = vmatpush.msra.mxu0 %v1187
    %1245 = vmatpush.msra.mxu0 %v1186
    %1246 = vmatpush.msra.mxu0 %v1185
    %1247 = vmatpush.msra.mxu0 %v1184
    %1248 = vmatpush.msra.mxu0 %v1183
    %1249 = vmatpush.msra.mxu0 %v1182
    %1250 = vmatpush.msra.mxu0 %v1181
    %1251 = vmatpush.msra.mxu0 %v1180
    %1252 = vmatpush.msra.mxu0 %v1179
    %1253 = vmatmul.f32.gmra.mxu0 %v1157
    %v1254 = vpop.f32.mrf.mxu0
    %v1255 = vadd.f32 %v1232, %v1254
    %1256 = vmatmul.f32.gmra.mxu0 %v1160
    %v1257 = vpop.f32.mrf.mxu0
    %v1258 = vadd.f32 %v1235, %v1257
    %1259 = vdwg.mxu0
    %1260 = vmatpush.msra.mxu0 0.0
    %1261 = vmatpush.msra.mxu0 0.0
    %1262 = vmatpush.msra.mxu0 0.0
    %1263 = vmatpush.msra.mxu0 0.0
    %1264 = vmatpush.msra.mxu0 0.0
    %1265 = vmatpush.msra.mxu0 0.0
    %1266 = vmatpush.msra.mxu0 0.0
    %1267 = vmatpush.msra.mxu0 0.0
    %1268 = vmatpush.msra.mxu0 %v1202
    %1269 = vmatpush.msra.mxu0 %v1201
    %1270 = vmatpush.msra.mxu0 %v1200
    %1271 = vmatpush.msra.mxu0 %v1199
    %1272 = vmatpush.msra.mxu0 %v1198
    %1273 = vmatpush.msra.mxu0 %v1197
    %1274 = vmatpush.msra.mxu0 %v1196
    %1275 = vmatpush.msra.mxu0 %v1195
    %1276 = vmatmul.f32.gmra.mxu0 %v1209
    %v1277 = vpop.f32.mrf.mxu0
    %v1278 = vadd.f32 %v1255, %v1277
    %1279 = vmatmul.f32.gmra.mxu0 %v1212
    %v1280 = vpop.f32.mrf.mxu0
    %v1281 = vadd.f32 %v1258, %v1280
    %1282 = vdwg.mxu0
    %v1283 = vmax.f32 %v1278, 0.0
    %v1284 = vmax.f32 %v1281, 0.0
    %1285 = vst.msk [vmem:[#allocation2 + $0x20] sm:$0xff] %vm35, %v1283
    %1286 = vst.msk [vmem:[#allocation2 + $0x38] sm:$0xff] %vm35, %v1284
    %v1287 = vld [vmem:[#allocation2 + $0x8] sm:$0xc0]
    %v1288 = vld [vmem:[#allocation2 + $0x20] sm:$0xff]
    %v1289 = vld [vmem:[#allocation2 + $0x38] sm:$0x3f]
    %v1290 = vmul.f32 %v1287, %v201
    %v1291 = vmul.f32 %v1288, %v203
    %v1292 = vmul.f32 %v1289, %v202
    %v1296 = vrot.slane %v1290, 6
    %v1297 = vrot.slane %v1291, 6
    %v1298 = vsel %vm213, %v1296, %v1297
    %v1299 = vrot.slane %v1292, 6
    %v1300 = vsel %vm213, %v1297, %v1299
    %1303 = vst.msk [vmem:[#allocation2 + $0x18] sm:$0xff] %vm35, %v1298
    %1304 = vst.msk [vmem:[#allocation2 + $0x30] sm:$0xff] %vm35, %v1300
    %v1305 = vld [vmem:[#allocation2 + $0x8] sm:$0x80]
    %v1306 = vld [vmem:[#allocation2 + $0x20] sm:$0xff]
    %v1307 = vld [vmem:[#allocation2 + $0x38] sm:$0x7f]
    %v1308 = vmul.f32 %v1305, %v229
    %v1309 = vmul.f32 %v1306, %v231
    %v1310 = vmul.f32 %v1307, %v230
    %v1314 = vrot.slane %v1308, 7
    %v1315 = vrot.slane %v1309, 7
    %v1316 = vsel %vm241, %v1314, %v1315
    %v1317 = vrot.slane %v1310, 7
    %v1318 = vsel %vm241, %v1315, %v1317
    %1319 = vrot.lane.b32.xlu0 %v1316, 64
    %v1320 = vpop.permute.xlu0 %1319
    %1321 = vrot.lane.b32.xlu0 %v1318, 64
    %v1322 = vpop.permute.xlu0 %1321
    %1325 = vst.msk [vmem:[#allocation2 + $0x18] sm:$0xff] %vm253, %v1320
    %1326 = vst.msk [vmem:[#allocation2 + $0x30] sm:$0xff] %vm253, %v1322
    %v1327 = vld [vmem:[#allocation2 + $0x20] sm:$0xfe]
    %v1328 = vld [vmem:[#allocation2 + $0x38] sm:$0xff]
    %v1329 = vld [vmem:[#allocation2 + $0x50] sm:$0x1]
    %v1330 = vmul.f32 %v1327, %v261
    %v1331 = vmul.f32 %v1328, %v263
    %v1332 = vmul.f32 %v1329, %v262
    %v1336 = vrot.slane %v1330, 1
    %v1337 = vrot.slane %v1331, 1
    %v1338 = vsel %vm228, %v1336, %v1337
    %v1339 = vrot.slane %v1332, 1
    %v1340 = vsel %vm228, %v1337, %v1339
    %1341 = vrot.lane.b32.xlu0 %v1338, 64
    %v1342 = vpop.permute.xlu0 %1341
    %1343 = vrot.lane.b32.xlu0 %v1340, 64
    %v1344 = vpop.permute.xlu0 %1343
    %1347 = vst.msk [vmem:[#allocation2 + $0x20] sm:$0xff] %vm253, %v1342
    %1348 = vst.msk [vmem:[#allocation2 + $0x38] sm:$0xff] %vm253, %v1344
    %v1349 = vld [vmem:[#allocation2 + $0x20] sm:$0xfc]
    %v1350 = vld [vmem:[#allocation2 + $0x38] sm:$0xff]
    %v1351 = vld [vmem:[#allocation2 + $0x50] sm:$0x3]
    %v1352 = vmul.f32 %v1349, %v291
    %v1353 = vmul.f32 %v1350, %v293
    %v1354 = vmul.f32 %v1351, %v292
    %v1358 = vrot.slane %v1352, 2
    %v1359 = vrot.slane %v1353, 2
    %v1360 = vsel %vm200, %v1358, %v1359
    %v1361 = vrot.slane %v1354, 2
    %v1362 = vsel %vm200, %v1359, %v1361
    %1365 = vst.msk [vmem:[#allocation2 + $0x28] sm:$0xff] %vm35, %v1360
    %1366 = vst.msk [vmem:[#allocation2 + $0x40] sm:$0xff] %vm35, %v1362
    %v1367 = vld [vmem:[#allocation2 + $0x18] sm:$0xff]
    %v1368 = vld [vmem:[#allocation2 + $0x20] sm:$0xff]
    %v1369 = vld [vmem:[#allocation2 + $0x28] sm:$0xff]
    %v1370 = vld [vmem:[#allocation2 + $0x30] sm:$0xff]
    %v1371 = vld [vmem:[#allocation2 + $0x38] sm:$0xff]
    %v1372 = vld [vmem:[#allocation2 + $0x40] sm:$0xff]
    %s1373 = scalar_lea.vmem %s5, 640
    %v1374 = vld [vmem:[%s1373] sm:$0xff]
    %v1375 = vld [vmem:[%s1373 + $0x8] sm:$0xff]
    %v1376 = vld [vmem:[%s1373 + $0x10] sm:$0xff]
    %v1377 = vld [vmem:[%s1373 + $0x18] sm:$0xff]
    %v1378 = vld [vmem:[%s1373 + $0x20] sm:$0xff]
    %v1379 = vld [vmem:[%s1373 + $0x28] sm:$0xff]
    %v1380 = vld [vmem:[%s1373 + $0x30] sm:$0xff]
    %v1381 = vld [vmem:[%s1373 + $0x38] sm:$0xff]
    %v1382 = vld [vmem:[%s1373 + $0x40] sm:$0xff]
    %v1383 = vld [vmem:[%s1373 + $0x48] sm:$0xff]
    %v1384 = vld [vmem:[%s1373 + $0x50] sm:$0xff]
    %v1385 = vld [vmem:[%s1373 + $0x58] sm:$0xff]
    %v1386 = vld [vmem:[%s1373 + $0x60] sm:$0xff]
    %v1387 = vld [vmem:[%s1373 + $0x68] sm:$0xff]
    %v1388 = vld [vmem:[%s1373 + $0x70] sm:$0xff]
    %v1389 = vld [vmem:[%s1373 + $0x78] sm:$0xff]
    %v1390 = vld [vmem:[%s1373 + $0x80] sm:$0xff]
    %v1391 = vld [vmem:[%s1373 + $0x88] sm:$0xff]
    %v1392 = vld [vmem:[%s1373 + $0x90] sm:$0xff]
    %v1393 = vld [vmem:[%s1373 + $0x98] sm:$0xff]
    %v1394 = vld [vmem:[%s1373 + $0xa0] sm:$0xff]
    %v1395 = vld [vmem:[%s1373 + $0xa8] sm:$0xff]
    %v1396 = vld [vmem:[%s1373 + $0xb0] sm:$0xff]
    %v1397 = vld [vmem:[%s1373 + $0xb8] sm:$0xff]
    %v1398 = vld [vmem:[%s1373 + $0xc0] sm:$0xff]
    %v1399 = vld [vmem:[%s1373 + $0xc8] sm:$0xff]
    %v1400 = vld [vmem:[%s1373 + $0xd0] sm:$0xff]
    %v1401 = vld [vmem:[%s1373 + $0xd8] sm:$0xff]
    %v1402 = vld [vmem:[%s1373 + $0xe0] sm:$0xff]
    %v1403 = vld [vmem:[%s1373 + $0xe8] sm:$0xff]
    %v1404 = vld [vmem:[%s1373 + $0xf0] sm:$0xff]
    %v1405 = vld [vmem:[%s1373 + $0xf8] sm:$0xff]
    %v1406 = vld [vmem:[%s1373 + $0x100] sm:$0xff]
    %v1407 = vld [vmem:[%s1373 + $0x108] sm:$0xff]
    %v1408 = vld [vmem:[%s1373 + $0x110] sm:$0xff]
    %v1409 = vld [vmem:[%s1373 + $0x118] sm:$0xff]
    %v1410 = vld [vmem:[%s1373 + $0x120] sm:$0xff]
    %v1411 = vld [vmem:[%s1373 + $0x128] sm:$0xff]
    %v1412 = vld [vmem:[%s1373 + $0x130] sm:$0xff]
    %v1413 = vld [vmem:[%s1373 + $0x138] sm:$0xff]
    %s1414 = scalar_lea.vmem %s6, 2
    %v1415 = vld [vmem:[%s1414] sm:$0x1]
    %v1417 = vperm.slane %v1415, 0
    %v1420 = vsel %vm35, %v1369, 0
    %v1423 = vsel %vm35, %v1372, 0
    %1425 = vmatpush.msra.mxu0 %v1389
    %1426 = vmatpush.msra.mxu0 %v1388
    %1427 = vmatpush.msra.mxu0 %v1387
    %1428 = vmatpush.msra.mxu0 %v1386
    %1429 = vmatpush.msra.mxu0 %v1385
    %1430 = vmatpush.msra.mxu0 %v1384
    %1431 = vmatpush.msra.mxu0 %v1383
    %1432 = vmatpush.msra.mxu0 %v1382
    %1433 = vmatpush.msra.mxu0 %v1381
    %1434 = vmatpush.msra.mxu0 %v1380
    %1435 = vmatpush.msra.mxu0 %v1379
    %1436 = vmatpush.msra.mxu0 %v1378
    %1437 = vmatpush.msra.mxu0 %v1377
    %1438 = vmatpush.msra.mxu0 %v1376
    %1439 = vmatpush.msra.mxu0 %v1375
    %1440 = vmatpush.msra.mxu0 %v1374
    %1441 = vmatmul.f32.gmra.mxu0 %v1367
    %v1442 = vpop.f32.mrf.mxu0
    %v1443 = vadd.f32 %v1417, %v1442
    %1444 = vmatmul.f32.gmra.mxu0 %v1370
    %v1445 = vpop.f32.mrf.mxu0
    %v1446 = vadd.f32 %v1417, %v1445
    %1447 = vdwg.mxu0
    %1448 = vmatpush.msra.mxu0 %v1405
    %1449 = vmatpush.msra.mxu0 %v1404
    %1450 = vmatpush.msra.mxu0 %v1403
    %1451 = vmatpush.msra.mxu0 %v1402
    %1452 = vmatpush.msra.mxu0 %v1401
    %1453 = vmatpush.msra.mxu0 %v1400
    %1454 = vmatpush.msra.mxu0 %v1399
    %1455 = vmatpush.msra.mxu0 %v1398
    %1456 = vmatpush.msra.mxu0 %v1397
    %1457 = vmatpush.msra.mxu0 %v1396
    %1458 = vmatpush.msra.mxu0 %v1395
    %1459 = vmatpush.msra.mxu0 %v1394
    %1460 = vmatpush.msra.mxu0 %v1393
    %1461 = vmatpush.msra.mxu0 %v1392
    %1462 = vmatpush.msra.mxu0 %v1391
    %1463 = vmatpush.msra.mxu0 %v1390
    %1464 = vmatmul.f32.gmra.mxu0 %v1368
    %v1465 = vpop.f32.mrf.mxu0
    %v1466 = vadd.f32 %v1443, %v1465
    %1467 = vmatmul.f32.gmra.mxu0 %v1371
    %v1468 = vpop.f32.mrf.mxu0
    %v1469 = vadd.f32 %v1446, %v1468
    %1470 = vdwg.mxu0
    %1471 = vmatpush.msra.mxu0 0.0
    %1472 = vmatpush.msra.mxu0 0.0
    %1473 = vmatpush.msra.mxu0 0.0
    %1474 = vmatpush.msra.mxu0 0.0
    %1475 = vmatpush.msra.mxu0 0.0
    %1476 = vmatpush.msra.mxu0 0.0
    %1477 = vmatpush.msra.mxu0 0.0
    %1478 = vmatpush.msra.mxu0 0.0
    %1479 = vmatpush.msra.mxu0 %v1413
    %1480 = vmatpush.msra.mxu0 %v1412
    %1481 = vmatpush.msra.mxu0 %v1411
    %1482 = vmatpush.msra.mxu0 %v1410
    %1483 = vmatpush.msra.mxu0 %v1409
    %1484 = vmatpush.msra.mxu0 %v1408
    %1485 = vmatpush.msra.mxu0 %v1407
    %1486 = vmatpush.msra.mxu0 %v1406
    %1487 = vmatmul.f32.gmra.mxu0 %v1420
    %v1488 = vpop.f32.mrf.mxu0
    %v1489 = vadd.f32 %v1466, %v1488
    %1490 = vmatmul.f32.gmra.mxu0 %v1423
    %v1491 = vpop.f32.mrf.mxu0
    %v1492 = vadd.f32 %v1469, %v1491
    %1493 = vdwg.mxu0
    %v1494 = vadd.f32 %v1070, %v1489
    %v1495 = vadd.f32 %v1071, %v1492
    %v1496 = vmax.f32 %v1494, 0.0
    %v1497 = vmax.f32 %v1495, 0.0
    %1498 = vst.msk [vmem:[#allocation2 + $0x20] sm:$0xff] %vm35, %v1496
    %1499 = vst.msk [vmem:[#allocation2 + $0x38] sm:$0xff] %vm35, %v1497
    %v1500 = vld [vmem:[#allocation2 + $0x8] sm:$0xc0]
    %v1501 = vld [vmem:[#allocation2 + $0x20] sm:$0xff]
    %v1502 = vld [vmem:[#allocation2 + $0x38] sm:$0x3f]
    %v1503 = vmul.f32 %v1500, %v201
    %v1504 = vmul.f32 %v1501, %v203
    %v1505 = vmul.f32 %v1502, %v202
    %v1509 = vrot.slane %v1503, 6
    %v1510 = vrot.slane %v1504, 6
    %v1511 = vsel %vm213, %v1509, %v1510
    %v1512 = vrot.slane %v1505, 6
    %v1513 = vsel %vm213, %v1510, %v1512
    %1516 = vst.msk [vmem:[#allocation2 + $0x18] sm:$0xff] %vm35, %v1511
    %1517 = vst.msk [vmem:[#allocation2 + $0x30] sm:$0xff] %vm35, %v1513
    %v1518 = vld [vmem:[#allocation2 + $0x8] sm:$0x80]
    %v1519 = vld [vmem:[#allocation2 + $0x20] sm:$0xff]
    %v1520 = vld [vmem:[#allocation2 + $0x38] sm:$0x7f]
    %v1521 = vmul.f32 %v1518, %v229
    %v1522 = vmul.f32 %v1519, %v231
    %v1523 = vmul.f32 %v1520, %v230
    %v1527 = vrot.slane %v1521, 7
    %v1528 = vrot.slane %v1522, 7
    %v1529 = vsel %vm241, %v1527, %v1528
    %v1530 = vrot.slane %v1523, 7
    %v1531 = vsel %vm241, %v1528, %v1530
    %1532 = vrot.lane.b32.xlu0 %v1529, 64
    %v1533 = vpop.permute.xlu0 %1532
    %1534 = vrot.lane.b32.xlu0 %v1531, 64
    %v1535 = vpop.permute.xlu0 %1534
    %1538 = vst.msk [vmem:[#allocation2 + $0x18] sm:$0xff] %vm253, %v1533
    %1539 = vst.msk [vmem:[#allocation2 + $0x30] sm:$0xff] %vm253, %v1535
    %v1540 = vld [vmem:[#allocation2 + $0x20] sm:$0xfe]
    %v1541 = vld [vmem:[#allocation2 + $0x38] sm:$0xff]
    %v1542 = vld [vmem:[#allocation2 + $0x50] sm:$0x1]
    %v1543 = vmul.f32 %v1540, %v261
    %v1544 = vmul.f32 %v1541, %v263
    %v1545 = vmul.f32 %v1542, %v262
    %v1549 = vrot.slane %v1543, 1
    %v1550 = vrot.slane %v1544, 1
    %v1551 = vsel %vm228, %v1549, %v1550
    %v1552 = vrot.slane %v1545, 1
    %v1553 = vsel %vm228, %v1550, %v1552
    %1554 = vrot.lane.b32.xlu0 %v1551, 64
    %v1555 = vpop.permute.xlu0 %1554
    %1556 = vrot.lane.b32.xlu0 %v1553, 64
    %v1557 = vpop.permute.xlu0 %1556
    %1560 = vst.msk [vmem:[#allocation2 + $0x20] sm:$0xff] %vm253, %v1555
    %1561 = vst.msk [vmem:[#allocation2 + $0x38] sm:$0xff] %vm253, %v1557
    %v1562 = vld [vmem:[#allocation2 + $0x20] sm:$0xfc]
    %v1563 = vld [vmem:[#allocation2 + $0x38] sm:$0xff]
    %v1564 = vld [vmem:[#allocation2 + $0x50] sm:$0x3]
    %v1565 = vmul.f32 %v1562, %v291
    %v1566 = vmul.f32 %v1563, %v293
    %v1567 = vmul.f32 %v1564, %v292
    %v1571 = vrot.slane %v1565, 2
    %v1572 = vrot.slane %v1566, 2
    %v1573 = vsel %vm200, %v1571, %v1572
    %v1574 = vrot.slane %v1567, 2
    %v1575 = vsel %vm200, %v1572, %v1574
    %1578 = vst.msk [vmem:[#allocation2 + $0x28] sm:$0xff] %vm35, %v1573
    %1579 = vst.msk [vmem:[#allocation2 + $0x40] sm:$0xff] %vm35, %v1575
    %v1580 = vld [vmem:[#allocation2 + $0x18] sm:$0xff]
    %v1581 = vld [vmem:[#allocation2 + $0x20] sm:$0xff]
    %v1582 = vld [vmem:[#allocation2 + $0x28] sm:$0xff]
    %v1583 = vld [vmem:[#allocation2 + $0x30] sm:$0xff]
    %v1584 = vld [vmem:[#allocation2 + $0x38] sm:$0xff]
    %v1585 = vld [vmem:[#allocation2 + $0x40] sm:$0xff]
    %s1586 = scalar_lea.vmem %s3, 960
    %v1587 = vld [vmem:[%s1586] sm:$0xff]
    %v1588 = vld [vmem:[%s1586 + $0x8] sm:$0xff]
    %v1589 = vld [vmem:[%s1586 + $0x10] sm:$0xff]
    %v1590 = vld [vmem:[%s1586 + $0x18] sm:$0xff]
    %v1591 = vld [vmem:[%s1586 + $0x20] sm:$0xff]
    %v1592 = vld [vmem:[%s1586 + $0x28] sm:$0xff]
    %v1593 = vld [vmem:[%s1586 + $0x30] sm:$0xff]
    %v1594 = vld [vmem:[%s1586 + $0x38] sm:$0xff]
    %v1595 = vld [vmem:[%s1586 + $0x40] sm:$0xff]
    %v1596 = vld [vmem:[%s1586 + $0x48] sm:$0xff]
    %v1597 = vld [vmem:[%s1586 + $0x50] sm:$0xff]
    %v1598 = vld [vmem:[%s1586 + $0x58] sm:$0xff]
    %v1599 = vld [vmem:[%s1586 + $0x60] sm:$0xff]
    %v1600 = vld [vmem:[%s1586 + $0x68] sm:$0xff]
    %v1601 = vld [vmem:[%s1586 + $0x70] sm:$0xff]
    %v1602 = vld [vmem:[%s1586 + $0x78] sm:$0xff]
    %v1603 = vld [vmem:[%s1586 + $0x80] sm:$0xff]
    %v1604 = vld [vmem:[%s1586 + $0x88] sm:$0xff]
    %v1605 = vld [vmem:[%s1586 + $0x90] sm:$0xff]
    %v1606 = vld [vmem:[%s1586 + $0x98] sm:$0xff]
    %v1607 = vld [vmem:[%s1586 + $0xa0] sm:$0xff]
    %v1608 = vld [vmem:[%s1586 + $0xa8] sm:$0xff]
    %v1609 = vld [vmem:[%s1586 + $0xb0] sm:$0xff]
    %v1610 = vld [vmem:[%s1586 + $0xb8] sm:$0xff]
    %v1611 = vld [vmem:[%s1586 + $0xc0] sm:$0xff]
    %v1612 = vld [vmem:[%s1586 + $0xc8] sm:$0xff]
    %v1613 = vld [vmem:[%s1586 + $0xd0] sm:$0xff]
    %v1614 = vld [vmem:[%s1586 + $0xd8] sm:$0xff]
    %v1615 = vld [vmem:[%s1586 + $0xe0] sm:$0xff]
    %v1616 = vld [vmem:[%s1586 + $0xe8] sm:$0xff]
    %v1617 = vld [vmem:[%s1586 + $0xf0] sm:$0xff]
    %v1618 = vld [vmem:[%s1586 + $0xf8] sm:$0xff]
    %v1619 = vld [vmem:[%s1586 + $0x100] sm:$0xff]
    %v1620 = vld [vmem:[%s1586 + $0x108] sm:$0xff]
    %v1621 = vld [vmem:[%s1586 + $0x110] sm:$0xff]
    %v1622 = vld [vmem:[%s1586 + $0x118] sm:$0xff]
    %v1623 = vld [vmem:[%s1586 + $0x120] sm:$0xff]
    %v1624 = vld [vmem:[%s1586 + $0x128] sm:$0xff]
    %v1625 = vld [vmem:[%s1586 + $0x130] sm:$0xff]
    %v1626 = vld [vmem:[%s1586 + $0x138] sm:$0xff]
    %s1627 = scalar_lea.vmem %s4, 3
    %v1628 = vld [vmem:[%s1627] sm:$0x1]
    %v1630 = vperm.slane %v1628, 0
    %v1633 = vsel %vm35, %v1582, 0
    %v1636 = vsel %vm35, %v1585, 0
    %1638 = vmatpush.msra.mxu0 %v1602
    %1639 = vmatpush.msra.mxu0 %v1601
    %1640 = vmatpush.msra.mxu0 %v1600
    %1641 = vmatpush.msra.mxu0 %v1599
    %1642 = vmatpush.msra.mxu0 %v1598
    %1643 = vmatpush.msra.mxu0 %v1597
    %1644 = vmatpush.msra.mxu0 %v1596
    %1645 = vmatpush.msra.mxu0 %v1595
    %1646 = vmatpush.msra.mxu0 %v1594
    %1647 = vmatpush.msra.mxu0 %v1593
    %1648 = vmatpush.msra.mxu0 %v1592
    %1649 = vmatpush.msra.mxu0 %v1591
    %1650 = vmatpush.msra.mxu0 %v1590
    %1651 = vmatpush.msra.mxu0 %v1589
    %1652 = vmatpush.msra.mxu0 %v1588
    %1653 = vmatpush.msra.mxu0 %v1587
    %1654 = vmatmul.f32.gmra.mxu0 %v1580
    %v1655 = vpop.f32.mrf.mxu0
    %v1656 = vadd.f32 %v1630, %v1655
    %1657 = vmatmul.f32.gmra.mxu0 %v1583
    %v1658 = vpop.f32.mrf.mxu0
    %v1659 = vadd.f32 %v1630, %v1658
    %1660 = vdwg.mxu0
    %1661 = vmatpush.msra.mxu0 %v1618
    %1662 = vmatpush.msra.mxu0 %v1617
    %1663 = vmatpush.msra.mxu0 %v1616
    %1664 = vmatpush.msra.mxu0 %v1615
    %1665 = vmatpush.msra.mxu0 %v1614
    %1666 = vmatpush.msra.mxu0 %v1613
    %1667 = vmatpush.msra.mxu0 %v1612
    %1668 = vmatpush.msra.mxu0 %v1611
    %1669 = vmatpush.msra.mxu0 %v1610
    %1670 = vmatpush.msra.mxu0 %v1609
    %1671 = vmatpush.msra.mxu0 %v1608
    %1672 = vmatpush.msra.mxu0 %v1607
    %1673 = vmatpush.msra.mxu0 %v1606
    %1674 = vmatpush.msra.mxu0 %v1605
    %1675 = vmatpush.msra.mxu0 %v1604
    %1676 = vmatpush.msra.mxu0 %v1603
    %1677 = vmatmul.f32.gmra.mxu0 %v1581
    %v1678 = vpop.f32.mrf.mxu0
    %v1679 = vadd.f32 %v1656, %v1678
    %1680 = vmatmul.f32.gmra.mxu0 %v1584
    %v1681 = vpop.f32.mrf.mxu0
    %v1682 = vadd.f32 %v1659, %v1681
    %1683 = vdwg.mxu0
    %1684 = vmatpush.msra.mxu0 0.0
    %1685 = vmatpush.msra.mxu0 0.0
    %1686 = vmatpush.msra.mxu0 0.0
    %1687 = vmatpush.msra.mxu0 0.0
    %1688 = vmatpush.msra.mxu0 0.0
    %1689 = vmatpush.msra.mxu0 0.0
    %1690 = vmatpush.msra.mxu0 0.0
    %1691 = vmatpush.msra.mxu0 0.0
    %1692 = vmatpush.msra.mxu0 %v1626
    %1693 = vmatpush.msra.mxu0 %v1625
    %1694 = vmatpush.msra.mxu0 %v1624
    %1695 = vmatpush.msra.mxu0 %v1623
    %1696 = vmatpush.msra.mxu0 %v1622
    %1697 = vmatpush.msra.mxu0 %v1621
    %1698 = vmatpush.msra.mxu0 %v1620
    %1699 = vmatpush.msra.mxu0 %v1619
    %1700 = vmatmul.f32.gmra.mxu0 %v1633
    %v1701 = vpop.f32.mrf.mxu0
    %v1702 = vadd.f32 %v1679, %v1701
    %1703 = vmatmul.f32.gmra.mxu0 %v1636
    %v1704 = vpop.f32.mrf.mxu0
    %v1705 = vadd.f32 %v1682, %v1704
    %1706 = vdwg.mxu0
    %v1707 = vmax.f32 %v1702, 0.0
    %v1708 = vmax.f32 %v1705, 0.0
    %1709 = vst.msk [vmem:[#allocation2 + $0x20] sm:$0xff] %vm35, %v1707
    %1710 = vst.msk [vmem:[#allocation2 + $0x38] sm:$0xff] %vm35, %v1708
    %v1711 = vld [vmem:[#allocation2 + $0x8] sm:$0xc0]
    %v1712 = vld [vmem:[#allocation2 + $0x20] sm:$0xff]
    %v1713 = vld [vmem:[#allocation2 + $0x38] sm:$0x3f]
    %v1714 = vmul.f32 %v1711, %v201
    %v1715 = vmul.f32 %v1712, %v203
    %v1716 = vmul.f32 %v1713, %v202
    %v1720 = vrot.slane %v1714, 6
    %v1721 = vrot.slane %v1715, 6
    %v1722 = vsel %vm213, %v1720, %v1721
    %v1723 = vrot.slane %v1716, 6
    %v1724 = vsel %vm213, %v1721, %v1723
    %1727 = vst.msk [vmem:[#allocation2 + $0x18] sm:$0xff] %vm35, %v1722
    %1728 = vst.msk [vmem:[#allocation2 + $0x30] sm:$0xff] %vm35, %v1724
    %v1729 = vld [vmem:[#allocation2 + $0x8] sm:$0x80]
    %v1730 = vld [vmem:[#allocation2 + $0x20] sm:$0xff]
    %v1731 = vld [vmem:[#allocation2 + $0x38] sm:$0x7f]
    %v1732 = vmul.f32 %v1729, %v229
    %v1733 = vmul.f32 %v1730, %v231
    %v1734 = vmul.f32 %v1731, %v230
    %v1738 = vrot.slane %v1732, 7
    %v1739 = vrot.slane %v1733, 7
    %v1740 = vsel %vm241, %v1738, %v1739
    %v1741 = vrot.slane %v1734, 7
    %v1742 = vsel %vm241, %v1739, %v1741
    %1743 = vrot.lane.b32.xlu0 %v1740, 64
    %v1744 = vpop.permute.xlu0 %1743
    %1745 = vrot.lane.b32.xlu0 %v1742, 64
    %v1746 = vpop.permute.xlu0 %1745
    %1749 = vst.msk [vmem:[#allocation2 + $0x18] sm:$0xff] %vm253, %v1744
    %1750 = vst.msk [vmem:[#allocation2 + $0x30] sm:$0xff] %vm253, %v1746
    %v1751 = vld [vmem:[#allocation2 + $0x20] sm:$0xfe]
    %v1752 = vld [vmem:[#allocation2 + $0x38] sm:$0xff]
    %v1753 = vld [vmem:[#allocation2 + $0x50] sm:$0x1]
    %v1754 = vmul.f32 %v1751, %v261
    %v1755 = vmul.f32 %v1752, %v263
    %v1756 = vmul.f32 %v1753, %v262
    %v1760 = vrot.slane %v1754, 1
    %v1761 = vrot.slane %v1755, 1
    %v1762 = vsel %vm228, %v1760, %v1761
    %v1763 = vrot.slane %v1756, 1
    %v1764 = vsel %vm228, %v1761, %v1763
    %1765 = vrot.lane.b32.xlu0 %v1762, 64
    %v1766 = vpop.permute.xlu0 %1765
    %1767 = vrot.lane.b32.xlu0 %v1764, 64
    %v1768 = vpop.permute.xlu0 %1767
    %1771 = vst.msk [vmem:[#allocation2 + $0x20] sm:$0xff] %vm253, %v1766
    %1772 = vst.msk [vmem:[#allocation2 + $0x38] sm:$0xff] %vm253, %v1768
    %v1773 = vld [vmem:[#allocation2 + $0x20] sm:$0xfc]
    %v1774 = vld [vmem:[#allocation2 + $0x38] sm:$0xff]
    %v1775 = vld [vmem:[#allocation2 + $0x50] sm:$0x3]
    %v1776 = vmul.f32 %v1773, %v291
    %v1777 = vmul.f32 %v1774, %v293
    %v1778 = vmul.f32 %v1775, %v292
    %v1782 = vrot.slane %v1776, 2
    %v1783 = vrot.slane %v1777, 2
    %v1784 = vsel %vm200, %v1782, %v1783
    %v1785 = vrot.slane %v1778, 2
    %v1786 = vsel %vm200, %v1783, %v1785
    %1789 = vst.msk [vmem:[#allocation2 + $0x28] sm:$0xff] %vm35, %v1784
    %1790 = vst.msk [vmem:[#allocation2 + $0x40] sm:$0xff] %vm35, %v1786
    %v1791 = vld [vmem:[#allocation2 + $0x18] sm:$0xff]
    %v1792 = vld [vmem:[#allocation2 + $0x20] sm:$0xff]
    %v1793 = vld [vmem:[#allocation2 + $0x28] sm:$0xff]
    %v1794 = vld [vmem:[#allocation2 + $0x30] sm:$0xff]
    %v1795 = vld [vmem:[#allocation2 + $0x38] sm:$0xff]
    %v1796 = vld [vmem:[#allocation2 + $0x40] sm:$0xff]
    %s1797 = scalar_lea.vmem %s5, 960
    %v1798 = vld [vmem:[%s1797] sm:$0xff]
    %v1799 = vld [vmem:[%s1797 + $0x8] sm:$0xff]
    %v1800 = vld [vmem:[%s1797 + $0x10] sm:$0xff]
    %v1801 = vld [vmem:[%s1797 + $0x18] sm:$0xff]
    %v1802 = vld [vmem:[%s1797 + $0x20] sm:$0xff]
    %v1803 = vld [vmem:[%s1797 + $0x28] sm:$0xff]
    %v1804 = vld [vmem:[%s1797 + $0x30] sm:$0xff]
    %v1805 = vld [vmem:[%s1797 + $0x38] sm:$0xff]
    %v1806 = vld [vmem:[%s1797 + $0x40] sm:$0xff]
    %v1807 = vld [vmem:[%s1797 + $0x48] sm:$0xff]
    %v1808 = vld [vmem:[%s1797 + $0x50] sm:$0xff]
    %v1809 = vld [vmem:[%s1797 + $0x58] sm:$0xff]
    %v1810 = vld [vmem:[%s1797 + $0x60] sm:$0xff]
    %v1811 = vld [vmem:[%s1797 + $0x68] sm:$0xff]
    %v1812 = vld [vmem:[%s1797 + $0x70] sm:$0xff]
    %v1813 = vld [vmem:[%s1797 + $0x78] sm:$0xff]
    %v1814 = vld [vmem:[%s1797 + $0x80] sm:$0xff]
    %v1815 = vld [vmem:[%s1797 + $0x88] sm:$0xff]
    %v1816 = vld [vmem:[%s1797 + $0x90] sm:$0xff]
    %v1817 = vld [vmem:[%s1797 + $0x98] sm:$0xff]
    %v1818 = vld [vmem:[%s1797 + $0xa0] sm:$0xff]
    %v1819 = vld [vmem:[%s1797 + $0xa8] sm:$0xff]
    %v1820 = vld [vmem:[%s1797 + $0xb0] sm:$0xff]
    %v1821 = vld [vmem:[%s1797 + $0xb8] sm:$0xff]
    %v1822 = vld [vmem:[%s1797 + $0xc0] sm:$0xff]
    %v1823 = vld [vmem:[%s1797 + $0xc8] sm:$0xff]
    %v1824 = vld [vmem:[%s1797 + $0xd0] sm:$0xff]
    %v1825 = vld [vmem:[%s1797 + $0xd8] sm:$0xff]
    %v1826 = vld [vmem:[%s1797 + $0xe0] sm:$0xff]
    %v1827 = vld [vmem:[%s1797 + $0xe8] sm:$0xff]
    %v1828 = vld [vmem:[%s1797 + $0xf0] sm:$0xff]
    %v1829 = vld [vmem:[%s1797 + $0xf8] sm:$0xff]
    %v1830 = vld [vmem:[%s1797 + $0x100] sm:$0xff]
    %v1831 = vld [vmem:[%s1797 + $0x108] sm:$0xff]
    %v1832 = vld [vmem:[%s1797 + $0x110] sm:$0xff]
    %v1833 = vld [vmem:[%s1797 + $0x118] sm:$0xff]
    %v1834 = vld [vmem:[%s1797 + $0x120] sm:$0xff]
    %v1835 = vld [vmem:[%s1797 + $0x128] sm:$0xff]
    %v1836 = vld [vmem:[%s1797 + $0x130] sm:$0xff]
    %v1837 = vld [vmem:[%s1797 + $0x138] sm:$0xff]
    %s1838 = scalar_lea.vmem %s6, 3
    %v1839 = vld [vmem:[%s1838] sm:$0x1]
    %v1841 = vperm.slane %v1839, 0
    %v1844 = vsel %vm35, %v1793, 0
    %v1847 = vsel %vm35, %v1796, 0
    %1849 = vmatpush.msra.mxu0 %v1813
    %1850 = vmatpush.msra.mxu0 %v1812
    %1851 = vmatpush.msra.mxu0 %v1811
    %1852 = vmatpush.msra.mxu0 %v1810
    %1853 = vmatpush.msra.mxu0 %v1809
    %1854 = vmatpush.msra.mxu0 %v1808
    %1855 = vmatpush.msra.mxu0 %v1807
    %1856 = vmatpush.msra.mxu0 %v1806
    %1857 = vmatpush.msra.mxu0 %v1805
    %1858 = vmatpush.msra.mxu0 %v1804
    %1859 = vmatpush.msra.mxu0 %v1803
    %1860 = vmatpush.msra.mxu0 %v1802
    %1861 = vmatpush.msra.mxu0 %v1801
    %1862 = vmatpush.msra.mxu0 %v1800
    %1863 = vmatpush.msra.mxu0 %v1799
    %1864 = vmatpush.msra.mxu0 %v1798
    %1865 = vmatmul.f32.gmra.mxu0 %v1791
    %v1866 = vpop.f32.mrf.mxu0
    %v1867 = vadd.f32 %v1841, %v1866
    %1868 = vmatmul.f32.gmra.mxu0 %v1794
    %v1869 = vpop.f32.mrf.mxu0
    %v1870 = vadd.f32 %v1841, %v1869
    %1871 = vdwg.mxu0
    %1872 = vmatpush.msra.mxu0 %v1829
    %1873 = vmatpush.msra.mxu0 %v1828
    %1874 = vmatpush.msra.mxu0 %v1827
    %1875 = vmatpush.msra.mxu0 %v1826
    %1876 = vmatpush.msra.mxu0 %v1825
    %1877 = vmatpush.msra.mxu0 %v1824
    %1878 = vmatpush.msra.mxu0 %v1823
    %1879 = vmatpush.msra.mxu0 %v1822
    %1880 = vmatpush.msra.mxu0 %v1821
    %1881 = vmatpush.msra.mxu0 %v1820
    %1882 = vmatpush.msra.mxu0 %v1819
    %1883 = vmatpush.msra.mxu0 %v1818
    %1884 = vmatpush.msra.mxu0 %v1817
    %1885 = vmatpush.msra.mxu0 %v1816
    %1886 = vmatpush.msra.mxu0 %v1815
    %1887 = vmatpush.msra.mxu0 %v1814
    %1888 = vmatmul.f32.gmra.mxu0 %v1792
    %v1889 = vpop.f32.mrf.mxu0
    %v1890 = vadd.f32 %v1867, %v1889
    %1891 = vmatmul.f32.gmra.mxu0 %v1795
    %v1892 = vpop.f32.mrf.mxu0
    %v1893 = vadd.f32 %v1870, %v1892
    %1894 = vdwg.mxu0
    %1895 = vmatpush.msra.mxu0 0.0
    %1896 = vmatpush.msra.mxu0 0.0
    %1897 = vmatpush.msra.mxu0 0.0
    %1898 = vmatpush.msra.mxu0 0.0
    %1899 = vmatpush.msra.mxu0 0.0
    %1900 = vmatpush.msra.mxu0 0.0
    %1901 = vmatpush.msra.mxu0 0.0
    %1902 = vmatpush.msra.mxu0 0.0
    %1903 = vmatpush.msra.mxu0 %v1837
    %1904 = vmatpush.msra.mxu0 %v1836
    %1905 = vmatpush.msra.mxu0 %v1835
    %1906 = vmatpush.msra.mxu0 %v1834
    %1907 = vmatpush.msra.mxu0 %v1833
    %1908 = vmatpush.msra.mxu0 %v1832
    %1909 = vmatpush.msra.mxu0 %v1831
    %1910 = vmatpush.msra.mxu0 %v1830
    %1911 = vmatmul.f32.gmra.mxu0 %v1844
    %v1912 = vpop.f32.mrf.mxu0
    %v1913 = vadd.f32 %v1890, %v1912
    %1914 = vmatmul.f32.gmra.mxu0 %v1847
    %v1915 = vpop.f32.mrf.mxu0
    %v1916 = vadd.f32 %v1893, %v1915
    %1917 = vdwg.mxu0
    %v1918 = vadd.f32 %v1494, %v1913
    %v1919 = vadd.f32 %v1495, %v1916
    %v1920 = vmax.f32 %v1918, 0.0
    %v1921 = vmax.f32 %v1919, 0.0
    %1922 = vst.msk [vmem:[#allocation2 + $0x20] sm:$0xff] %vm35, %v1920
    %1923 = vst.msk [vmem:[#allocation2 + $0x38] sm:$0xff] %vm35, %v1921
    %v1924 = vld [vmem:[#allocation2 + $0x8] sm:$0xc0]
    %v1925 = vld [vmem:[#allocation2 + $0x20] sm:$0xff]
    %v1926 = vld [vmem:[#allocation2 + $0x38] sm:$0x3f]
    %v1927 = vmul.f32 %v1924, %v201
    %v1928 = vmul.f32 %v1925, %v203
    %v1929 = vmul.f32 %v1926, %v202
    %v1933 = vrot.slane %v1927, 6
    %v1934 = vrot.slane %v1928, 6
    %v1935 = vsel %vm213, %v1933, %v1934
    %v1936 = vrot.slane %v1929, 6
    %v1937 = vsel %vm213, %v1934, %v1936
    %1940 = vst.msk [vmem:[#allocation2 + $0x18] sm:$0xff] %vm35, %v1935
    %1941 = vst.msk [vmem:[#allocation2 + $0x30] sm:$0xff] %vm35, %v1937
    %v1942 = vld [vmem:[#allocation2 + $0x8] sm:$0x80]
    %v1943 = vld [vmem:[#allocation2 + $0x20] sm:$0xff]
    %v1944 = vld [vmem:[#allocation2 + $0x38] sm:$0x7f]
    %v1945 = vmul.f32 %v1942, %v229
    %v1946 = vmul.f32 %v1943, %v231
    %v1947 = vmul.f32 %v1944, %v230
    %v1951 = vrot.slane %v1945, 7
    %v1952 = vrot.slane %v1946, 7
    %v1953 = vsel %vm241, %v1951, %v1952
    %v1954 = vrot.slane %v1947, 7
    %v1955 = vsel %vm241, %v1952, %v1954
    %1956 = vrot.lane.b32.xlu0 %v1953, 64
    %v1957 = vpop.permute.xlu0 %1956
    %1958 = vrot.lane.b32.xlu0 %v1955, 64
    %v1959 = vpop.permute.xlu0 %1958
    %1962 = vst.msk [vmem:[#allocation2 + $0x18] sm:$0xff] %vm253, %v1957
    %1963 = vst.msk [vmem:[#allocation2 + $0x30] sm:$0xff] %vm253, %v1959
    %v1964 = vld [vmem:[#allocation2 + $0x20] sm:$0xfe]
    %v1965 = vld [vmem:[#allocation2 + $0x38] sm:$0xff]
    %v1966 = vld [vmem:[#allocation2 + $0x50] sm:$0x1]
    %v1967 = vmul.f32 %v1964, %v261
    %v1968 = vmul.f32 %v1965, %v263
    %v1969 = vmul.f32 %v1966, %v262
    %v1973 = vrot.slane %v1967, 1
    %v1974 = vrot.slane %v1968, 1
    %v1975 = vsel %vm228, %v1973, %v1974
    %v1976 = vrot.slane %v1969, 1
    %v1977 = vsel %vm228, %v1974, %v1976
    %1978 = vrot.lane.b32.xlu0 %v1975, 64
    %v1979 = vpop.permute.xlu0 %1978
    %1980 = vrot.lane.b32.xlu0 %v1977, 64
    %v1981 = vpop.permute.xlu0 %1980
    %1984 = vst.msk [vmem:[#allocation2 + $0x20] sm:$0xff] %vm253, %v1979
    %1985 = vst.msk [vmem:[#allocation2 + $0x38] sm:$0xff] %vm253, %v1981
    %v1986 = vld [vmem:[#allocation2 + $0x20] sm:$0xfc]
    %v1987 = vld [vmem:[#allocation2 + $0x38] sm:$0xff]
    %v1988 = vld [vmem:[#allocation2 + $0x50] sm:$0x3]
    %v1989 = vmul.f32 %v1986, %v291
    %v1990 = vmul.f32 %v1987, %v293
    %v1991 = vmul.f32 %v1988, %v292
    %v1995 = vrot.slane %v1989, 2
    %v1996 = vrot.slane %v1990, 2
    %v1997 = vsel %vm200, %v1995, %v1996
    %v1998 = vrot.slane %v1991, 2
    %v1999 = vsel %vm200, %v1996, %v1998
    %2002 = vst.msk [vmem:[#allocation2 + $0x28] sm:$0xff] %vm35, %v1997
    %2003 = vst.msk [vmem:[#allocation2 + $0x40] sm:$0xff] %vm35, %v1999
    %v2004 = vld [vmem:[#allocation2 + $0x18] sm:$0xff]
    %v2005 = vld [vmem:[#allocation2 + $0x20] sm:$0xff]
    %v2006 = vld [vmem:[#allocation2 + $0x28] sm:$0xff]
    %v2007 = vld [vmem:[#allocation2 + $0x30] sm:$0xff]
    %v2008 = vld [vmem:[#allocation2 + $0x38] sm:$0xff]
    %v2009 = vld [vmem:[#allocation2 + $0x40] sm:$0xff]
    %s2010 = scalar_lea.vmem %s3, 1280
    %v2011 = vld [vmem:[%s2010] sm:$0xff]
    %v2012 = vld [vmem:[%s2010 + $0x8] sm:$0xff]
    %v2013 = vld [vmem:[%s2010 + $0x10] sm:$0xff]
    %v2014 = vld [vmem:[%s2010 + $0x18] sm:$0xff]
    %v2015 = vld [vmem:[%s2010 + $0x20] sm:$0xff]
    %v2016 = vld [vmem:[%s2010 + $0x28] sm:$0xff]
    %v2017 = vld [vmem:[%s2010 + $0x30] sm:$0xff]
    %v2018 = vld [vmem:[%s2010 + $0x38] sm:$0xff]
    %v2019 = vld [vmem:[%s2010 + $0x40] sm:$0xff]
    %v2020 = vld [vmem:[%s2010 + $0x48] sm:$0xff]
    %v2021 = vld [vmem:[%s2010 + $0x50] sm:$0xff]
    %v2022 = vld [vmem:[%s2010 + $0x58] sm:$0xff]
    %v2023 = vld [vmem:[%s2010 + $0x60] sm:$0xff]
    %v2024 = vld [vmem:[%s2010 + $0x68] sm:$0xff]
    %v2025 = vld [vmem:[%s2010 + $0x70] sm:$0xff]
    %v2026 = vld [vmem:[%s2010 + $0x78] sm:$0xff]
    %v2027 = vld [vmem:[%s2010 + $0x80] sm:$0xff]
    %v2028 = vld [vmem:[%s2010 + $0x88] sm:$0xff]
    %v2029 = vld [vmem:[%s2010 + $0x90] sm:$0xff]
    %v2030 = vld [vmem:[%s2010 + $0x98] sm:$0xff]
    %v2031 = vld [vmem:[%s2010 + $0xa0] sm:$0xff]
    %v2032 = vld [vmem:[%s2010 + $0xa8] sm:$0xff]
    %v2033 = vld [vmem:[%s2010 + $0xb0] sm:$0xff]
    %v2034 = vld [vmem:[%s2010 + $0xb8] sm:$0xff]
    %v2035 = vld [vmem:[%s2010 + $0xc0] sm:$0xff]
    %v2036 = vld [vmem:[%s2010 + $0xc8] sm:$0xff]
    %v2037 = vld [vmem:[%s2010 + $0xd0] sm:$0xff]
    %v2038 = vld [vmem:[%s2010 + $0xd8] sm:$0xff]
    %v2039 = vld [vmem:[%s2010 + $0xe0] sm:$0xff]
    %v2040 = vld [vmem:[%s2010 + $0xe8] sm:$0xff]
    %v2041 = vld [vmem:[%s2010 + $0xf0] sm:$0xff]
    %v2042 = vld [vmem:[%s2010 + $0xf8] sm:$0xff]
    %v2043 = vld [vmem:[%s2010 + $0x100] sm:$0xff]
    %v2044 = vld [vmem:[%s2010 + $0x108] sm:$0xff]
    %v2045 = vld [vmem:[%s2010 + $0x110] sm:$0xff]
    %v2046 = vld [vmem:[%s2010 + $0x118] sm:$0xff]
    %v2047 = vld [vmem:[%s2010 + $0x120] sm:$0xff]
    %v2048 = vld [vmem:[%s2010 + $0x128] sm:$0xff]
    %v2049 = vld [vmem:[%s2010 + $0x130] sm:$0xff]
    %v2050 = vld [vmem:[%s2010 + $0x138] sm:$0xff]
    %s2051 = scalar_lea.vmem %s4, 4
    %v2052 = vld [vmem:[%s2051] sm:$0x1]
    %v2054 = vperm.slane %v2052, 0
    %v2057 = vsel %vm35, %v2006, 0
    %v2060 = vsel %vm35, %v2009, 0
    %2062 = vmatpush.msra.mxu0 %v2026
    %2063 = vmatpush.msra.mxu0 %v2025
    %2064 = vmatpush.msra.mxu0 %v2024
    %2065 = vmatpush.msra.mxu0 %v2023
    %2066 = vmatpush.msra.mxu0 %v2022
    %2067 = vmatpush.msra.mxu0 %v2021
    %2068 = vmatpush.msra.mxu0 %v2020
    %2069 = vmatpush.msra.mxu0 %v2019
    %2070 = vmatpush.msra.mxu0 %v2018
    %2071 = vmatpush.msra.mxu0 %v2017
    %2072 = vmatpush.msra.mxu0 %v2016
    %2073 = vmatpush.msra.mxu0 %v2015
    %2074 = vmatpush.msra.mxu0 %v2014
    %2075 = vmatpush.msra.mxu0 %v2013
    %2076 = vmatpush.msra.mxu0 %v2012
    %2077 = vmatpush.msra.mxu0 %v2011
    %2078 = vmatmul.f32.gmra.mxu0 %v2004
    %v2079 = vpop.f32.mrf.mxu0
    %v2080 = vadd.f32 %v2054, %v2079
    %2081 = vmatmul.f32.gmra.mxu0 %v2007
    %v2082 = vpop.f32.mrf.mxu0
    %v2083 = vadd.f32 %v2054, %v2082
    %2084 = vdwg.mxu0
    %2085 = vmatpush.msra.mxu0 %v2042
    %2086 = vmatpush.msra.mxu0 %v2041
    %2087 = vmatpush.msra.mxu0 %v2040
    %2088 = vmatpush.msra.mxu0 %v2039
    %2089 = vmatpush.msra.mxu0 %v2038
    %2090 = vmatpush.msra.mxu0 %v2037
    %2091 = vmatpush.msra.mxu0 %v2036
    %2092 = vmatpush.msra.mxu0 %v2035
    %2093 = vmatpush.msra.mxu0 %v2034
    %2094 = vmatpush.msra.mxu0 %v2033
    %2095 = vmatpush.msra.mxu0 %v2032
    %2096 = vmatpush.msra.mxu0 %v2031
    %2097 = vmatpush.msra.mxu0 %v2030
    %2098 = vmatpush.msra.mxu0 %v2029
    %2099 = vmatpush.msra.mxu0 %v2028
    %2100 = vmatpush.msra.mxu0 %v2027
    %2101 = vmatmul.f32.gmra.mxu0 %v2005
    %v2102 = vpop.f32.mrf.mxu0
    %v2103 = vadd.f32 %v2080, %v2102
    %2104 = vmatmul.f32.gmra.mxu0 %v2008
    %v2105 = vpop.f32.mrf.mxu0
    %v2106 = vadd.f32 %v2083, %v2105
    %2107 = vdwg.mxu0
    %2108 = vmatpush.msra.mxu0 0.0
    %2109 = vmatpush.msra.mxu0 0.0
    %2110 = vmatpush.msra.mxu0 0.0
    %2111 = vmatpush.msra.mxu0 0.0
    %2112 = vmatpush.msra.mxu0 0.0
    %2113 = vmatpush.msra.mxu0 0.0
    %2114 = vmatpush.msra.mxu0 0.0
    %2115 = vmatpush.msra.mxu0 0.0
    %2116 = vmatpush.msra.mxu0 %v2050
    %2117 = vmatpush.msra.mxu0 %v2049
    %2118 = vmatpush.msra.mxu0 %v2048
    %2119 = vmatpush.msra.mxu0 %v2047
    %2120 = vmatpush.msra.mxu0 %v2046
    %2121 = vmatpush.msra.mxu0 %v2045
    %2122 = vmatpush.msra.mxu0 %v2044
    %2123 = vmatpush.msra.mxu0 %v2043
    %2124 = vmatmul.f32.gmra.mxu0 %v2057
    %v2125 = vpop.f32.mrf.mxu0
    %v2126 = vadd.f32 %v2103, %v2125
    %2127 = vmatmul.f32.gmra.mxu0 %v2060
    %v2128 = vpop.f32.mrf.mxu0
    %v2129 = vadd.f32 %v2106, %v2128
    %2130 = vdwg.mxu0
    %v2131 = vmax.f32 %v2126, 0.0
    %v2132 = vmax.f32 %v2129, 0.0
    %2133 = vst.msk [vmem:[#allocation2 + $0x20] sm:$0xff] %vm35, %v2131
    %2134 = vst.msk [vmem:[#allocation2 + $0x38] sm:$0xff] %vm35, %v2132
    %v2135 = vld [vmem:[#allocation2 + $0x8] sm:$0xc0]
    %v2136 = vld [vmem:[#allocation2 + $0x20] sm:$0xff]
    %v2137 = vld [vmem:[#allocation2 + $0x38] sm:$0x3f]
    %v2138 = vmul.f32 %v2135, %v201
    %v2139 = vmul.f32 %v2136, %v203
    %v2140 = vmul.f32 %v2137, %v202
    %v2144 = vrot.slane %v2138, 6
    %v2145 = vrot.slane %v2139, 6
    %v2146 = vsel %vm213, %v2144, %v2145
    %v2147 = vrot.slane %v2140, 6
    %v2148 = vsel %vm213, %v2145, %v2147
    %2151 = vst.msk [vmem:[#allocation2 + $0x18] sm:$0xff] %vm35, %v2146
    %2152 = vst.msk [vmem:[#allocation2 + $0x30] sm:$0xff] %vm35, %v2148
    %v2153 = vld [vmem:[#allocation2 + $0x8] sm:$0x80]
    %v2154 = vld [vmem:[#allocation2 + $0x20] sm:$0xff]
    %v2155 = vld [vmem:[#allocation2 + $0x38] sm:$0x7f]
    %v2156 = vmul.f32 %v2153, %v229
    %v2157 = vmul.f32 %v2154, %v231
    %v2158 = vmul.f32 %v2155, %v230
    %v2162 = vrot.slane %v2156, 7
    %v2163 = vrot.slane %v2157, 7
    %v2164 = vsel %vm241, %v2162, %v2163
    %v2165 = vrot.slane %v2158, 7
    %v2166 = vsel %vm241, %v2163, %v2165
    %2167 = vrot.lane.b32.xlu0 %v2164, 64
    %v2168 = vpop.permute.xlu0 %2167
    %2169 = vrot.lane.b32.xlu0 %v2166, 64
    %v2170 = vpop.permute.xlu0 %2169
    %2173 = vst.msk [vmem:[#allocation2 + $0x18] sm:$0xff] %vm253, %v2168
    %2174 = vst.msk [vmem:[#allocation2 + $0x30] sm:$0xff] %vm253, %v2170
    %v2175 = vld [vmem:[#allocation2 + $0x20] sm:$0xfe]
    %v2176 = vld [vmem:[#allocation2 + $0x38] sm:$0xff]
    %v2177 = vld [vmem:[#allocation2 + $0x50] sm:$0x1]
    %v2178 = vmul.f32 %v2175, %v261
    %v2179 = vmul.f32 %v2176, %v263
    %v2180 = vmul.f32 %v2177, %v262
    %v2184 = vrot.slane %v2178, 1
    %v2185 = vrot.slane %v2179, 1
    %v2186 = vsel %vm228, %v2184, %v2185
    %v2187 = vrot.slane %v2180, 1
    %v2188 = vsel %vm228, %v2185, %v2187
    %2189 = vrot.lane.b32.xlu0 %v2186, 64
    %v2190 = vpop.permute.xlu0 %2189
    %2191 = vrot.lane.b32.xlu0 %v2188, 64
    %v2192 = vpop.permute.xlu0 %2191
    %2195 = vst.msk [vmem:[#allocation2 + $0x20] sm:$0xff] %vm253, %v2190
    %2196 = vst.msk [vmem:[#allocation2 + $0x38] sm:$0xff] %vm253, %v2192
    %v2197 = vld [vmem:[#allocation2 + $0x20] sm:$0xfc]
    %v2198 = vld [vmem:[#allocation2 + $0x38] sm:$0xff]
    %v2199 = vld [vmem:[#allocation2 + $0x50] sm:$0x3]
    %v2200 = vmul.f32 %v2197, %v291
    %v2201 = vmul.f32 %v2198, %v293
    %v2202 = vmul.f32 %v2199, %v292
    %v2206 = vrot.slane %v2200, 2
    %v2207 = vrot.slane %v2201, 2
    %v2208 = vsel %vm200, %v2206, %v2207
    %v2209 = vrot.slane %v2202, 2
    %v2210 = vsel %vm200, %v2207, %v2209
    %2213 = vst.msk [vmem:[#allocation2 + $0x28] sm:$0xff] %vm35, %v2208
    %2214 = vst.msk [vmem:[#allocation2 + $0x40] sm:$0xff] %vm35, %v2210
    %v2215 = vld [vmem:[#allocation2 + $0x18] sm:$0xff]
    %v2216 = vld [vmem:[#allocation2 + $0x20] sm:$0xff]
    %v2217 = vld [vmem:[#allocation2 + $0x28] sm:$0xff]
    %v2218 = vld [vmem:[#allocation2 + $0x30] sm:$0xff]
    %v2219 = vld [vmem:[#allocation2 + $0x38] sm:$0xff]
    %v2220 = vld [vmem:[#allocation2 + $0x40] sm:$0xff]
    %s2221 = scalar_lea.vmem %s5, 1280
    %v2222 = vld [vmem:[%s2221] sm:$0xff]
    %v2223 = vld [vmem:[%s2221 + $0x8] sm:$0xff]
    %v2224 = vld [vmem:[%s2221 + $0x10] sm:$0xff]
    %v2225 = vld [vmem:[%s2221 + $0x18] sm:$0xff]
    %v2226 = vld [vmem:[%s2221 + $0x20] sm:$0xff]
    %v2227 = vld [vmem:[%s2221 + $0x28] sm:$0xff]
    %v2228 = vld [vmem:[%s2221 + $0x30] sm:$0xff]
    %v2229 = vld [vmem:[%s2221 + $0x38] sm:$0xff]
    %v2230 = vld [vmem:[%s2221 + $0x40] sm:$0xff]
    %v2231 = vld [vmem:[%s2221 + $0x48] sm:$0xff]
    %v2232 = vld [vmem:[%s2221 + $0x50] sm:$0xff]
    %v2233 = vld [vmem:[%s2221 + $0x58] sm:$0xff]
    %v2234 = vld [vmem:[%s2221 + $0x60] sm:$0xff]
    %v2235 = vld [vmem:[%s2221 + $0x68] sm:$0xff]
    %v2236 = vld [vmem:[%s2221 + $0x70] sm:$0xff]
    %v2237 = vld [vmem:[%s2221 + $0x78] sm:$0xff]
    %v2238 = vld [vmem:[%s2221 + $0x80] sm:$0xff]
    %v2239 = vld [vmem:[%s2221 + $0x88] sm:$0xff]
    %v2240 = vld [vmem:[%s2221 + $0x90] sm:$0xff]
    %v2241 = vld [vmem:[%s2221 + $0x98] sm:$0xff]
    %v2242 = vld [vmem:[%s2221 + $0xa0] sm:$0xff]
    %v2243 = vld [vmem:[%s2221 + $0xa8] sm:$0xff]
    %v2244 = vld [vmem:[%s2221 + $0xb0] sm:$0xff]
    %v2245 = vld [vmem:[%s2221 + $0xb8] sm:$0xff]
    %v2246 = vld [vmem:[%s2221 + $0xc0] sm:$0xff]
    %v2247 = vld [vmem:[%s2221 + $0xc8] sm:$0xff]
    %v2248 = vld [vmem:[%s2221 + $0xd0] sm:$0xff]
    %v2249 = vld [vmem:[%s2221 + $0xd8] sm:$0xff]
    %v2250 = vld [vmem:[%s2221 + $0xe0] sm:$0xff]
    %v2251 = vld [vmem:[%s2221 + $0xe8] sm:$0xff]
    %v2252 = vld [vmem:[%s2221 + $0xf0] sm:$0xff]
    %v2253 = vld [vmem:[%s2221 + $0xf8] sm:$0xff]
    %v2254 = vld [vmem:[%s2221 + $0x100] sm:$0xff]
    %v2255 = vld [vmem:[%s2221 + $0x108] sm:$0xff]
    %v2256 = vld [vmem:[%s2221 + $0x110] sm:$0xff]
    %v2257 = vld [vmem:[%s2221 + $0x118] sm:$0xff]
    %v2258 = vld [vmem:[%s2221 + $0x120] sm:$0xff]
    %v2259 = vld [vmem:[%s2221 + $0x128] sm:$0xff]
    %v2260 = vld [vmem:[%s2221 + $0x130] sm:$0xff]
    %v2261 = vld [vmem:[%s2221 + $0x138] sm:$0xff]
    %s2262 = scalar_lea.vmem %s6, 4
    %v2263 = vld [vmem:[%s2262] sm:$0x1]
    %v2265 = vperm.slane %v2263, 0
    %v2268 = vsel %vm35, %v2217, 0
    %v2271 = vsel %vm35, %v2220, 0
    %2273 = vmatpush.msra.mxu0 %v2237
    %2274 = vmatpush.msra.mxu0 %v2236
    %2275 = vmatpush.msra.mxu0 %v2235
    %2276 = vmatpush.msra.mxu0 %v2234
    %2277 = vmatpush.msra.mxu0 %v2233
    %2278 = vmatpush.msra.mxu0 %v2232
    %2279 = vmatpush.msra.mxu0 %v2231
    %2280 = vmatpush.msra.mxu0 %v2230
    %2281 = vmatpush.msra.mxu0 %v2229
    %2282 = vmatpush.msra.mxu0 %v2228
    %2283 = vmatpush.msra.mxu0 %v2227
    %2284 = vmatpush.msra.mxu0 %v2226
    %2285 = vmatpush.msra.mxu0 %v2225
    %2286 = vmatpush.msra.mxu0 %v2224
    %2287 = vmatpush.msra.mxu0 %v2223
    %2288 = vmatpush.msra.mxu0 %v2222
    %2289 = vmatmul.f32.gmra.mxu0 %v2215
    %v2290 = vpop.f32.mrf.mxu0
    %v2291 = vadd.f32 %v2265, %v2290
    %2292 = vmatmul.f32.gmra.mxu0 %v2218
    %v2293 = vpop.f32.mrf.mxu0
    %v2294 = vadd.f32 %v2265, %v2293
    %2295 = vdwg.mxu0
    %2296 = vmatpush.msra.mxu0 %v2253
    %2297 = vmatpush.msra.mxu0 %v2252
    %2298 = vmatpush.msra.mxu0 %v2251
    %2299 = vmatpush.msra.mxu0 %v2250
    %2300 = vmatpush.msra.mxu0 %v2249
    %2301 = vmatpush.msra.mxu0 %v2248
    %2302 = vmatpush.msra.mxu0 %v2247
    %2303 = vmatpush.msra.mxu0 %v2246
    %2304 = vmatpush.msra.mxu0 %v2245
    %2305 = vmatpush.msra.mxu0 %v2244
    %2306 = vmatpush.msra.mxu0 %v2243
    %2307 = vmatpush.msra.mxu0 %v2242
    %2308 = vmatpush.msra.mxu0 %v2241
    %2309 = vmatpush.msra.mxu0 %v2240
    %2310 = vmatpush.msra.mxu0 %v2239
    %2311 = vmatpush.msra.mxu0 %v2238
    %2312 = vmatmul.f32.gmra.mxu0 %v2216
    %v2313 = vpop.f32.mrf.mxu0
    %v2314 = vadd.f32 %v2291, %v2313
    %2315 = vmatmul.f32.gmra.mxu0 %v2219
    %v2316 = vpop.f32.mrf.mxu0
    %v2317 = vadd.f32 %v2294, %v2316
    %2318 = vdwg.mxu0
    %2319 = vmatpush.msra.mxu0 0.0
    %2320 = vmatpush.msra.mxu0 0.0
    %2321 = vmatpush.msra.mxu0 0.0
    %2322 = vmatpush.msra.mxu0 0.0
    %2323 = vmatpush.msra.mxu0 0.0
    %2324 = vmatpush.msra.mxu0 0.0
    %2325 = vmatpush.msra.mxu0 0.0
    %2326 = vmatpush.msra.mxu0 0.0
    %2327 = vmatpush.msra.mxu0 %v2261
    %2328 = vmatpush.msra.mxu0 %v2260
    %2329 = vmatpush.msra.mxu0 %v2259
    %2330 = vmatpush.msra.mxu0 %v2258
    %2331 = vmatpush.msra.mxu0 %v2257
    %2332 = vmatpush.msra.mxu0 %v2256
    %2333 = vmatpush.msra.mxu0 %v2255
    %2334 = vmatpush.msra.mxu0 %v2254
    %2335 = vmatmul.f32.gmra.mxu0 %v2268
    %v2336 = vpop.f32.mrf.mxu0
    %v2337 = vadd.f32 %v2314, %v2336
    %2338 = vmatmul.f32.gmra.mxu0 %v2271
    %v2339 = vpop.f32.mrf.mxu0
    %v2340 = vadd.f32 %v2317, %v2339
    %2341 = vdwg.mxu0
    %v2342 = vadd.f32 %v1918, %v2337
    %v2343 = vadd.f32 %v1919, %v2340
    %v2344 = vld [vmem:[%s7] sm:$0xf]
    %v2345 = vld [vmem:[%s8] sm:$0xf]
    %2347 = vset.pattern.permute.xlu0 0
    %2348 = vperm.xlu0 %2347, %v2345
    %v2349 = vpop.permute.xlu0 %2348
    %v2352 = vsel %vm35, %v2344, 0
    %v2355 = vsel %vm35, %v2342, 0
    %v2358 = vsel %vm35, %v2343, 0
    %2360 = vmatpush.xpose.msra.mxu0 0.0
    %2361 = vmatpush.xpose.msra.mxu0 0.0
    %2362 = vmatpush.xpose.msra.mxu0 0.0
    %2363 = vmatpush.xpose.msra.mxu0 0.0
    %2364 = vmatpush.xpose.msra.mxu0 0.0
    %2365 = vmatpush.xpose.msra.mxu0 0.0
    %2366 = vmatpush.xpose.msra.mxu0 0.0
    %2367 = vmatpush.xpose.msra.mxu0 0.0
    %2368 = vmatpush.xpose.msra.mxu0 0.0
    %2369 = vmatpush.xpose.msra.mxu0 0.0
    %2370 = vmatpush.xpose.msra.mxu0 0.0
    %2371 = vmatpush.xpose.msra.mxu0 0.0
    %2372 = vmatpush.xpose.msra.mxu0 0.0
    %2373 = vmatpush.xpose.msra.mxu0 0.0
    %2374 = vmatpush.xpose.msra.mxu0 %v2358
    %2375 = vmatpush.xpose.msra.mxu0 %v2355
    %2376 = vmatmul.f32.gmra.mxu0 %v2352
    %v2377 = vpop.f32.mrf.mxu0
    %v2378 = vadd.f32 %v2349, %v2377
    %2379 = vdwg.mxu0
    %vm2380 = vcmask 125952
    %v2381 = vsel %vm2380, %v2378, -inf
    %v2382 = vrot.slane %v2381, 4
    %v2383 = vmax.f32 %v2381, %v2382
    %v2384 = vrot.slane %v2383, 2
    %v2385 = vmax.f32 %v2383, %v2384
    %v2386 = vrot.slane %v2385, 1
    %v2387 = vmax.f32 %v2385, %v2386
    %v2388 = vsub.f32 %v2378, %v2387
    %v2389 = vmul.f32 %v2388, 1.442695
    %v2390 = vpow.pop %v2389
    %v2391 = vsel %vm2380, %v2390, 0.0
    %v2392 = vrot.slane %v2391, 4
    %v2393 = vadd.f32 %v2391, %v2392
    %v2394 = vrot.slane %v2393, 2
    %v2395 = vadd.f32 %v2393, %v2394
    %v2396 = vrot.slane %v2395, 1
    %v2397 = vadd.f32 %v2395, %v2396
    %v2398 = vrcp.pop %v2397
    %v2399 = vmul.f32 %v2397, %v2398
    %v2400 = vsub.f32 1.0, %v2399
    %v2401 = vmul.f32 %v2398, %v2400
    %v2402 = vadd.f32 %v2398, %v2401
    %vm2403 = vweird.f32 %v2397
    %vm2404 = vweird.f32 %v2398
    %vm2405 = vmor %vm2403, %vm2404
    %v2406 = vsel %vm2405, %v2398, %v2402
    %v2407 = vand.u32 2147483647, %v2397
    %vm2408 = vcmp.eq.f32.partialorder %v2407, 8.507059e+37
    %v2409 = vand.u32 %v2397, 2147483648
    %v2410 = vor.u32 1.1754944e-38, %v2409
    %v2411 = vsel %vm2408, %v2410, %v2406
    %v2412 = vmul.f32 %v2390, %v2411
    %vm2413 = vcmask 60416
    %2414 = vst.msk [vmem:[#allocation3] sm:$0xf] %vm2413, %v2412
    %2416 = vrot.lane.b32.xlu0 %v2412, 120
    %v2417 = vpop.permute.xlu0 %2416
    %s2419 = scalar_lea.vmem [#allocation3], 4
    %2420 = vst.msk [vmem:[%s2419] sm:$0xf] %vm2413, %v2417
    // Predicated region
    $region38: #{generator_forward.1} parent=1 // pred_check
      _
    $region39: #{generator_forward.1} parent=1 // pred_check_branch
      %2422 = sbr.rel (0) target = $region41
    $region40: #{generator_forward.1} parent=1 // pred_region
      %2424 = vsyncadd [#allocation4], 0
      %s2425 = sshll.u32 [#allocation3], 4
      %s2426 = int_to_ptr.vmem [resolvable:$true] %s2425
      %s2427 = sshll.u32 %s9, 4
      %s2428 = int_to_ptr.hbm [resolvable:$true] %s2427
      %2433 = dma.vmem_to_hbm [thread:$0]  %s2426, 128, %s2428, [#allocation4], 64, 64, 4
    $region41: #{generator_forward.1} parent=1 // pred_fallthru
      _
    // Predicated region
    $region42: #{generator_forward.1} parent=1 // pred_check
      _
    $region43: #{generator_forward.1} parent=1 // pred_check_branch
      %2435 = sbr.rel (0) target = $region45
    $region44: #{generator_forward.1} parent=1 // pred_region
      %2437 = dma.done [#allocation4], 128
    $region45: #{generator_forward.1} parent=1 // pred_fallthru
      _
    %2438 = vsyncpa [#allocation4], 1

</llo_original>
